<compile_context>
chip_gen: v7x
topology: tpu7x:2x2x1
jax: 0.10.0
libtpu: 0.0.40
codegen_flags: <defaults>
</compile_context>

<pallas_src>
import functools
import math

import jax
import jax.numpy as jnp
from jax.experimental import pallas as pl
from jax.experimental.pallas import tpu as pltpu

EPS = 1e-5          # nn.LayerNorm default eps
NEG_INF = -1e9


def _vmem_limit_bytes():
    """Cap scoped VMEM at ~75% of physical per-core VMEM (48 MiB on v7x)."""
    try:
        cap = pltpu.get_tpu_info().vmem_capacity_bytes
        return int(cap * 3 // 4)
    except Exception:
        return 48 * 1024 * 1024


# ---------------------------------------------------------------------------
# In-kernel helpers (traced inside the Pallas kernels)
# ---------------------------------------------------------------------------
def _layernorm(x, gamma, beta):
    """LayerNorm over the last dim, f32 math. gamma/beta: (1, D)."""
    mu = jnp.mean(x, axis=-1, keepdims=True)
    var = jnp.mean((x - mu) ** 2, axis=-1, keepdims=True)
    return (x - mu) * jax.lax.rsqrt(var + EPS) * gamma + beta


def _attention(x_q, x_kv, bias, wq, bq, wkv, bkv, wo, bo, num_heads):
    """Multi-head attention on a (Rq, D) query slab vs a (Rk, D) key/value slab.

    wq: (D, D) bf16 (score scale folded in), wkv: (D, 2D) bf16 (K|V fused),
    wo: (D, D) bf16 (original layout), biases f32.  bias: (Rq, Rk) additive
    f32 mask.  Projections are full-width lane-dense MXU matmuls; only the
    per-head score/softmax/PV step uses hd-wide lane slices.
    """
    d_model = x_q.shape[-1]
    hd = d_model // num_heads
    xq16 = x_q.astype(jnp.bfloat16)
    xkv16 = x_kv.astype(jnp.bfloat16)

    q = jnp.dot(xq16, wq, preferred_element_type=jnp.float32) + bq        # (Rq, D)
    kv = jnp.dot(xkv16, wkv, preferred_element_type=jnp.float32) + bkv    # (Rk, 2D)
    k = kv[:, :d_model]
    v = kv[:, d_model:]

    head_outs = []
    for h in range(num_heads):
        lo, hi = h * hd, (h + 1) * hd
        qh = q[:, lo:hi].astype(jnp.bfloat16)                             # (Rq, hd)
        kh = k[:, lo:hi].astype(jnp.bfloat16)                             # (Rk, hd)
        vh = v[:, lo:hi].astype(jnp.bfloat16)                             # (Rk, hd)
        s = jax.lax.dot_general(qh, kh, (((1,), (1,)), ((), ())),
                                preferred_element_type=jnp.float32)       # (Rq, Rk)
        s = s + bias
        s = s - jnp.max(s, axis=-1, keepdims=True)
        p = jnp.exp(s)
        p = p * pl.reciprocal(jnp.sum(p, axis=-1, keepdims=True), approx=True)
        head_outs.append(jnp.dot(p.astype(jnp.bfloat16), vh,
                                 preferred_element_type=jnp.float32))     # (Rq, hd)

    o = jnp.concatenate(head_outs, axis=-1)                               # (Rq, D)
    return jnp.dot(o.astype(jnp.bfloat16), wo,
                   preferred_element_type=jnp.float32) + bo


# ---------------------------------------------------------------------------
# Fused decoder-stack kernel: grid = (batch, layer), x carried in VMEM scratch
# ---------------------------------------------------------------------------
def decoder_stack_kernel(
    x0_ref, enc_ref, tgt_bias_ref, src_bias_ref,
    sa_wq, sa_bq, sa_wkv, sa_bkv, sa_wo, sa_bo,
    ca_wq, ca_bq, ca_wkv, ca_bkv, ca_wo, ca_bo,
    ff_w1, ff_b1, ff_w2, ff_b2,
    n1_g, n1_b, n2_g, n2_b, n3_g, n3_b,
    out_ref, carry_ref, *, num_heads,
):
    layer = pl.program_id(1)

    @pl.when(layer == 0)
    def _():
        carry_ref[...] = x0_ref[...]

    x = carry_ref[...]
    enc = enc_ref[...]

    # --- self attention + residual + norm + relu ---
    attn = _attention(x, x, tgt_bias_ref[...],
                      sa_wq[...], sa_bq[...], sa_wkv[...], sa_bkv[...],
                      sa_wo[...], sa_bo[...], num_heads)
    x = jnp.maximum(_layernorm(x + attn, n1_g[...], n1_b[...]), 0.0)

    # --- cross attention + residual + norm + relu ---
    attn = _attention(x, enc, src_bias_ref[...],
                      ca_wq[...], ca_bq[...], ca_wkv[...], ca_bkv[...],
                      ca_wo[...], ca_bo[...], num_heads)
    x = jnp.maximum(_layernorm(x + attn, n2_g[...], n2_b[...]), 0.0)

    # --- feed forward + residual + norm + relu ---
    h = jnp.maximum(
        jnp.dot(x.astype(jnp.bfloat16), ff_w1[...],
                preferred_element_type=jnp.float32) + ff_b1[...], 0.0)
    ff = jnp.dot(h.astype(jnp.bfloat16), ff_w2[...],
                 preferred_element_type=jnp.float32) + ff_b2[...]
    x = jnp.maximum(_layernorm(x + ff, n3_g[...], n3_b[...]), 0.0)

    carry_ref[...] = x

    @pl.when(layer == pl.num_programs(1) - 1)
    def _():
        out_ref[...] = x


def _batch_spec(shape):
    """Leading dim selected by the batch grid index, squeezed in the kernel."""
    n_rest = len(shape) - 1
    return pl.BlockSpec((None,) + tuple(shape[1:]),
                        lambda b, l: (b,) + (0,) * n_rest)


def _layer_spec(shape):
    """Leading dim selected by the layer grid index, squeezed in the kernel."""
    n_rest = len(shape) - 1
    return pl.BlockSpec((None,) + tuple(shape[1:]),
                        lambda b, l: (l,) + (0,) * n_rest)


def _const_spec(shape):
    nd = len(shape)
    return pl.BlockSpec(tuple(shape), lambda b, l: (0,) * nd)


def run_decoder_stack(x0, enc, tgt_bias, src_bias, stacked, num_heads):
    """x0: (B, S, D) f32; enc: (B, S_src, D) f32; biases: (S, S)/(S, S_src)
    additive f32 masks shared across batch; stacked: 22 layer-stacked arrays."""
    B, S, D = x0.shape
    num_layers = stacked[0].shape[0]

    kernel = functools.partial(decoder_stack_kernel, num_heads=num_heads)
    in_specs = ([_batch_spec(x0.shape), _batch_spec(enc.shape),
                 _const_spec(tgt_bias.shape), _const_spec(src_bias.shape)]
                + [_layer_spec(p.shape) for p in stacked])

    return pl.pallas_call(
        kernel,
        out_shape=jax.ShapeDtypeStruct((B, S, D), jnp.float32),
        grid_spec=pltpu.PrefetchScalarGridSpec(
            num_scalar_prefetch=0,
            grid=(B, num_layers),
            in_specs=in_specs,
            out_specs=_batch_spec((B, S, D)),
            scratch_shapes=[pltpu.VMEM((S, D), jnp.float32)],
        ),
        compiler_params=pltpu.CompilerParams(
            dimension_semantics=("parallel", "arbitrary"),   # batch || , layer carries x
            vmem_limit_bytes=_vmem_limit_bytes(),
        ),
    )(x0, enc, tgt_bias, src_bias, *stacked)


# ---------------------------------------------------------------------------
# Final LayerNorm + vocab projection: separate lane-dense tiled kernel
# ---------------------------------------------------------------------------
def final_proj_kernel(x_ref, g_ref, b_ref, w_ref, bias_ref, out_ref):
    y = _layernorm(x_ref[...], g_ref[...], b_ref[...])
    out_ref[...] = (jnp.dot(y.astype(jnp.bfloat16), w_ref[...],
                            preferred_element_type=jnp.float32) + bias_ref[...])


def run_final_projection(x, gamma, beta, w_pad, bias_pad, *, tn=128):
    rows, d = x.shape
    v_pad = w_pad.shape[1]
    assert v_pad % tn == 0
    return pl.pallas_call(
        final_proj_kernel,
        out_shape=jax.ShapeDtypeStruct((rows, v_pad), jnp.float32),
        grid_spec=pltpu.PrefetchScalarGridSpec(
            num_scalar_prefetch=0,
            grid=(v_pad // tn,),
            in_specs=[pl.BlockSpec((rows, d), lambda j: (0, 0)),
                      pl.BlockSpec((1, d), lambda j: (0, 0)),
                      pl.BlockSpec((1, d), lambda j: (0, 0)),
                      pl.BlockSpec((d, tn), lambda j: (0, j)),
                      pl.BlockSpec((1, tn), lambda j: (0, j))],
            out_specs=pl.BlockSpec((rows, tn), lambda j: (0, j)),
        ),
        compiler_params=pltpu.CompilerParams(
            dimension_semantics=("parallel",),
            vmem_limit_bytes=_vmem_limit_bytes(),
        ),
    )(x, gamma, beta, w_pad, bias_pad)


# ---------------------------------------------------------------------------
# Parameter construction + preprocessing (deterministic, in-script)
# ---------------------------------------------------------------------------
def init_linear(key, d_in, d_out):
    k1, k2 = jax.random.split(key)
    w = jax.random.normal(k1, (d_in, d_out), jnp.float32) / math.sqrt(d_in)
    b = 0.01 * jax.random.normal(k2, (1, d_out), jnp.float32)
    return w, b


def init_decoder_layer(key, d_model, d_ff):
    keys = jax.random.split(key, 10)
    params = []
    for i in range(4):                              # self-attn q,k,v,o
        params.extend(init_linear(keys[i], d_model, d_model))
    for i in range(4):                              # cross-attn q,k,v,o
        params.extend(init_linear(keys[4 + i], d_model, d_model))
    params.extend(init_linear(keys[8], d_model, d_ff))
    params.extend(init_linear(keys[9], d_ff, d_model))
    for _ in range(3):                              # layernorm 1..3
        params.append(jnp.ones((1, d_model), jnp.float32))
        params.append(jnp.zeros((1, d_model), jnp.float32))
    return params


def prepare_stacked_params(layer_params, num_heads):
    """Per-layer raw params -> layer-stacked, lane-dense, MXU-friendly arrays.

    * Wq kept (D, D); K and V fused into a single (D, 2D) matmul weight.
    * 1/sqrt(hd) score scale folded into the Q projection.
    * Output projection weight kept in its original (D, D) layout.
    * Matmul weights pre-cast to bf16; biases / norm params stay f32.
    """
    d_model = layer_params[0][0].shape[0]
    hd = d_model // num_heads
    scale = 1.0 / math.sqrt(hd)

    def prep_one(p):
        (sa_wq, sa_bq, sa_wk, sa_bk, sa_wv, sa_bv, sa_wo, sa_bo,
         ca_wq, ca_bq, ca_wk, ca_bk, ca_wv, ca_bv, ca_wo, ca_bo,
         ff_w1, ff_b1, ff_w2, ff_b2,
         n1_g, n1_b, n2_g, n2_b, n3_g, n3_b) = p

        def attn(wq, bq, wk, bk, wv, bv, wo, bo):
            return [
                (wq * scale).astype(jnp.bfloat16),                       # (D, D)
                bq * scale,                                              # (1, D)
                jnp.concatenate([wk, wv], axis=1).astype(jnp.bfloat16),  # (D, 2D)
                jnp.concatenate([bk, bv], axis=1),                       # (1, 2D)
                wo.astype(jnp.bfloat16),                                 # (D, D)
                bo,                                                      # (1, D)
            ]

        out = []
        out += attn(sa_wq, sa_bq, sa_wk, sa_bk, sa_wv, sa_bv, sa_wo, sa_bo)
        out += attn(ca_wq, ca_bq, ca_wk, ca_bk, ca_wv, ca_bv, ca_wo, ca_bo)
        out += [ff_w1.astype(jnp.bfloat16), ff_b1,
                ff_w2.astype(jnp.bfloat16), ff_b2,
                n1_g, n1_b, n2_g, n2_b, n3_g, n3_b]
        return out

    prepped = [prep_one(p) for p in layer_params]
    return [jnp.stack([layer[i] for layer in prepped], axis=0)
            for i in range(len(prepped[0]))]


def positional_encoding(max_len, d_model):
    pos = jnp.arange(max_len, dtype=jnp.float32)[:, None]
    i = jnp.arange(0, d_model, 2, dtype=jnp.float32)
    div = jnp.exp(-math.log(10000.0) * i / d_model)
    pe = jnp.zeros((max_len, d_model), jnp.float32)
    pe = pe.at[:, 0::2].set(jnp.sin(pos * div))
    pe = pe.at[:, 1::2].set(jnp.cos(pos * div))
    return pe


def mask_to_bias(mask, s_q, s_k):
    """Boolean mask (True = attend) -> additive f32 bias; None -> zeros."""
    if mask is None:
        return jnp.zeros((s_q, s_k), jnp.float32)
    return jnp.where(mask, 0.0, NEG_INF).astype(jnp.float32)


# ---------------------------------------------------------------------------
# Full decoder forward
# ---------------------------------------------------------------------------
def decoder_forward(tgt_tokens, encoder_out, params, *, num_heads,
                    src_mask=None, tgt_mask=None):
    emb, pe, stacked, fin_g, fin_b, fin_w_pad, fin_bias_pad, output_dim = params
    B, S = tgt_tokens.shape
    S_src = encoder_out.shape[1]
    D = emb.shape[1]

    # glue: embedding lookup + positional encoding
    # TODO(synk): dropout layers are identity (eval/inference mode).
    x = (jnp.take(emb, tgt_tokens, axis=0) + pe[:S][None, :, :]).astype(jnp.float32)
    enc = encoder_out.astype(jnp.float32)

    tgt_bias = mask_to_bias(tgt_mask, S, S)
    src_bias = mask_to_bias(src_mask, S, S_src)

    x_out = run_decoder_stack(x, enc, tgt_bias, src_bias, stacked, num_heads)
    logits_pad = run_final_projection(x_out.reshape(B * S, D),
                                      fin_g, fin_b, fin_w_pad, fin_bias_pad)
    return logits_pad[:, :output_dim].reshape(B, S, output_dim)


# ---------------------------------------------------------------------------
if __name__ == "__main__":
    # small, module-consistent shapes
    num_layers = 2
    d_model = 32
    num_heads = 4
    d_ff = 64
    output_dim = 16     # vocab size
    B, S_tgt, S_src = 2, 8, 8
    max_len = 64
    V_PAD = 128         # lane-dense final projection width (pad sliced off)

    root = jax.random.PRNGKey(0)
    k_emb, k_layers, k_fin, k_tok, k_enc = jax.random.split(root, 5)

    emb = jax.random.normal(k_emb, (output_dim, d_model), jnp.float32)
    pe = positional_encoding(max_len, d_model)
    layer_keys = jax.random.split(k_layers, num_layers)
    layer_params = [init_decoder_layer(k, d_model, d_ff) for k in layer_keys]
    stacked = prepare_stacked_params(layer_params, num_heads)

    fin_g = jnp.ones((1, d_model), jnp.float32)
    fin_b = jnp.zeros((1, d_model), jnp.float32)
    fin_w, fin_bias = init_linear(k_fin, d_model, output_dim)
    fin_w_pad = (jnp.zeros((d_model, V_PAD), jnp.float32)
                 .at[:, :output_dim].set(fin_w)).astype(jnp.bfloat16)
    fin_bias_pad = jnp.zeros((1, V_PAD), jnp.float32).at[:, :output_dim].set(fin_bias)

    params = (emb, pe, stacked, fin_g, fin_b, fin_w_pad, fin_bias_pad, output_dim)

    tgt_tokens = jax.random.randint(k_tok, (B, S_tgt), 0, output_dim)
    encoder_out = jax.random.normal(k_enc, (B, S_src, d_model), jnp.float32)

    # causal target mask (True = attend), src mask = None
    causal = jnp.tril(jnp.ones((S_tgt, S_tgt), dtype=bool))

    out = decoder_forward(tgt_tokens, encoder_out, params,
                          num_heads=num_heads, src_mask=None, tgt_mask=causal)
    out = jax.block_until_ready(out)

    assert out.shape == (B, S_tgt, output_dim), out.shape
    assert bool(jnp.all(jnp.isfinite(out)))
    print("KERNEL_OK")
</pallas_src>

<mosaic_0001>
module attributes {stable_mosaic.version = 11 : i64} {
  func.func @decoder_stack_kernel(%arg0: i32, %arg1: i32, %arg2: memref<1x8x32xf32, #tpu.memory_space<vmem>>, %arg3: memref<1x8x32xf32, #tpu.memory_space<vmem>>, %arg4: memref<8x8xf32, #tpu.memory_space<vmem>>, %arg5: memref<8x8xf32, #tpu.memory_space<vmem>>, %arg6: memref<1x32x32xbf16, #tpu.memory_space<vmem>>, %arg7: memref<1x1x32xf32, #tpu.memory_space<vmem>>, %arg8: memref<1x32x64xbf16, #tpu.memory_space<vmem>>, %arg9: memref<1x1x64xf32, #tpu.memory_space<vmem>>, %arg10: memref<1x32x32xbf16, #tpu.memory_space<vmem>>, %arg11: memref<1x1x32xf32, #tpu.memory_space<vmem>>, %arg12: memref<1x32x32xbf16, #tpu.memory_space<vmem>>, %arg13: memref<1x1x32xf32, #tpu.memory_space<vmem>>, %arg14: memref<1x32x64xbf16, #tpu.memory_space<vmem>>, %arg15: memref<1x1x64xf32, #tpu.memory_space<vmem>>, %arg16: memref<1x32x32xbf16, #tpu.memory_space<vmem>>, %arg17: memref<1x1x32xf32, #tpu.memory_space<vmem>>, %arg18: memref<1x32x64xbf16, #tpu.memory_space<vmem>>, %arg19: memref<1x1x64xf32, #tpu.memory_space<vmem>>, %arg20: memref<1x64x32xbf16, #tpu.memory_space<vmem>>, %arg21: memref<1x1x32xf32, #tpu.memory_space<vmem>>, %arg22: memref<1x1x32xf32, #tpu.memory_space<vmem>>, %arg23: memref<1x1x32xf32, #tpu.memory_space<vmem>>, %arg24: memref<1x1x32xf32, #tpu.memory_space<vmem>>, %arg25: memref<1x1x32xf32, #tpu.memory_space<vmem>>, %arg26: memref<1x1x32xf32, #tpu.memory_space<vmem>>, %arg27: memref<1x1x32xf32, #tpu.memory_space<vmem>>, %arg28: memref<1x8x32xf32, #tpu.memory_space<vmem>>, %arg29: memref<8x32xf32, #tpu.memory_space<vmem>>) attributes {dimension_semantics = [#tpu.dimension_semantics<parallel>, #tpu.dimension_semantics<arbitrary>], iteration_bounds = array<i64: 2, 2>, scalar_prefetch = 0 : i64, scratch_operands = 1 : i64, tpu.core_type = #tpu.core_type<tc>, window_params = [{transform_indices = @transform_0, window_bounds = array<i64: 1, 8, 32>}, {transform_indices = @transform_1, window_bounds = array<i64: 1, 8, 32>}, {pipeline_mode = #tpu.pipeline_mode<synchronous>, transform_indices = @transform_2, window_bounds = array<i64: 8, 8>}, {pipeline_mode = #tpu.pipeline_mode<synchronous>, transform_indices = @transform_3, window_bounds = array<i64: 8, 8>}, {transform_indices = @transform_4, window_bounds = array<i64: 1, 32, 32>}, {transform_indices = @transform_5, window_bounds = array<i64: 1, 1, 32>}, {transform_indices = @transform_6, window_bounds = array<i64: 1, 32, 64>}, {transform_indices = @transform_7, window_bounds = array<i64: 1, 1, 64>}, {transform_indices = @transform_8, window_bounds = array<i64: 1, 32, 32>}, {transform_indices = @transform_9, window_bounds = array<i64: 1, 1, 32>}, {transform_indices = @transform_10, window_bounds = array<i64: 1, 32, 32>}, {transform_indices = @transform_11, window_bounds = array<i64: 1, 1, 32>}, {transform_indices = @transform_12, window_bounds = array<i64: 1, 32, 64>}, {transform_indices = @transform_13, window_bounds = array<i64: 1, 1, 64>}, {transform_indices = @transform_14, window_bounds = array<i64: 1, 32, 32>}, {transform_indices = @transform_15, window_bounds = array<i64: 1, 1, 32>}, {transform_indices = @transform_16, window_bounds = array<i64: 1, 32, 64>}, {transform_indices = @transform_17, window_bounds = array<i64: 1, 1, 64>}, {transform_indices = @transform_18, window_bounds = array<i64: 1, 64, 32>}, {transform_indices = @transform_19, window_bounds = array<i64: 1, 1, 32>}, {transform_indices = @transform_20, window_bounds = array<i64: 1, 1, 32>}, {transform_indices = @transform_21, window_bounds = array<i64: 1, 1, 32>}, {transform_indices = @transform_22, window_bounds = array<i64: 1, 1, 32>}, {transform_indices = @transform_23, window_bounds = array<i64: 1, 1, 32>}, {transform_indices = @transform_24, window_bounds = array<i64: 1, 1, 32>}, {transform_indices = @transform_25, window_bounds = array<i64: 1, 1, 32>}, {transform_indices = @transform_26, window_bounds = array<i64: 1, 8, 32>}]} {
    %c0_i32 = arith.constant 0 : i32
    %0 = arith.cmpi eq, %arg1, %c0_i32 : i32
    %1 = arith.extui %0 : i1 to i32
    %c0_i32_0 = arith.constant 0 : i32
    %2 = arith.cmpi ne, %1, %c0_i32_0 : i32
    scf.if %2 {
      %c0_136 = arith.constant 0 : index
      %c0_137 = arith.constant 0 : index
      %c0_138 = arith.constant 0 : index
      %331 = vector.load %arg2[%c0_136, %c0_137, %c0_138] : memref<1x8x32xf32, #tpu.memory_space<vmem>>, vector<1x8x32xf32>
      %332 = vector.shape_cast %331 : vector<1x8x32xf32> to vector<8x32xf32>
      %c0_139 = arith.constant 0 : index
      %c0_140 = arith.constant 0 : index
      %333 = vector.load %arg29[%c0_139, %c0_140] : memref<8x32xf32, #tpu.memory_space<vmem>>, vector<8x32xf32>
      tpu.vector_store %arg29[%c0_139, %c0_140], %332 {strides = array<i32>} : memref<8x32xf32, #tpu.memory_space<vmem>>, vector<8x32xf32>,
    } else {
    }
    %c0 = arith.constant 0 : index
    %c0_1 = arith.constant 0 : index
    %3 = vector.load %arg29[%c0, %c0_1] : memref<8x32xf32, #tpu.memory_space<vmem>>, vector<8x32xf32>
    %c0_2 = arith.constant 0 : index
    %c0_3 = arith.constant 0 : index
    %c0_4 = arith.constant 0 : index
    %4 = vector.load %arg3[%c0_2, %c0_3, %c0_4] : memref<1x8x32xf32, #tpu.memory_space<vmem>>, vector<1x8x32xf32>
    %5 = vector.shape_cast %4 : vector<1x8x32xf32> to vector<8x32xf32>
    %c0_5 = arith.constant 0 : index
    %c0_6 = arith.constant 0 : index
    %6 = vector.load %arg4[%c0_5, %c0_6] : memref<8x8xf32, #tpu.memory_space<vmem>>, vector<8x8xf32>
    %c0_7 = arith.constant 0 : index
    %c0_8 = arith.constant 0 : index
    %c0_9 = arith.constant 0 : index
    %7 = vector.load %arg6[%c0_7, %c0_8, %c0_9] : memref<1x32x32xbf16, #tpu.memory_space<vmem>>, vector<1x32x32xbf16>
    %8 = vector.shape_cast %7 : vector<1x32x32xbf16> to vector<32x32xbf16>
    %c0_10 = arith.constant 0 : index
    %c0_11 = arith.constant 0 : index
    %c0_12 = arith.constant 0 : index
    %9 = vector.load %arg7[%c0_10, %c0_11, %c0_12] : memref<1x1x32xf32, #tpu.memory_space<vmem>>, vector<1x1x32xf32>
    %10 = vector.shape_cast %9 : vector<1x1x32xf32> to vector<1x32xf32>
    %c0_13 = arith.constant 0 : index
    %c0_14 = arith.constant 0 : index
    %c0_15 = arith.constant 0 : index
    %11 = vector.load %arg8[%c0_13, %c0_14, %c0_15] : memref<1x32x64xbf16, #tpu.memory_space<vmem>>, vector<1x32x64xbf16>
    %12 = vector.shape_cast %11 : vector<1x32x64xbf16> to vector<32x64xbf16>
    %c0_16 = arith.constant 0 : index
    %c0_17 = arith.constant 0 : index
    %c0_18 = arith.constant 0 : index
    %13 = vector.load %arg9[%c0_16, %c0_17, %c0_18] : memref<1x1x64xf32, #tpu.memory_space<vmem>>, vector<1x1x64xf32>
    %14 = vector.shape_cast %13 : vector<1x1x64xf32> to vector<1x64xf32>
    %c0_19 = arith.constant 0 : index
    %c0_20 = arith.constant 0 : index
    %c0_21 = arith.constant 0 : index
    %15 = vector.load %arg10[%c0_19, %c0_20, %c0_21] : memref<1x32x32xbf16, #tpu.memory_space<vmem>>, vector<1x32x32xbf16>
    %16 = vector.shape_cast %15 : vector<1x32x32xbf16> to vector<32x32xbf16>
    %c0_22 = arith.constant 0 : index
    %c0_23 = arith.constant 0 : index
    %c0_24 = arith.constant 0 : index
    %17 = vector.load %arg11[%c0_22, %c0_23, %c0_24] : memref<1x1x32xf32, #tpu.memory_space<vmem>>, vector<1x1x32xf32>
    %18 = vector.shape_cast %17 : vector<1x1x32xf32> to vector<1x32xf32>
    %19 = arith.truncf %3 : vector<8x32xf32> to vector<8x32xbf16>
    %20 = arith.truncf %3 : vector<8x32xf32> to vector<8x32xbf16>
    %cst = arith.constant dense<0.000000e+00> : vector<8x32xf32>
    %21 = tpu.matmul %19, %8, %cst {dimension_numbers = #tpu.dot_dimension_numbers<[1], [0], [0], [1], [0, 0, 1, 1], [], []>} : vector<8x32xbf16>, vector<32x32xbf16>, vector<8x32xf32> -> vector<8x32xf32>
    %22 = vector.broadcast %10 : vector<1x32xf32> to vector<8x32xf32>
    %23 = arith.addf %21, %22 : vector<8x32xf32>
    %cst_25 = arith.constant dense<0.000000e+00> : vector<8x64xf32>
    %24 = tpu.matmul %20, %12, %cst_25 {dimension_numbers = #tpu.dot_dimension_numbers<[1], [0], [0], [1], [0, 0, 1, 1], [], []>} : vector<8x32xbf16>, vector<32x64xbf16>, vector<8x64xf32> -> vector<8x64xf32>
    %25 = vector.broadcast %14 : vector<1x64xf32> to vector<8x64xf32>
    %26 = arith.addf %24, %25 : vector<8x64xf32>
    %27 = vector.extract_strided_slice %26 {offsets = [0, 0], sizes = [8, 32], strides = [1, 1]} : vector<8x64xf32> to vector<8x32xf32>
    %28 = vector.extract_strided_slice %26 {offsets = [0, 32], sizes = [8, 32], strides = [1, 1]} : vector<8x64xf32> to vector<8x32xf32>
    %29 = vector.extract_strided_slice %23 {offsets = [0, 0], sizes = [8, 8], strides = [1, 1]} : vector<8x32xf32> to vector<8x8xf32>
    %30 = arith.truncf %29 : vector<8x8xf32> to vector<8x8xbf16>
    %31 = vector.extract_strided_slice %27 {offsets = [0, 0], sizes = [8, 8], strides = [1, 1]} : vector<8x32xf32> to vector<8x8xf32>
    %32 = arith.truncf %31 : vector<8x8xf32> to vector<8x8xbf16>
    %33 = vector.extract_strided_slice %28 {offsets = [0, 0], sizes = [8, 8], strides = [1, 1]} : vector<8x32xf32> to vector<8x8xf32>
    %34 = arith.truncf %33 : vector<8x8xf32> to vector<8x8xbf16>
    %cst_26 = arith.constant dense<0.000000e+00> : vector<8x8xf32>
    %35 = tpu.matmul %30, %32, %cst_26 {dimension_numbers = #tpu.dot_dimension_numbers<[1], [1], [0], [0], [0, 0, 1, 0], [], []>} : vector<8x8xbf16>, vector<8x8xbf16>, vector<8x8xf32> -> vector<8x8xf32>
    %36 = arith.addf %35, %6 : vector<8x8xf32>
    %cst_27 = arith.constant dense<0xFF800000> : vector<8xf32>
    %37 = vector.multi_reduction <maximumf>, %36, %cst_27 [1] : vector<8x8xf32> to vector<8xf32>
    %38 = vector.shape_cast %37 : vector<8xf32> to vector<8x1xf32>
    %39 = vector.broadcast %38 : vector<8x1xf32> to vector<8x8xf32>
    %40 = arith.subf %36, %39 : vector<8x8xf32>
    %41 = math.exp %40 : vector<8x8xf32>
    %cst_28 = arith.constant dense<0.000000e+00> : vector<8xf32>
    %42 = vector.multi_reduction <add>, %41, %cst_28 [1] : vector<8x8xf32> to vector<8xf32>
    %43 = vector.shape_cast %42 : vector<8xf32> to vector<8x1xf32>
    %44 = tpu.reciprocal %43 {approx = true} : vector<8x1xf32> -> vector<8x1xf32>
    %45 = vector.broadcast %44 : vector<8x1xf32> to vector<8x8xf32>
    %46 = arith.mulf %41, %45 : vector<8x8xf32>
    %47 = arith.truncf %46 : vector<8x8xf32> to vector<8x8xbf16>
    %cst_29 = arith.constant dense<0.000000e+00> : vector<8x8xf32>
    %48 = tpu.matmul %47, %34, %cst_29 {dimension_numbers = #tpu.dot_dimension_numbers<[1], [0], [0], [1], [0, 0, 1, 1], [], []>} : vector<8x8xbf16>, vector<8x8xbf16>, vector<8x8xf32> -> vector<8x8xf32>
    %49 = vector.extract_strided_slice %23 {offsets = [0, 8], sizes = [8, 8], strides = [1, 1]} : vector<8x32xf32> to vector<8x8xf32>
    %50 = arith.truncf %49 : vector<8x8xf32> to vector<8x8xbf16>
    %51 = vector.extract_strided_slice %27 {offsets = [0, 8], sizes = [8, 8], strides = [1, 1]} : vector<8x32xf32> to vector<8x8xf32>
    %52 = arith.truncf %51 : vector<8x8xf32> to vector<8x8xbf16>
    %53 = vector.extract_strided_slice %28 {offsets = [0, 8], sizes = [8, 8], strides = [1, 1]} : vector<8x32xf32> to vector<8x8xf32>
    %54 = arith.truncf %53 : vector<8x8xf32> to vector<8x8xbf16>
    %cst_30 = arith.constant dense<0.000000e+00> : vector<8x8xf32>
    %55 = tpu.matmul %50, %52, %cst_30 {dimension_numbers = #tpu.dot_dimension_numbers<[1], [1], [0], [0], [0, 0, 1, 0], [], []>} : vector<8x8xbf16>, vector<8x8xbf16>, vector<8x8xf32> -> vector<8x8xf32>
    %56 = arith.addf %55, %6 : vector<8x8xf32>
    %cst_31 = arith.constant dense<0xFF800000> : vector<8xf32>
    %57 = vector.multi_reduction <maximumf>, %56, %cst_31 [1] : vector<8x8xf32> to vector<8xf32>
    %58 = vector.shape_cast %57 : vector<8xf32> to vector<8x1xf32>
    %59 = vector.broadcast %58 : vector<8x1xf32> to vector<8x8xf32>
    %60 = arith.subf %56, %59 : vector<8x8xf32>
    %61 = math.exp %60 : vector<8x8xf32>
    %cst_32 = arith.constant dense<0.000000e+00> : vector<8xf32>
    %62 = vector.multi_reduction <add>, %61, %cst_32 [1] : vector<8x8xf32> to vector<8xf32>
    %63 = vector.shape_cast %62 : vector<8xf32> to vector<8x1xf32>
    %64 = tpu.reciprocal %63 {approx = true} : vector<8x1xf32> -> vector<8x1xf32>
    %65 = vector.broadcast %64 : vector<8x1xf32> to vector<8x8xf32>
    %66 = arith.mulf %61, %65 : vector<8x8xf32>
    %67 = arith.truncf %66 : vector<8x8xf32> to vector<8x8xbf16>
    %cst_33 = arith.constant dense<0.000000e+00> : vector<8x8xf32>
    %68 = tpu.matmul %67, %54, %cst_33 {dimension_numbers = #tpu.dot_dimension_numbers<[1], [0], [0], [1], [0, 0, 1, 1], [], []>} : vector<8x8xbf16>, vector<8x8xbf16>, vector<8x8xf32> -> vector<8x8xf32>
    %69 = vector.extract_strided_slice %23 {offsets = [0, 16], sizes = [8, 8], strides = [1, 1]} : vector<8x32xf32> to vector<8x8xf32>
    %70 = arith.truncf %69 : vector<8x8xf32> to vector<8x8xbf16>
    %71 = vector.extract_strided_slice %27 {offsets = [0, 16], sizes = [8, 8], strides = [1, 1]} : vector<8x32xf32> to vector<8x8xf32>
    %72 = arith.truncf %71 : vector<8x8xf32> to vector<8x8xbf16>
    %73 = vector.extract_strided_slice %28 {offsets = [0, 16], sizes = [8, 8], strides = [1, 1]} : vector<8x32xf32> to vector<8x8xf32>
    %74 = arith.truncf %73 : vector<8x8xf32> to vector<8x8xbf16>
    %cst_34 = arith.constant dense<0.000000e+00> : vector<8x8xf32>
    %75 = tpu.matmul %70, %72, %cst_34 {dimension_numbers = #tpu.dot_dimension_numbers<[1], [1], [0], [0], [0, 0, 1, 0], [], []>} : vector<8x8xbf16>, vector<8x8xbf16>, vector<8x8xf32> -> vector<8x8xf32>
    %76 = arith.addf %75, %6 : vector<8x8xf32>
    %cst_35 = arith.constant dense<0xFF800000> : vector<8xf32>
    %77 = vector.multi_reduction <maximumf>, %76, %cst_35 [1] : vector<8x8xf32> to vector<8xf32>
    %78 = vector.shape_cast %77 : vector<8xf32> to vector<8x1xf32>
    %79 = vector.broadcast %78 : vector<8x1xf32> to vector<8x8xf32>
    %80 = arith.subf %76, %79 : vector<8x8xf32>
    %81 = math.exp %80 : vector<8x8xf32>
    %cst_36 = arith.constant dense<0.000000e+00> : vector<8xf32>
    %82 = vector.multi_reduction <add>, %81, %cst_36 [1] : vector<8x8xf32> to vector<8xf32>
    %83 = vector.shape_cast %82 : vector<8xf32> to vector<8x1xf32>
    %84 = tpu.reciprocal %83 {approx = true} : vector<8x1xf32> -> vector<8x1xf32>
    %85 = vector.broadcast %84 : vector<8x1xf32> to vector<8x8xf32>
    %86 = arith.mulf %81, %85 : vector<8x8xf32>
    %87 = arith.truncf %86 : vector<8x8xf32> to vector<8x8xbf16>
    %cst_37 = arith.constant dense<0.000000e+00> : vector<8x8xf32>
    %88 = tpu.matmul %87, %74, %cst_37 {dimension_numbers = #tpu.dot_dimension_numbers<[1], [0], [0], [1], [0, 0, 1, 1], [], []>} : vector<8x8xbf16>, vector<8x8xbf16>, vector<8x8xf32> -> vector<8x8xf32>
    %89 = vector.extract_strided_slice %23 {offsets = [0, 24], sizes = [8, 8], strides = [1, 1]} : vector<8x32xf32> to vector<8x8xf32>
    %90 = arith.truncf %89 : vector<8x8xf32> to vector<8x8xbf16>
    %91 = vector.extract_strided_slice %27 {offsets = [0, 24], sizes = [8, 8], strides = [1, 1]} : vector<8x32xf32> to vector<8x8xf32>
    %92 = arith.truncf %91 : vector<8x8xf32> to vector<8x8xbf16>
    %93 = vector.extract_strided_slice %28 {offsets = [0, 24], sizes = [8, 8], strides = [1, 1]} : vector<8x32xf32> to vector<8x8xf32>
    %94 = arith.truncf %93 : vector<8x8xf32> to vector<8x8xbf16>
    %cst_38 = arith.constant dense<0.000000e+00> : vector<8x8xf32>
    %95 = tpu.matmul %90, %92, %cst_38 {dimension_numbers = #tpu.dot_dimension_numbers<[1], [1], [0], [0], [0, 0, 1, 0], [], []>} : vector<8x8xbf16>, vector<8x8xbf16>, vector<8x8xf32> -> vector<8x8xf32>
    %96 = arith.addf %95, %6 : vector<8x8xf32>
    %cst_39 = arith.constant dense<0xFF800000> : vector<8xf32>
    %97 = vector.multi_reduction <maximumf>, %96, %cst_39 [1] : vector<8x8xf32> to vector<8xf32>
    %98 = vector.shape_cast %97 : vector<8xf32> to vector<8x1xf32>
    %99 = vector.broadcast %98 : vector<8x1xf32> to vector<8x8xf32>
    %100 = arith.subf %96, %99 : vector<8x8xf32>
    %101 = math.exp %100 : vector<8x8xf32>
    %cst_40 = arith.constant dense<0.000000e+00> : vector<8xf32>
    %102 = vector.multi_reduction <add>, %101, %cst_40 [1] : vector<8x8xf32> to vector<8xf32>
    %103 = vector.shape_cast %102 : vector<8xf32> to vector<8x1xf32>
    %104 = tpu.reciprocal %103 {approx = true} : vector<8x1xf32> -> vector<8x1xf32>
    %105 = vector.broadcast %104 : vector<8x1xf32> to vector<8x8xf32>
    %106 = arith.mulf %101, %105 : vector<8x8xf32>
    %107 = arith.truncf %106 : vector<8x8xf32> to vector<8x8xbf16>
    %cst_41 = arith.constant dense<0.000000e+00> : vector<8x8xf32>
    %108 = tpu.matmul %107, %94, %cst_41 {dimension_numbers = #tpu.dot_dimension_numbers<[1], [0], [0], [1], [0, 0, 1, 1], [], []>} : vector<8x8xbf16>, vector<8x8xbf16>, vector<8x8xf32> -> vector<8x8xf32>
    %109 = tpu.concatenate %48, %68, %88, %108 in 1 : vector<8x8xf32>, vector<8x8xf32>, vector<8x8xf32>, vector<8x8xf32> -> vector<8x32xf32>
    %110 = arith.truncf %109 : vector<8x32xf32> to vector<8x32xbf16>
    %cst_42 = arith.constant dense<0.000000e+00> : vector<8x32xf32>
    %111 = tpu.matmul %110, %16, %cst_42 {dimension_numbers = #tpu.dot_dimension_numbers<[1], [0], [0], [1], [0, 0, 1, 1], [], []>} : vector<8x32xbf16>, vector<32x32xbf16>, vector<8x32xf32> -> vector<8x32xf32>
    %112 = vector.broadcast %18 : vector<1x32xf32> to vector<8x32xf32>
    %113 = arith.addf %111, %112 : vector<8x32xf32>
    %114 = arith.addf %3, %113 : vector<8x32xf32>
    %c0_43 = arith.constant 0 : index
    %c0_44 = arith.constant 0 : index
    %c0_45 = arith.constant 0 : index
    %115 = vector.load %arg22[%c0_43, %c0_44, %c0_45] : memref<1x1x32xf32, #tpu.memory_space<vmem>>, vector<1x1x32xf32>
    %116 = vector.shape_cast %115 : vector<1x1x32xf32> to vector<1x32xf32>
    %c0_46 = arith.constant 0 : index
    %c0_47 = arith.constant 0 : index
    %c0_48 = arith.constant 0 : index
    %117 = vector.load %arg23[%c0_46, %c0_47, %c0_48] : memref<1x1x32xf32, #tpu.memory_space<vmem>>, vector<1x1x32xf32>
    %118 = vector.shape_cast %117 : vector<1x1x32xf32> to vector<1x32xf32>
    %cst_49 = arith.constant dense<0.000000e+00> : vector<8xf32>
    %119 = vector.multi_reduction <add>, %114, %cst_49 [1] : vector<8x32xf32> to vector<8xf32>
    %120 = vector.shape_cast %119 : vector<8xf32> to vector<8x1xf32>
    %cst_50 = arith.constant 3.200000e+01 : f32
    %121 = vector.broadcast %cst_50 : f32 to vector<8x1xf32>
    %122 = arith.divf %120, %121 : vector<8x1xf32>
    %123 = vector.broadcast %122 : vector<8x1xf32> to vector<8x32xf32>
    %124 = arith.subf %114, %123 : vector<8x32xf32>
    %125 = arith.mulf %124, %124 : vector<8x32xf32>
    %cst_51 = arith.constant dense<0.000000e+00> : vector<8xf32>
    %126 = vector.multi_reduction <add>, %125, %cst_51 [1] : vector<8x32xf32> to vector<8xf32>
    %127 = vector.shape_cast %126 : vector<8xf32> to vector<8x1xf32>
    %cst_52 = arith.constant 3.200000e+01 : f32
    %128 = vector.broadcast %cst_52 : f32 to vector<8x1xf32>
    %129 = arith.divf %127, %128 : vector<8x1xf32>
    %130 = vector.broadcast %122 : vector<8x1xf32> to vector<8x32xf32>
    %131 = arith.subf %114, %130 : vector<8x32xf32>
    %cst_53 = arith.constant 9.99999974E-6 : f32
    %132 = vector.broadcast %cst_53 : f32 to vector<8x1xf32>
    %133 = arith.addf %129, %132 : vector<8x1xf32>
    %134 = math.rsqrt %133 : vector<8x1xf32>
    %135 = vector.broadcast %134 : vector<8x1xf32> to vector<8x32xf32>
    %136 = arith.mulf %131, %135 : vector<8x32xf32>
    %137 = vector.broadcast %116 : vector<1x32xf32> to vector<8x32xf32>
    %138 = arith.mulf %136, %137 : vector<8x32xf32>
    %139 = vector.broadcast %118 : vector<1x32xf32> to vector<8x32xf32>
    %140 = arith.addf %138, %139 : vector<8x32xf32>
    %cst_54 = arith.constant 0.000000e+00 : f32
    %141 = vector.broadcast %cst_54 : f32 to vector<8x32xf32>
    %142 = arith.maximumf %140, %141 : vector<8x32xf32>
    %c0_55 = arith.constant 0 : index
    %c0_56 = arith.constant 0 : index
    %143 = vector.load %arg5[%c0_55, %c0_56] : memref<8x8xf32, #tpu.memory_space<vmem>>, vector<8x8xf32>
    %c0_57 = arith.constant 0 : index
    %c0_58 = arith.constant 0 : index
    %c0_59 = arith.constant 0 : index
    %144 = vector.load %arg12[%c0_57, %c0_58, %c0_59] : memref<1x32x32xbf16, #tpu.memory_space<vmem>>, vector<1x32x32xbf16>
    %145 = vector.shape_cast %144 : vector<1x32x32xbf16> to vector<32x32xbf16>
    %c0_60 = arith.constant 0 : index
    %c0_61 = arith.constant 0 : index
    %c0_62 = arith.constant 0 : index
    %146 = vector.load %arg13[%c0_60, %c0_61, %c0_62] : memref<1x1x32xf32, #tpu.memory_space<vmem>>, vector<1x1x32xf32>
    %147 = vector.shape_cast %146 : vector<1x1x32xf32> to vector<1x32xf32>
    %c0_63 = arith.constant 0 : index
    %c0_64 = arith.constant 0 : index
    %c0_65 = arith.constant 0 : index
    %148 = vector.load %arg14[%c0_63, %c0_64, %c0_65] : memref<1x32x64xbf16, #tpu.memory_space<vmem>>, vector<1x32x64xbf16>
    %149 = vector.shape_cast %148 : vector<1x32x64xbf16> to vector<32x64xbf16>
    %c0_66 = arith.constant 0 : index
    %c0_67 = arith.constant 0 : index
    %c0_68 = arith.constant 0 : index
    %150 = vector.load %arg15[%c0_66, %c0_67, %c0_68] : memref<1x1x64xf32, #tpu.memory_space<vmem>>, vector<1x1x64xf32>
    %151 = vector.shape_cast %150 : vector<1x1x64xf32> to vector<1x64xf32>
    %c0_69 = arith.constant 0 : index
    %c0_70 = arith.constant 0 : index
    %c0_71 = arith.constant 0 : index
    %152 = vector.load %arg16[%c0_69, %c0_70, %c0_71] : memref<1x32x32xbf16, #tpu.memory_space<vmem>>, vector<1x32x32xbf16>
    %153 = vector.shape_cast %152 : vector<1x32x32xbf16> to vector<32x32xbf16>
    %c0_72 = arith.constant 0 : index
    %c0_73 = arith.constant 0 : index
    %c0_74 = arith.constant 0 : index
    %154 = vector.load %arg17[%c0_72, %c0_73, %c0_74] : memref<1x1x32xf32, #tpu.memory_space<vmem>>, vector<1x1x32xf32>
    %155 = vector.shape_cast %154 : vector<1x1x32xf32> to vector<1x32xf32>
    %156 = arith.truncf %142 : vector<8x32xf32> to vector<8x32xbf16>
    %157 = arith.truncf %5 : vector<8x32xf32> to vector<8x32xbf16>
    %cst_75 = arith.constant dense<0.000000e+00> : vector<8x32xf32>
    %158 = tpu.matmul %156, %145, %cst_75 {dimension_numbers = #tpu.dot_dimension_numbers<[1], [0], [0], [1], [0, 0, 1, 1], [], []>} : vector<8x32xbf16>, vector<32x32xbf16>, vector<8x32xf32> -> vector<8x32xf32>
    %159 = vector.broadcast %147 : vector<1x32xf32> to vector<8x32xf32>
    %160 = arith.addf %158, %159 : vector<8x32xf32>
    %cst_76 = arith.constant dense<0.000000e+00> : vector<8x64xf32>
    %161 = tpu.matmul %157, %149, %cst_76 {dimension_numbers = #tpu.dot_dimension_numbers<[1], [0], [0], [1], [0, 0, 1, 1], [], []>} : vector<8x32xbf16>, vector<32x64xbf16>, vector<8x64xf32> -> vector<8x64xf32>
    %162 = vector.broadcast %151 : vector<1x64xf32> to vector<8x64xf32>
    %163 = arith.addf %161, %162 : vector<8x64xf32>
    %164 = vector.extract_strided_slice %163 {offsets = [0, 0], sizes = [8, 32], strides = [1, 1]} : vector<8x64xf32> to vector<8x32xf32>
    %165 = vector.extract_strided_slice %163 {offsets = [0, 32], sizes = [8, 32], strides = [1, 1]} : vector<8x64xf32> to vector<8x32xf32>
    %166 = vector.extract_strided_slice %160 {offsets = [0, 0], sizes = [8, 8], strides = [1, 1]} : vector<8x32xf32> to vector<8x8xf32>
    %167 = arith.truncf %166 : vector<8x8xf32> to vector<8x8xbf16>
    %168 = vector.extract_strided_slice %164 {offsets = [0, 0], sizes = [8, 8], strides = [1, 1]} : vector<8x32xf32> to vector<8x8xf32>
    %169 = arith.truncf %168 : vector<8x8xf32> to vector<8x8xbf16>
    %170 = vector.extract_strided_slice %165 {offsets = [0, 0], sizes = [8, 8], strides = [1, 1]} : vector<8x32xf32> to vector<8x8xf32>
    %171 = arith.truncf %170 : vector<8x8xf32> to vector<8x8xbf16>
    %cst_77 = arith.constant dense<0.000000e+00> : vector<8x8xf32>
    %172 = tpu.matmul %167, %169, %cst_77 {dimension_numbers = #tpu.dot_dimension_numbers<[1], [1], [0], [0], [0, 0, 1, 0], [], []>} : vector<8x8xbf16>, vector<8x8xbf16>, vector<8x8xf32> -> vector<8x8xf32>
    %173 = arith.addf %172, %143 : vector<8x8xf32>
    %cst_78 = arith.constant dense<0xFF800000> : vector<8xf32>
    %174 = vector.multi_reduction <maximumf>, %173, %cst_78 [1] : vector<8x8xf32> to vector<8xf32>
    %175 = vector.shape_cast %174 : vector<8xf32> to vector<8x1xf32>
    %176 = vector.broadcast %175 : vector<8x1xf32> to vector<8x8xf32>
    %177 = arith.subf %173, %176 : vector<8x8xf32>
    %178 = math.exp %177 : vector<8x8xf32>
    %cst_79 = arith.constant dense<0.000000e+00> : vector<8xf32>
    %179 = vector.multi_reduction <add>, %178, %cst_79 [1] : vector<8x8xf32> to vector<8xf32>
    %180 = vector.shape_cast %179 : vector<8xf32> to vector<8x1xf32>
    %181 = tpu.reciprocal %180 {approx = true} : vector<8x1xf32> -> vector<8x1xf32>
    %182 = vector.broadcast %181 : vector<8x1xf32> to vector<8x8xf32>
    %183 = arith.mulf %178, %182 : vector<8x8xf32>
    %184 = arith.truncf %183 : vector<8x8xf32> to vector<8x8xbf16>
    %cst_80 = arith.constant dense<0.000000e+00> : vector<8x8xf32>
    %185 = tpu.matmul %184, %171, %cst_80 {dimension_numbers = #tpu.dot_dimension_numbers<[1], [0], [0], [1], [0, 0, 1, 1], [], []>} : vector<8x8xbf16>, vector<8x8xbf16>, vector<8x8xf32> -> vector<8x8xf32>
    %186 = vector.extract_strided_slice %160 {offsets = [0, 8], sizes = [8, 8], strides = [1, 1]} : vector<8x32xf32> to vector<8x8xf32>
    %187 = arith.truncf %186 : vector<8x8xf32> to vector<8x8xbf16>
    %188 = vector.extract_strided_slice %164 {offsets = [0, 8], sizes = [8, 8], strides = [1, 1]} : vector<8x32xf32> to vector<8x8xf32>
    %189 = arith.truncf %188 : vector<8x8xf32> to vector<8x8xbf16>
    %190 = vector.extract_strided_slice %165 {offsets = [0, 8], sizes = [8, 8], strides = [1, 1]} : vector<8x32xf32> to vector<8x8xf32>
    %191 = arith.truncf %190 : vector<8x8xf32> to vector<8x8xbf16>
    %cst_81 = arith.constant dense<0.000000e+00> : vector<8x8xf32>
    %192 = tpu.matmul %187, %189, %cst_81 {dimension_numbers = #tpu.dot_dimension_numbers<[1], [1], [0], [0], [0, 0, 1, 0], [], []>} : vector<8x8xbf16>, vector<8x8xbf16>, vector<8x8xf32> -> vector<8x8xf32>
    %193 = arith.addf %192, %143 : vector<8x8xf32>
    %cst_82 = arith.constant dense<0xFF800000> : vector<8xf32>
    %194 = vector.multi_reduction <maximumf>, %193, %cst_82 [1] : vector<8x8xf32> to vector<8xf32>
    %195 = vector.shape_cast %194 : vector<8xf32> to vector<8x1xf32>
    %196 = vector.broadcast %195 : vector<8x1xf32> to vector<8x8xf32>
    %197 = arith.subf %193, %196 : vector<8x8xf32>
    %198 = math.exp %197 : vector<8x8xf32>
    %cst_83 = arith.constant dense<0.000000e+00> : vector<8xf32>
    %199 = vector.multi_reduction <add>, %198, %cst_83 [1] : vector<8x8xf32> to vector<8xf32>
    %200 = vector.shape_cast %199 : vector<8xf32> to vector<8x1xf32>
    %201 = tpu.reciprocal %200 {approx = true} : vector<8x1xf32> -> vector<8x1xf32>
    %202 = vector.broadcast %201 : vector<8x1xf32> to vector<8x8xf32>
    %203 = arith.mulf %198, %202 : vector<8x8xf32>
    %204 = arith.truncf %203 : vector<8x8xf32> to vector<8x8xbf16>
    %cst_84 = arith.constant dense<0.000000e+00> : vector<8x8xf32>
    %205 = tpu.matmul %204, %191, %cst_84 {dimension_numbers = #tpu.dot_dimension_numbers<[1], [0], [0], [1], [0, 0, 1, 1], [], []>} : vector<8x8xbf16>, vector<8x8xbf16>, vector<8x8xf32> -> vector<8x8xf32>
    %206 = vector.extract_strided_slice %160 {offsets = [0, 16], sizes = [8, 8], strides = [1, 1]} : vector<8x32xf32> to vector<8x8xf32>
    %207 = arith.truncf %206 : vector<8x8xf32> to vector<8x8xbf16>
    %208 = vector.extract_strided_slice %164 {offsets = [0, 16], sizes = [8, 8], strides = [1, 1]} : vector<8x32xf32> to vector<8x8xf32>
    %209 = arith.truncf %208 : vector<8x8xf32> to vector<8x8xbf16>
    %210 = vector.extract_strided_slice %165 {offsets = [0, 16], sizes = [8, 8], strides = [1, 1]} : vector<8x32xf32> to vector<8x8xf32>
    %211 = arith.truncf %210 : vector<8x8xf32> to vector<8x8xbf16>
    %cst_85 = arith.constant dense<0.000000e+00> : vector<8x8xf32>
    %212 = tpu.matmul %207, %209, %cst_85 {dimension_numbers = #tpu.dot_dimension_numbers<[1], [1], [0], [0], [0, 0, 1, 0], [], []>} : vector<8x8xbf16>, vector<8x8xbf16>, vector<8x8xf32> -> vector<8x8xf32>
    %213 = arith.addf %212, %143 : vector<8x8xf32>
    %cst_86 = arith.constant dense<0xFF800000> : vector<8xf32>
    %214 = vector.multi_reduction <maximumf>, %213, %cst_86 [1] : vector<8x8xf32> to vector<8xf32>
    %215 = vector.shape_cast %214 : vector<8xf32> to vector<8x1xf32>
    %216 = vector.broadcast %215 : vector<8x1xf32> to vector<8x8xf32>
    %217 = arith.subf %213, %216 : vector<8x8xf32>
    %218 = math.exp %217 : vector<8x8xf32>
    %cst_87 = arith.constant dense<0.000000e+00> : vector<8xf32>
    %219 = vector.multi_reduction <add>, %218, %cst_87 [1] : vector<8x8xf32> to vector<8xf32>
    %220 = vector.shape_cast %219 : vector<8xf32> to vector<8x1xf32>
    %221 = tpu.reciprocal %220 {approx = true} : vector<8x1xf32> -> vector<8x1xf32>
    %222 = vector.broadcast %221 : vector<8x1xf32> to vector<8x8xf32>
    %223 = arith.mulf %218, %222 : vector<8x8xf32>
    %224 = arith.truncf %223 : vector<8x8xf32> to vector<8x8xbf16>
    %cst_88 = arith.constant dense<0.000000e+00> : vector<8x8xf32>
    %225 = tpu.matmul %224, %211, %cst_88 {dimension_numbers = #tpu.dot_dimension_numbers<[1], [0], [0], [1], [0, 0, 1, 1], [], []>} : vector<8x8xbf16>, vector<8x8xbf16>, vector<8x8xf32> -> vector<8x8xf32>
    %226 = vector.extract_strided_slice %160 {offsets = [0, 24], sizes = [8, 8], strides = [1, 1]} : vector<8x32xf32> to vector<8x8xf32>
    %227 = arith.truncf %226 : vector<8x8xf32> to vector<8x8xbf16>
    %228 = vector.extract_strided_slice %164 {offsets = [0, 24], sizes = [8, 8], strides = [1, 1]} : vector<8x32xf32> to vector<8x8xf32>
    %229 = arith.truncf %228 : vector<8x8xf32> to vector<8x8xbf16>
    %230 = vector.extract_strided_slice %165 {offsets = [0, 24], sizes = [8, 8], strides = [1, 1]} : vector<8x32xf32> to vector<8x8xf32>
    %231 = arith.truncf %230 : vector<8x8xf32> to vector<8x8xbf16>
    %cst_89 = arith.constant dense<0.000000e+00> : vector<8x8xf32>
    %232 = tpu.matmul %227, %229, %cst_89 {dimension_numbers = #tpu.dot_dimension_numbers<[1], [1], [0], [0], [0, 0, 1, 0], [], []>} : vector<8x8xbf16>, vector<8x8xbf16>, vector<8x8xf32> -> vector<8x8xf32>
    %233 = arith.addf %232, %143 : vector<8x8xf32>
    %cst_90 = arith.constant dense<0xFF800000> : vector<8xf32>
    %234 = vector.multi_reduction <maximumf>, %233, %cst_90 [1] : vector<8x8xf32> to vector<8xf32>
    %235 = vector.shape_cast %234 : vector<8xf32> to vector<8x1xf32>
    %236 = vector.broadcast %235 : vector<8x1xf32> to vector<8x8xf32>
    %237 = arith.subf %233, %236 : vector<8x8xf32>
    %238 = math.exp %237 : vector<8x8xf32>
    %cst_91 = arith.constant dense<0.000000e+00> : vector<8xf32>
    %239 = vector.multi_reduction <add>, %238, %cst_91 [1] : vector<8x8xf32> to vector<8xf32>
    %240 = vector.shape_cast %239 : vector<8xf32> to vector<8x1xf32>
    %241 = tpu.reciprocal %240 {approx = true} : vector<8x1xf32> -> vector<8x1xf32>
    %242 = vector.broadcast %241 : vector<8x1xf32> to vector<8x8xf32>
    %243 = arith.mulf %238, %242 : vector<8x8xf32>
    %244 = arith.truncf %243 : vector<8x8xf32> to vector<8x8xbf16>
    %cst_92 = arith.constant dense<0.000000e+00> : vector<8x8xf32>
    %245 = tpu.matmul %244, %231, %cst_92 {dimension_numbers = #tpu.dot_dimension_numbers<[1], [0], [0], [1], [0, 0, 1, 1], [], []>} : vector<8x8xbf16>, vector<8x8xbf16>, vector<8x8xf32> -> vector<8x8xf32>
    %246 = tpu.concatenate %185, %205, %225, %245 in 1 : vector<8x8xf32>, vector<8x8xf32>, vector<8x8xf32>, vector<8x8xf32> -> vector<8x32xf32>
    %247 = arith.truncf %246 : vector<8x32xf32> to vector<8x32xbf16>
    %cst_93 = arith.constant dense<0.000000e+00> : vector<8x32xf32>
    %248 = tpu.matmul %247, %153, %cst_93 {dimension_numbers = #tpu.dot_dimension_numbers<[1], [0], [0], [1], [0, 0, 1, 1], [], []>} : vector<8x32xbf16>, vector<32x32xbf16>, vector<8x32xf32> -> vector<8x32xf32>
    %249 = vector.broadcast %155 : vector<1x32xf32> to vector<8x32xf32>
    %250 = arith.addf %248, %249 : vector<8x32xf32>
    %251 = arith.addf %142, %250 : vector<8x32xf32>
    %c0_94 = arith.constant 0 : index
    %c0_95 = arith.constant 0 : index
    %c0_96 = arith.constant 0 : index
    %252 = vector.load %arg24[%c0_94, %c0_95, %c0_96] : memref<1x1x32xf32, #tpu.memory_space<vmem>>, vector<1x1x32xf32>
    %253 = vector.shape_cast %252 : vector<1x1x32xf32> to vector<1x32xf32>
    %c0_97 = arith.constant 0 : index
    %c0_98 = arith.constant 0 : index
    %c0_99 = arith.constant 0 : index
    %254 = vector.load %arg25[%c0_97, %c0_98, %c0_99] : memref<1x1x32xf32, #tpu.memory_space<vmem>>, vector<1x1x32xf32>
    %255 = vector.shape_cast %254 : vector<1x1x32xf32> to vector<1x32xf32>
    %cst_100 = arith.constant dense<0.000000e+00> : vector<8xf32>
    %256 = vector.multi_reduction <add>, %251, %cst_100 [1] : vector<8x32xf32> to vector<8xf32>
    %257 = vector.shape_cast %256 : vector<8xf32> to vector<8x1xf32>
    %cst_101 = arith.constant 3.200000e+01 : f32
    %258 = vector.broadcast %cst_101 : f32 to vector<8x1xf32>
    %259 = arith.divf %257, %258 : vector<8x1xf32>
    %260 = vector.broadcast %259 : vector<8x1xf32> to vector<8x32xf32>
    %261 = arith.subf %251, %260 : vector<8x32xf32>
    %262 = arith.mulf %261, %261 : vector<8x32xf32>
    %cst_102 = arith.constant dense<0.000000e+00> : vector<8xf32>
    %263 = vector.multi_reduction <add>, %262, %cst_102 [1] : vector<8x32xf32> to vector<8xf32>
    %264 = vector.shape_cast %263 : vector<8xf32> to vector<8x1xf32>
    %cst_103 = arith.constant 3.200000e+01 : f32
    %265 = vector.broadcast %cst_103 : f32 to vector<8x1xf32>
    %266 = arith.divf %264, %265 : vector<8x1xf32>
    %267 = vector.broadcast %259 : vector<8x1xf32> to vector<8x32xf32>
    %268 = arith.subf %251, %267 : vector<8x32xf32>
    %cst_104 = arith.constant 9.99999974E-6 : f32
    %269 = vector.broadcast %cst_104 : f32 to vector<8x1xf32>
    %270 = arith.addf %266, %269 : vector<8x1xf32>
    %271 = math.rsqrt %270 : vector<8x1xf32>
    %272 = vector.broadcast %271 : vector<8x1xf32> to vector<8x32xf32>
    %273 = arith.mulf %268, %272 : vector<8x32xf32>
    %274 = vector.broadcast %253 : vector<1x32xf32> to vector<8x32xf32>
    %275 = arith.mulf %273, %274 : vector<8x32xf32>
    %276 = vector.broadcast %255 : vector<1x32xf32> to vector<8x32xf32>
    %277 = arith.addf %275, %276 : vector<8x32xf32>
    %cst_105 = arith.constant 0.000000e+00 : f32
    %278 = vector.broadcast %cst_105 : f32 to vector<8x32xf32>
    %279 = arith.maximumf %277, %278 : vector<8x32xf32>
    %280 = arith.truncf %279 : vector<8x32xf32> to vector<8x32xbf16>
    %c0_106 = arith.constant 0 : index
    %c0_107 = arith.constant 0 : index
    %c0_108 = arith.constant 0 : index
    %281 = vector.load %arg18[%c0_106, %c0_107, %c0_108] : memref<1x32x64xbf16, #tpu.memory_space<vmem>>, vector<1x32x64xbf16>
    %282 = vector.shape_cast %281 : vector<1x32x64xbf16> to vector<32x64xbf16>
    %cst_109 = arith.constant dense<0.000000e+00> : vector<8x64xf32>
    %283 = tpu.matmul %280, %282, %cst_109 {dimension_numbers = #tpu.dot_dimension_numbers<[1], [0], [0], [1], [0, 0, 1, 1], [], []>} : vector<8x32xbf16>, vector<32x64xbf16>, vector<8x64xf32> -> vector<8x64xf32>
    %c0_110 = arith.constant 0 : index
    %c0_111 = arith.constant 0 : index
    %c0_112 = arith.constant 0 : index
    %284 = vector.load %arg19[%c0_110, %c0_111, %c0_112] : memref<1x1x64xf32, #tpu.memory_space<vmem>>, vector<1x1x64xf32>
    %285 = vector.shape_cast %284 : vector<1x1x64xf32> to vector<1x64xf32>
    %286 = vector.broadcast %285 : vector<1x64xf32> to vector<8x64xf32>
    %287 = arith.addf %283, %286 : vector<8x64xf32>
    %cst_113 = arith.constant 0.000000e+00 : f32
    %288 = vector.broadcast %cst_113 : f32 to vector<8x64xf32>
    %289 = arith.maximumf %287, %288 : vector<8x64xf32>
    %290 = arith.truncf %289 : vector<8x64xf32> to vector<8x64xbf16>
    %c0_114 = arith.constant 0 : index
    %c0_115 = arith.constant 0 : index
    %c0_116 = arith.constant 0 : index
    %291 = vector.load %arg20[%c0_114, %c0_115, %c0_116] : memref<1x64x32xbf16, #tpu.memory_space<vmem>>, vector<1x64x32xbf16>
    %292 = vector.shape_cast %291 : vector<1x64x32xbf16> to vector<64x32xbf16>
    %cst_117 = arith.constant dense<0.000000e+00> : vector<8x32xf32>
    %293 = tpu.matmul %290, %292, %cst_117 {dimension_numbers = #tpu.dot_dimension_numbers<[1], [0], [0], [1], [0, 0, 1, 1], [], []>} : vector<8x64xbf16>, vector<64x32xbf16>, vector<8x32xf32> -> vector<8x32xf32>
    %c0_118 = arith.constant 0 : index
    %c0_119 = arith.constant 0 : index
    %c0_120 = arith.constant 0 : index
    %294 = vector.load %arg21[%c0_118, %c0_119, %c0_120] : memref<1x1x32xf32, #tpu.memory_space<vmem>>, vector<1x1x32xf32>
    %295 = vector.shape_cast %294 : vector<1x1x32xf32> to vector<1x32xf32>
    %296 = vector.broadcast %295 : vector<1x32xf32> to vector<8x32xf32>
    %297 = arith.addf %293, %296 : vector<8x32xf32>
    %298 = arith.addf %279, %297 : vector<8x32xf32>
    %c0_121 = arith.constant 0 : index
    %c0_122 = arith.constant 0 : index
    %c0_123 = arith.constant 0 : index
    %299 = vector.load %arg26[%c0_121, %c0_122, %c0_123] : memref<1x1x32xf32, #tpu.memory_space<vmem>>, vector<1x1x32xf32>
    %300 = vector.shape_cast %299 : vector<1x1x32xf32> to vector<1x32xf32>
    %c0_124 = arith.constant 0 : index
    %c0_125 = arith.constant 0 : index
    %c0_126 = arith.constant 0 : index
    %301 = vector.load %arg27[%c0_124, %c0_125, %c0_126] : memref<1x1x32xf32, #tpu.memory_space<vmem>>, vector<1x1x32xf32>
    %302 = vector.shape_cast %301 : vector<1x1x32xf32> to vector<1x32xf32>
    %cst_127 = arith.constant dense<0.000000e+00> : vector<8xf32>
    %303 = vector.multi_reduction <add>, %298, %cst_127 [1] : vector<8x32xf32> to vector<8xf32>
    %304 = vector.shape_cast %303 : vector<8xf32> to vector<8x1xf32>
    %cst_128 = arith.constant 3.200000e+01 : f32
    %305 = vector.broadcast %cst_128 : f32 to vector<8x1xf32>
    %306 = arith.divf %304, %305 : vector<8x1xf32>
    %307 = vector.broadcast %306 : vector<8x1xf32> to vector<8x32xf32>
    %308 = arith.subf %298, %307 : vector<8x32xf32>
    %309 = arith.mulf %308, %308 : vector<8x32xf32>
    %cst_129 = arith.constant dense<0.000000e+00> : vector<8xf32>
    %310 = vector.multi_reduction <add>, %309, %cst_129 [1] : vector<8x32xf32> to vector<8xf32>
    %311 = vector.shape_cast %310 : vector<8xf32> to vector<8x1xf32>
    %cst_130 = arith.constant 3.200000e+01 : f32
    %312 = vector.broadcast %cst_130 : f32 to vector<8x1xf32>
    %313 = arith.divf %311, %312 : vector<8x1xf32>
    %314 = vector.broadcast %306 : vector<8x1xf32> to vector<8x32xf32>
    %315 = arith.subf %298, %314 : vector<8x32xf32>
    %cst_131 = arith.constant 9.99999974E-6 : f32
    %316 = vector.broadcast %cst_131 : f32 to vector<8x1xf32>
    %317 = arith.addf %313, %316 : vector<8x1xf32>
    %318 = math.rsqrt %317 : vector<8x1xf32>
    %319 = vector.broadcast %318 : vector<8x1xf32> to vector<8x32xf32>
    %320 = arith.mulf %315, %319 : vector<8x32xf32>
    %321 = vector.broadcast %300 : vector<1x32xf32> to vector<8x32xf32>
    %322 = arith.mulf %320, %321 : vector<8x32xf32>
    %323 = vector.broadcast %302 : vector<1x32xf32> to vector<8x32xf32>
    %324 = arith.addf %322, %323 : vector<8x32xf32>
    %cst_132 = arith.constant 0.000000e+00 : f32
    %325 = vector.broadcast %cst_132 : f32 to vector<8x32xf32>
    %326 = arith.maximumf %324, %325 : vector<8x32xf32>
    %c0_133 = arith.constant 0 : index
    %c0_134 = arith.constant 0 : index
    %327 = vector.load %arg29[%c0_133, %c0_134] : memref<8x32xf32, #tpu.memory_space<vmem>>, vector<8x32xf32>
    tpu.vector_store %arg29[%c0_133, %c0_134], %326 {strides = array<i32>} : memref<8x32xf32, #tpu.memory_space<vmem>>, vector<8x32xf32>,
    %c1_i32 = arith.constant 1 : i32
    %328 = arith.cmpi eq, %arg1, %c1_i32 : i32
    %329 = arith.extui %328 : i1 to i32
    %c0_i32_135 = arith.constant 0 : i32
    %330 = arith.cmpi ne, %329, %c0_i32_135 : i32
    scf.if %330 {
      %c0_136 = arith.constant 0 : index
      %c0_137 = arith.constant 0 : index
      %c0_138 = arith.constant 0 : index
      %331 = vector.load %arg28[%c0_136, %c0_137, %c0_138] : memref<1x8x32xf32, #tpu.memory_space<vmem>>, vector<1x8x32xf32>
      %332 = vector.shape_cast %331 : vector<1x8x32xf32> to vector<8x32xf32>
      %333 = vector.shape_cast %326 : vector<8x32xf32> to vector<1x8x32xf32>
      tpu.vector_store %arg28[%c0_136, %c0_137, %c0_138], %333 {strides = array<i32>} : memref<1x8x32xf32, #tpu.memory_space<vmem>>, vector<1x8x32xf32>,
    } else {
    }
    return
  }
  func.func @transform_0(%arg0: i32, %arg1: i32) -> (i32, i32, i32) {
    %c0_i32 = arith.constant 0 : i32
    %c0_i32_0 = arith.constant 0 : i32
    %c0_i32_1 = arith.constant 0 : i32
    return %arg0, %c0_i32, %c0_i32_0 : i32, i32, i32
  }
  func.func @transform_1(%arg0: i32, %arg1: i32) -> (i32, i32, i32) {
    %c0_i32 = arith.constant 0 : i32
    %c0_i32_0 = arith.constant 0 : i32
    %c0_i32_1 = arith.constant 0 : i32
    return %arg0, %c0_i32, %c0_i32_0 : i32, i32, i32
  }
  func.func @transform_2(%arg0: i32, %arg1: i32) -> (i32, i32) {
    %c0_i32 = arith.constant 0 : i32
    %c0_i32_0 = arith.constant 0 : i32
    %c0_i32_1 = arith.constant 0 : i32
    return %c0_i32, %c0_i32_0 : i32, i32
  }
  func.func @transform_3(%arg0: i32, %arg1: i32) -> (i32, i32) {
    %c0_i32 = arith.constant 0 : i32
    %c0_i32_0 = arith.constant 0 : i32
    %c0_i32_1 = arith.constant 0 : i32
    return %c0_i32, %c0_i32_0 : i32, i32
  }
  func.func @transform_4(%arg0: i32, %arg1: i32) -> (i32, i32, i32) {
    %c0_i32 = arith.constant 0 : i32
    %c0_i32_0 = arith.constant 0 : i32
    %c0_i32_1 = arith.constant 0 : i32
    return %arg1, %c0_i32, %c0_i32_0 : i32, i32, i32
  }
  func.func @transform_5(%arg0: i32, %arg1: i32) -> (i32, i32, i32) {
    %c0_i32 = arith.constant 0 : i32
    %c0_i32_0 = arith.constant 0 : i32
    %c0_i32_1 = arith.constant 0 : i32
    return %arg1, %c0_i32, %c0_i32_0 : i32, i32, i32
  }
  func.func @transform_6(%arg0: i32, %arg1: i32) -> (i32, i32, i32) {
    %c0_i32 = arith.constant 0 : i32
    %c0_i32_0 = arith.constant 0 : i32
    %c0_i32_1 = arith.constant 0 : i32
    return %arg1, %c0_i32, %c0_i32_0 : i32, i32, i32
  }
  func.func @transform_7(%arg0: i32, %arg1: i32) -> (i32, i32, i32) {
    %c0_i32 = arith.constant 0 : i32
    %c0_i32_0 = arith.constant 0 : i32
    %c0_i32_1 = arith.constant 0 : i32
    return %arg1, %c0_i32, %c0_i32_0 : i32, i32, i32
  }
  func.func @transform_8(%arg0: i32, %arg1: i32) -> (i32, i32, i32) {
    %c0_i32 = arith.constant 0 : i32
    %c0_i32_0 = arith.constant 0 : i32
    %c0_i32_1 = arith.constant 0 : i32
    return %arg1, %c0_i32, %c0_i32_0 : i32, i32, i32
  }
  func.func @transform_9(%arg0: i32, %arg1: i32) -> (i32, i32, i32) {
    %c0_i32 = arith.constant 0 : i32
    %c0_i32_0 = arith.constant 0 : i32
    %c0_i32_1 = arith.constant 0 : i32
    return %arg1, %c0_i32, %c0_i32_0 : i32, i32, i32
  }
  func.func @transform_10(%arg0: i32, %arg1: i32) -> (i32, i32, i32) {
    %c0_i32 = arith.constant 0 : i32
    %c0_i32_0 = arith.constant 0 : i32
    %c0_i32_1 = arith.constant 0 : i32
    return %arg1, %c0_i32, %c0_i32_0 : i32, i32, i32
  }
  func.func @transform_11(%arg0: i32, %arg1: i32) -> (i32, i32, i32) {
    %c0_i32 = arith.constant 0 : i32
    %c0_i32_0 = arith.constant 0 : i32
    %c0_i32_1 = arith.constant 0 : i32
    return %arg1, %c0_i32, %c0_i32_0 : i32, i32, i32
  }
  func.func @transform_12(%arg0: i32, %arg1: i32) -> (i32, i32, i32) {
    %c0_i32 = arith.constant 0 : i32
    %c0_i32_0 = arith.constant 0 : i32
    %c0_i32_1 = arith.constant 0 : i32
    return %arg1, %c0_i32, %c0_i32_0 : i32, i32, i32
  }
  func.func @transform_13(%arg0: i32, %arg1: i32) -> (i32, i32, i32) {
    %c0_i32 = arith.constant 0 : i32
    %c0_i32_0 = arith.constant 0 : i32
    %c0_i32_1 = arith.constant 0 : i32
    return %arg1, %c0_i32, %c0_i32_0 : i32, i32, i32
  }
  func.func @transform_14(%arg0: i32, %arg1: i32) -> (i32, i32, i32) {
    %c0_i32 = arith.constant 0 : i32
    %c0_i32_0 = arith.constant 0 : i32
    %c0_i32_1 = arith.constant 0 : i32
    return %arg1, %c0_i32, %c0_i32_0 : i32, i32, i32
  }
  func.func @transform_15(%arg0: i32, %arg1: i32) -> (i32, i32, i32) {
    %c0_i32 = arith.constant 0 : i32
    %c0_i32_0 = arith.constant 0 : i32
    %c0_i32_1 = arith.constant 0 : i32
    return %arg1, %c0_i32, %c0_i32_0 : i32, i32, i32
  }
  func.func @transform_16(%arg0: i32, %arg1: i32) -> (i32, i32, i32) {
    %c0_i32 = arith.constant 0 : i32
    %c0_i32_0 = arith.constant 0 : i32
    %c0_i32_1 = arith.constant 0 : i32
    return %arg1, %c0_i32, %c0_i32_0 : i32, i32, i32
  }
  func.func @transform_17(%arg0: i32, %arg1: i32) -> (i32, i32, i32) {
    %c0_i32 = arith.constant 0 : i32
    %c0_i32_0 = arith.constant 0 : i32
    %c0_i32_1 = arith.constant 0 : i32
    return %arg1, %c0_i32, %c0_i32_0 : i32, i32, i32
  }
  func.func @transform_18(%arg0: i32, %arg1: i32) -> (i32, i32, i32) {
    %c0_i32 = arith.constant 0 : i32
    %c0_i32_0 = arith.constant 0 : i32
    %c0_i32_1 = arith.constant 0 : i32
    return %arg1, %c0_i32, %c0_i32_0 : i32, i32, i32
  }
  func.func @transform_19(%arg0: i32, %arg1: i32) -> (i32, i32, i32) {
    %c0_i32 = arith.constant 0 : i32
    %c0_i32_0 = arith.constant 0 : i32
    %c0_i32_1 = arith.constant 0 : i32
    return %arg1, %c0_i32, %c0_i32_0 : i32, i32, i32
  }
  func.func @transform_20(%arg0: i32, %arg1: i32) -> (i32, i32, i32) {
    %c0_i32 = arith.constant 0 : i32
    %c0_i32_0 = arith.constant 0 : i32
    %c0_i32_1 = arith.constant 0 : i32
    return %arg1, %c0_i32, %c0_i32_0 : i32, i32, i32
  }
  func.func @transform_21(%arg0: i32, %arg1: i32) -> (i32, i32, i32) {
    %c0_i32 = arith.constant 0 : i32
    %c0_i32_0 = arith.constant 0 : i32
    %c0_i32_1 = arith.constant 0 : i32
    return %arg1, %c0_i32, %c0_i32_0 : i32, i32, i32
  }
  func.func @transform_22(%arg0: i32, %arg1: i32) -> (i32, i32, i32) {
    %c0_i32 = arith.constant 0 : i32
    %c0_i32_0 = arith.constant 0 : i32
    %c0_i32_1 = arith.constant 0 : i32
    return %arg1, %c0_i32, %c0_i32_0 : i32, i32, i32
  }
  func.func @transform_23(%arg0: i32, %arg1: i32) -> (i32, i32, i32) {
    %c0_i32 = arith.constant 0 : i32
    %c0_i32_0 = arith.constant 0 : i32
    %c0_i32_1 = arith.constant 0 : i32
    return %arg1, %c0_i32, %c0_i32_0 : i32, i32, i32
  }
  func.func @transform_24(%arg0: i32, %arg1: i32) -> (i32, i32, i32) {
    %c0_i32 = arith.constant 0 : i32
    %c0_i32_0 = arith.constant 0 : i32
    %c0_i32_1 = arith.constant 0 : i32
    return %arg1, %c0_i32, %c0_i32_0 : i32, i32, i32
  }
  func.func @transform_25(%arg0: i32, %arg1: i32) -> (i32, i32, i32) {
    %c0_i32 = arith.constant 0 : i32
    %c0_i32_0 = arith.constant 0 : i32
    %c0_i32_1 = arith.constant 0 : i32
    return %arg1, %c0_i32, %c0_i32_0 : i32, i32, i32
  }
  func.func @transform_26(%arg0: i32, %arg1: i32) -> (i32, i32, i32) {
    %c0_i32 = arith.constant 0 : i32
    %c0_i32_0 = arith.constant 0 : i32
    %c0_i32_1 = arith.constant 0 : i32
    return %arg0, %c0_i32, %c0_i32_0 : i32, i32, i32
  }
}

</mosaic_0001>

<llo_original>
// kernel: tpu_custom_call.1
$region0: #{tpu_custom_call.1}
  #allocation0 [shape = 'u32[]', space=smem, size = 0x4, offset = 0x4, fixed_abs, tag = 'smem constant byte address 0x4 - core index']
  #allocation1 [shape = 'u32[144,128]{1,0:T(1,128)}', space=vmem, size = 0x12000, scoped, tag = 'internal scratch']
  #allocation2 [shape = 'f32[8,32]{1,0:T(8,128)}', space=vmem, size = 0x1000, scoped, tag = 'scratch operand']
  %s0 = inlined_call_operand.hbm [shape: f32[2,8,32], index: 0, kind: input, shape index: {}]
  %s1 = inlined_call_operand.hbm [shape: f32[2,8,32], index: 1, kind: input, shape index: {}]
  %s2 = inlined_call_operand.hbm [shape: f32[8,8], index: 2, kind: input, shape index: {}]
  %s3 = inlined_call_operand.hbm [shape: f32[8,8], index: 3, kind: input, shape index: {}]
  %s4 = inlined_call_operand.vmem [shape: bf16[2,32,32], index: 4, kind: input, shape index: {}]
  %s5 = inlined_call_operand.hbm [shape: f32[2,1,32], index: 5, kind: input, shape index: {}]
  %s6 = inlined_call_operand.vmem [shape: bf16[2,32,64], index: 6, kind: input, shape index: {}]
  %s7 = inlined_call_operand.hbm [shape: f32[2,1,64], index: 7, kind: input, shape index: {}]
  %s8 = inlined_call_operand.vmem [shape: bf16[2,32,32], index: 8, kind: input, shape index: {}]
  %s9 = inlined_call_operand.hbm [shape: f32[2,1,32], index: 9, kind: input, shape index: {}]
  %s10 = inlined_call_operand.vmem [shape: bf16[2,32,32], index: 10, kind: input, shape index: {}]
  %s11 = inlined_call_operand.hbm [shape: f32[2,1,32], index: 11, kind: input, shape index: {}]
  %s12 = inlined_call_operand.hbm [shape: bf16[2,32,64], index: 12, kind: input, shape index: {}]
  %s13 = inlined_call_operand.hbm [shape: f32[2,1,64], index: 13, kind: input, shape index: {}]
  %s14 = inlined_call_operand.hbm [shape: bf16[2,32,32], index: 14, kind: input, shape index: {}]
  %s15 = inlined_call_operand.hbm [shape: f32[2,1,32], index: 15, kind: input, shape index: {}]
  %s16 = inlined_call_operand.hbm [shape: bf16[2,32,64], index: 16, kind: input, shape index: {}]
  %s17 = inlined_call_operand.hbm [shape: f32[2,1,64], index: 17, kind: input, shape index: {}]
  %s18 = inlined_call_operand.vmem [shape: bf16[2,64,32], index: 18, kind: input, shape index: {}]
  %s19 = inlined_call_operand.vmem [shape: f32[2,1,32], index: 19, kind: input, shape index: {}]
  %s20 = inlined_call_operand.vmem [shape: f32[2,1,32], index: 20, kind: input, shape index: {}]
  %s21 = inlined_call_operand.vmem [shape: f32[2,1,32], index: 21, kind: input, shape index: {}]
  %s22 = inlined_call_operand.vmem [shape: f32[2,1,32], index: 22, kind: input, shape index: {}]
  %s23 = inlined_call_operand.vmem [shape: f32[2,1,32], index: 23, kind: input, shape index: {}]
  %s24 = inlined_call_operand.vmem [shape: f32[2,1,32], index: 24, kind: input, shape index: {}]
  %s25 = inlined_call_operand.vmem [shape: f32[2,1,32], index: 25, kind: input, shape index: {}]
  %s26 = inlined_call_operand.hbm [shape: f32[2,8,32], index: 26, kind: output, shape index: {}]
  %s27 = sld [smem:[#allocation0]]
  $region201: #{tpu_custom_call.1} parent=0
    _
  %s29 = ssub.s32 1, %s27
  %s30 = scalar_select 0, %s29, %s27
  $region1: #{tpu_custom_call.1} parent=0
    #allocation3 [shape = 'u8[8192]{0}', space=vmem, size = 0x2000, scoped, tag = 'input window, operand 0']
    #allocation4 [shape = 's32[2]{0}', space=sflag, size = 0x8, scoped, tag = 'scoped memory for tpu_custom_call.1']
    #allocation5 [shape = 's32[2]{0}', space=sflag, size = 0x8, scoped, tag = 'scoped memory for tpu_custom_call.1']
    #allocation6 [shape = 'u8[8192]{0}', space=vmem, size = 0x2000, scoped, tag = 'input window, operand 1']
    #allocation7 [shape = 's32[2]{0}', space=sflag, size = 0x8, scoped, tag = 'scoped memory for tpu_custom_call.1']
    #allocation8 [shape = 'u8[4096]{0}', space=vmem, size = 0x1000, scoped, tag = 'input window, operand 2, single buffered']
    #allocation9 [shape = 'u8[4096]{0}', space=vmem, size = 0x1000, scoped, tag = 'input window, operand 3, single buffered']
    #allocation10 [shape = 's32[1]{0}', space=sflag, size = 0x4, scoped, tag = 'scoped memory for tpu_custom_call.1']
    #allocation11 [shape = 'u8[1024]{0}', space=vmem, size = 0x400, scoped, tag = 'input window, operand 5']
    #allocation12 [shape = 'u8[1024]{0}', space=vmem, size = 0x400, scoped, tag = 'input window, operand 7']
    #allocation13 [shape = 'u8[1024]{0}', space=vmem, size = 0x400, scoped, tag = 'input window, operand 9']
    #allocation14 [shape = 'u8[1024]{0}', space=vmem, size = 0x400, scoped, tag = 'input window, operand 11']
    #allocation15 [shape = 'u8[16384]{0}', space=vmem, size = 0x4000, scoped, tag = 'input window, operand 12']
    #allocation16 [shape = 'u8[1024]{0}', space=vmem, size = 0x400, scoped, tag = 'input window, operand 13']
    #allocation17 [shape = 'u8[16384]{0}', space=vmem, size = 0x4000, scoped, tag = 'input window, operand 14']
    #allocation18 [shape = 'u8[1024]{0}', space=vmem, size = 0x400, scoped, tag = 'input window, operand 15']
    #allocation19 [shape = 'u8[16384]{0}', space=vmem, size = 0x4000, scoped, tag = 'input window, operand 16']
    #allocation20 [shape = 'u8[1024]{0}', space=vmem, size = 0x400, scoped, tag = 'input window, operand 17']
    #allocation21 [shape = 'u8[8192]{0}', space=vmem, size = 0x2000, scoped, tag = 'output window, operand 0']
    %31 = vsyncpa [#allocation4], 0
    %s32 = scalar_lea.sflag [#allocation4], 1
    %33 = vsyncpa %s32, 0
    %34 = vsyncpa [#allocation7], 0
    %s35 = scalar_lea.sflag [#allocation7], 1
    %36 = vsyncpa %s35, 0
    %37 = vsyncpa [#allocation10], 0
    %38 = vsyncpa [#allocation5], 0
    %s39 = scalar_lea.sflag [#allocation5], 1
    %40 = vsyncpa %s39, 0
    loop: start=0, step=1, limit=6
    $region2: #{tpu_custom_call.1} parent=1 // loop_pre_header
      _
    $region3: #{tpu_custom_call.1} parent=1 // loop_header
      %s42 = sphi 0, %s46
      %p43 = scmp.ge.s32.totalorder %s42, 6
      %s49 = sphi 0, %s61
      %s50 = sphi 0, %s57
      %s51 = sphi 0, %s49
      %s52 = sphi 0, %s50
      %s53 = sphi 0, %s51
      %s54 = sphi 0, %s52
      %s64 = sphi 0, %s66
      %s67 = sphi 0, %s64
      %s68 = sphi 0, %s67
      %s84 = sphi 0, %s68
      %s90 = sphi 0, %s92
      %s93 = sphi 0, %s90
      %s94 = sphi 0, %s93
      %s110 = sphi 0, %s94
      %s114 = sphi 0, %s114
      %s116 = sphi 0, %s114
      %s117 = sphi 0, %s116
      %s131 = sphi 0, %s117
      %s135 = sphi 0, %s135
      %s137 = sphi 0, %s135
      %s138 = sphi 0, %s137
      %s152 = sphi 0, %s138
      %s158 = sphi 0, %s160
      %s161 = sphi 0, %s158
      %s162 = sphi 0, %s161
      %s178 = sphi 0, %s162
      %s184 = sphi 0, %s186
      %s187 = sphi 0, %s184
      %s188 = sphi 0, %s187
      %s204 = sphi 0, %s188
      %s210 = sphi 0, %s212
      %s213 = sphi 0, %s210
      %s214 = sphi 0, %s213
      %s230 = sphi 0, %s214
      %s236 = sphi 0, %s238
      %s239 = sphi 0, %s236
      %s240 = sphi 0, %s239
      %s256 = sphi 0, %s240
      %s262 = sphi 0, %s264
      %s265 = sphi 0, %s262
      %s266 = sphi 0, %s265
      %s282 = sphi 0, %s266
      %s288 = sphi 0, %s290
      %s291 = sphi 0, %s288
      %s292 = sphi 0, %s291
      %s308 = sphi 0, %s292
      %s314 = sphi 0, %s316
      %s317 = sphi 0, %s314
      %s318 = sphi 0, %s317
      %s334 = sphi 0, %s318
      %s340 = sphi 0, %s342
      %s343 = sphi 0, %s340
      %s344 = sphi 0, %s343
      %s360 = sphi 0, %s344
      %s366 = sphi 0, %s368
      %s369 = sphi 0, %s366
      %s370 = sphi 0, %s369
      %s386 = sphi 0, %s370
      %s392 = sphi 0, %s394
      %s395 = sphi 0, %s392
      %s396 = sphi 0, %s395
      %s412 = sphi 0, %s396
      %s418 = sphi 0, %s420
      %s421 = sphi 0, %s418
      %s422 = sphi 0, %s421
      %s438 = sphi 0, %s422
      %s444 = sphi 0, %s446
      %s447 = sphi 0, %s444
      %s448 = sphi 0, %s447
      %s464 = sphi 0, %s448
      %s470 = sphi 0, %s472
      %s473 = sphi 0, %s470
      %s474 = sphi 0, %s473
      %s490 = sphi 0, %s474
      %s496 = sphi 0, %s498
      %s499 = sphi 0, %s496
      %s500 = sphi 0, %s499
      %s516 = sphi 0, %s500
      %s522 = sphi 0, %s524
      %s525 = sphi 0, %s522
      %s526 = sphi 0, %s525
      %s542 = sphi 0, %s526
      %s548 = sphi 0, %s550
      %s551 = sphi 0, %s548
      %s552 = sphi 0, %s551
      %s568 = sphi 0, %s552
      %s574 = sphi 0, %s576
      %s577 = sphi 0, %s574
      %s578 = sphi 0, %s577
      %s594 = sphi 0, %s578
      %s600 = sphi 0, %s602
      %s603 = sphi 0, %s600
      %s604 = sphi 0, %s603
      %s620 = sphi 0, %s604
      %s626 = sphi 0, %s628
      %s629 = sphi 0, %s626
      %s630 = sphi 0, %s629
      %s646 = sphi 0, %s630
      %s652 = sphi 0, %s654
      %s655 = sphi 0, %s652
      %s656 = sphi 0, %s655
      %s672 = sphi 0, %s656
      %s678 = sphi 0, %s680
      %s681 = sphi 0, %s678
      %s682 = sphi 0, %s681
      %s698 = sphi 0, %s682
      %s704 = sphi 0, %s706
      %s707 = sphi 0, %s704
      %s708 = sphi 0, %s707
      %s724 = sphi 0, %s708
      %s730 = sphi 0, %s732
      %s733 = sphi 0, %s730
      %s734 = sphi 0, %s733
      %s750 = sphi 0, %s734
    $region4: #{tpu_custom_call.1} parent=1 // loop_header_branch
      %45 = sbr.rel (%p43) target = $region8
    $region5: #{tpu_custom_call.1} parent=1 // loop_body
      %s47 = ssub.s32 %s42, 1
      %s48 = ssub.s32 %s42, 2
      %s55 = sadd.s32 1, %s50
      %p56 = scmp.ge.s32.totalorder %s55, 2
      %s57 = scalar_select %p56, 0, %s55
      %s58 = sadd.s32 1, %s49
      %s59 = scalar_select %p56, %s58, %s49
      %p60 = scmp.ge.s32.totalorder %s59, 2
      %s61 = scalar_select %p60, 0, %s59
      %s62 = ssub.s32 %s49, %s61
      %p63 = scmp.eq.s32.totalorder %s62, 0
      %s65 = sadd.s32 %s64, 1
      %s66 = scalar_select %p63, %s64, %s65
      %p69 = pneg %p63
      %p70 = scmp.eq.s32.totalorder %s42, 3
      %p71 = por %p69, %p70
      %p72 = scmp.ne.s32.totalorder %s64, %s67
      %p73 = scmp.eq.s32.totalorder %s42, 0
      %p74 = por %p72, %p73
      %p75 = scmp.ne.s32.totalorder %s64, %s67
      %p76 = scmp.eq.s32.totalorder %s47, 3
      %p77 = por %p75, %p76
      %p78 = scmp.ne.s32.totalorder %s67, %s68
      %p79 = scmp.eq.s32.totalorder %s47, 0
      %p80 = por %p78, %p79
      %p81 = scmp.ne.s32.totalorder %s67, %s68
      %p82 = scmp.eq.s32.totalorder %s48, 3
      %p83 = por %p81, %p82
      %p85 = scmp.ne.s32.totalorder %s68, %s84
      %p86 = scmp.eq.s32.totalorder %s48, 0
      %p87 = por %p85, %p86
      %s88 = ssub.s32 %s49, %s61
      %p89 = scmp.eq.s32.totalorder %s88, 0
      %s91 = sadd.s32 %s90, 1
      %s92 = scalar_select %p89, %s90, %s91
      %p95 = pneg %p89
      %p96 = scmp.eq.s32.totalorder %s42, 3
      %p97 = por %p95, %p96
      %p98 = scmp.ne.s32.totalorder %s90, %s93
      %p99 = scmp.eq.s32.totalorder %s42, 0
      %p100 = por %p98, %p99
      %p101 = scmp.ne.s32.totalorder %s90, %s93
      %p102 = scmp.eq.s32.totalorder %s47, 3
      %p103 = por %p101, %p102
      %p104 = scmp.ne.s32.totalorder %s93, %s94
      %p105 = scmp.eq.s32.totalorder %s47, 0
      %p106 = por %p104, %p105
      %p107 = scmp.ne.s32.totalorder %s93, %s94
      %p108 = scmp.eq.s32.totalorder %s48, 3
      %p109 = por %p107, %p108
      %p111 = scmp.ne.s32.totalorder %s94, %s110
      %p112 = scmp.eq.s32.totalorder %s48, 0
      %p113 = por %p111, %p112
      %s115 = sadd.s32 %s114, 1
      %p118 = scmp.eq.s32.totalorder %s42, 3
      %p119 = scmp.ne.s32.totalorder %s114, %s116
      %p120 = scmp.eq.s32.totalorder %s42, 0
      %p121 = por %p119, %p120
      %p122 = scmp.ne.s32.totalorder %s114, %s116
      %p123 = scmp.eq.s32.totalorder %s47, 3
      %p124 = por %p122, %p123
      %p125 = scmp.ne.s32.totalorder %s116, %s117
      %p126 = scmp.eq.s32.totalorder %s47, 0
      %p127 = por %p125, %p126
      %p128 = scmp.ne.s32.totalorder %s116, %s117
      %p129 = scmp.eq.s32.totalorder %s48, 3
      %p130 = por %p128, %p129
      %p132 = scmp.ne.s32.totalorder %s117, %s131
      %p133 = scmp.eq.s32.totalorder %s48, 0
      %p134 = por %p132, %p133
      %s136 = sadd.s32 %s135, 1
      %p139 = scmp.eq.s32.totalorder %s42, 3
      %p140 = scmp.ne.s32.totalorder %s135, %s137
      %p141 = scmp.eq.s32.totalorder %s42, 0
      %p142 = por %p140, %p141
      %p143 = scmp.ne.s32.totalorder %s135, %s137
      %p144 = scmp.eq.s32.totalorder %s47, 3
      %p145 = por %p143, %p144
      %p146 = scmp.ne.s32.totalorder %s137, %s138
      %p147 = scmp.eq.s32.totalorder %s47, 0
      %p148 = por %p146, %p147
      %p149 = scmp.ne.s32.totalorder %s137, %s138
      %p150 = scmp.eq.s32.totalorder %s48, 3
      %p151 = por %p149, %p150
      %p153 = scmp.ne.s32.totalorder %s138, %s152
      %p154 = scmp.eq.s32.totalorder %s48, 0
      %p155 = por %p153, %p154
      %s156 = ssub.s32 %s50, %s57
      %p157 = scmp.eq.s32.totalorder %s156, 0
      %s159 = sadd.s32 %s158, 1
      %s160 = scalar_select %p157, %s158, %s159
      %p163 = pneg %p157
      %p164 = scmp.eq.s32.totalorder %s42, 3
      %p165 = por %p163, %p164
      %p166 = scmp.ne.s32.totalorder %s158, %s161
      %p167 = scmp.eq.s32.totalorder %s42, 0
      %p168 = por %p166, %p167
      %p169 = scmp.ne.s32.totalorder %s158, %s161
      %p170 = scmp.eq.s32.totalorder %s47, 3
      %p171 = por %p169, %p170
      %p172 = scmp.ne.s32.totalorder %s161, %s162
      %p173 = scmp.eq.s32.totalorder %s47, 0
      %p174 = por %p172, %p173
      %p175 = scmp.ne.s32.totalorder %s161, %s162
      %p176 = scmp.eq.s32.totalorder %s48, 3
      %p177 = por %p175, %p176
      %p179 = scmp.ne.s32.totalorder %s162, %s178
      %p180 = scmp.eq.s32.totalorder %s48, 0
      %p181 = por %p179, %p180
      %s182 = ssub.s32 %s50, %s57
      %p183 = scmp.eq.s32.totalorder %s182, 0
      %s185 = sadd.s32 %s184, 1
      %s186 = scalar_select %p183, %s184, %s185
      %p189 = pneg %p183
      %p190 = scmp.eq.s32.totalorder %s42, 3
      %p191 = por %p189, %p190
      %p192 = scmp.ne.s32.totalorder %s184, %s187
      %p193 = scmp.eq.s32.totalorder %s42, 0
      %p194 = por %p192, %p193
      %p195 = scmp.ne.s32.totalorder %s184, %s187
      %p196 = scmp.eq.s32.totalorder %s47, 3
      %p197 = por %p195, %p196
      %p198 = scmp.ne.s32.totalorder %s187, %s188
      %p199 = scmp.eq.s32.totalorder %s47, 0
      %p200 = por %p198, %p199
      %p201 = scmp.ne.s32.totalorder %s187, %s188
      %p202 = scmp.eq.s32.totalorder %s48, 3
      %p203 = por %p201, %p202
      %p205 = scmp.ne.s32.totalorder %s188, %s204
      %p206 = scmp.eq.s32.totalorder %s48, 0
      %p207 = por %p205, %p206
      %s208 = ssub.s32 %s50, %s57
      %p209 = scmp.eq.s32.totalorder %s208, 0
      %s211 = sadd.s32 %s210, 1
      %s212 = scalar_select %p209, %s210, %s211
      %p215 = pneg %p209
      %p216 = scmp.eq.s32.totalorder %s42, 3
      %p217 = por %p215, %p216
      %p218 = scmp.ne.s32.totalorder %s210, %s213
      %p219 = scmp.eq.s32.totalorder %s42, 0
      %p220 = por %p218, %p219
      %p221 = scmp.ne.s32.totalorder %s210, %s213
      %p222 = scmp.eq.s32.totalorder %s47, 3
      %p223 = por %p221, %p222
      %p224 = scmp.ne.s32.totalorder %s213, %s214
      %p225 = scmp.eq.s32.totalorder %s47, 0
      %p226 = por %p224, %p225
      %p227 = scmp.ne.s32.totalorder %s213, %s214
      %p228 = scmp.eq.s32.totalorder %s48, 3
      %p229 = por %p227, %p228
      %p231 = scmp.ne.s32.totalorder %s214, %s230
      %p232 = scmp.eq.s32.totalorder %s48, 0
      %p233 = por %p231, %p232
      %s234 = ssub.s32 %s50, %s57
      %p235 = scmp.eq.s32.totalorder %s234, 0
      %s237 = sadd.s32 %s236, 1
      %s238 = scalar_select %p235, %s236, %s237
      %p241 = pneg %p235
      %p242 = scmp.eq.s32.totalorder %s42, 3
      %p243 = por %p241, %p242
      %p244 = scmp.ne.s32.totalorder %s236, %s239
      %p245 = scmp.eq.s32.totalorder %s42, 0
      %p246 = por %p244, %p245
      %p247 = scmp.ne.s32.totalorder %s236, %s239
      %p248 = scmp.eq.s32.totalorder %s47, 3
      %p249 = por %p247, %p248
      %p250 = scmp.ne.s32.totalorder %s239, %s240
      %p251 = scmp.eq.s32.totalorder %s47, 0
      %p252 = por %p250, %p251
      %p253 = scmp.ne.s32.totalorder %s239, %s240
      %p254 = scmp.eq.s32.totalorder %s48, 3
      %p255 = por %p253, %p254
      %p257 = scmp.ne.s32.totalorder %s240, %s256
      %p258 = scmp.eq.s32.totalorder %s48, 0
      %p259 = por %p257, %p258
      %s260 = ssub.s32 %s50, %s57
      %p261 = scmp.eq.s32.totalorder %s260, 0
      %s263 = sadd.s32 %s262, 1
      %s264 = scalar_select %p261, %s262, %s263
      %p267 = pneg %p261
      %p268 = scmp.eq.s32.totalorder %s42, 3
      %p269 = por %p267, %p268
      %p270 = scmp.ne.s32.totalorder %s262, %s265
      %p271 = scmp.eq.s32.totalorder %s42, 0
      %p272 = por %p270, %p271
      %p273 = scmp.ne.s32.totalorder %s262, %s265
      %p274 = scmp.eq.s32.totalorder %s47, 3
      %p275 = por %p273, %p274
      %p276 = scmp.ne.s32.totalorder %s265, %s266
      %p277 = scmp.eq.s32.totalorder %s47, 0
      %p278 = por %p276, %p277
      %p279 = scmp.ne.s32.totalorder %s265, %s266
      %p280 = scmp.eq.s32.totalorder %s48, 3
      %p281 = por %p279, %p280
      %p283 = scmp.ne.s32.totalorder %s266, %s282
      %p284 = scmp.eq.s32.totalorder %s48, 0
      %p285 = por %p283, %p284
      %s286 = ssub.s32 %s50, %s57
      %p287 = scmp.eq.s32.totalorder %s286, 0
      %s289 = sadd.s32 %s288, 1
      %s290 = scalar_select %p287, %s288, %s289
      %p293 = pneg %p287
      %p294 = scmp.eq.s32.totalorder %s42, 3
      %p295 = por %p293, %p294
      %p296 = scmp.ne.s32.totalorder %s288, %s291
      %p297 = scmp.eq.s32.totalorder %s42, 0
      %p298 = por %p296, %p297
      %p299 = scmp.ne.s32.totalorder %s288, %s291
      %p300 = scmp.eq.s32.totalorder %s47, 3
      %p301 = por %p299, %p300
      %p302 = scmp.ne.s32.totalorder %s291, %s292
      %p303 = scmp.eq.s32.totalorder %s47, 0
      %p304 = por %p302, %p303
      %p305 = scmp.ne.s32.totalorder %s291, %s292
      %p306 = scmp.eq.s32.totalorder %s48, 3
      %p307 = por %p305, %p306
      %p309 = scmp.ne.s32.totalorder %s292, %s308
      %p310 = scmp.eq.s32.totalorder %s48, 0
      %p311 = por %p309, %p310
      %s312 = ssub.s32 %s50, %s57
      %p313 = scmp.eq.s32.totalorder %s312, 0
      %s315 = sadd.s32 %s314, 1
      %s316 = scalar_select %p313, %s314, %s315
      %p319 = pneg %p313
      %p320 = scmp.eq.s32.totalorder %s42, 3
      %p321 = por %p319, %p320
      %p322 = scmp.ne.s32.totalorder %s314, %s317
      %p323 = scmp.eq.s32.totalorder %s42, 0
      %p324 = por %p322, %p323
      %p325 = scmp.ne.s32.totalorder %s314, %s317
      %p326 = scmp.eq.s32.totalorder %s47, 3
      %p327 = por %p325, %p326
      %p328 = scmp.ne.s32.totalorder %s317, %s318
      %p329 = scmp.eq.s32.totalorder %s47, 0
      %p330 = por %p328, %p329
      %p331 = scmp.ne.s32.totalorder %s317, %s318
      %p332 = scmp.eq.s32.totalorder %s48, 3
      %p333 = por %p331, %p332
      %p335 = scmp.ne.s32.totalorder %s318, %s334
      %p336 = scmp.eq.s32.totalorder %s48, 0
      %p337 = por %p335, %p336
      %s338 = ssub.s32 %s50, %s57
      %p339 = scmp.eq.s32.totalorder %s338, 0
      %s341 = sadd.s32 %s340, 1
      %s342 = scalar_select %p339, %s340, %s341
      %p345 = pneg %p339
      %p346 = scmp.eq.s32.totalorder %s42, 3
      %p347 = por %p345, %p346
      %p348 = scmp.ne.s32.totalorder %s340, %s343
      %p349 = scmp.eq.s32.totalorder %s42, 0
      %p350 = por %p348, %p349
      %p351 = scmp.ne.s32.totalorder %s340, %s343
      %p352 = scmp.eq.s32.totalorder %s47, 3
      %p353 = por %p351, %p352
      %p354 = scmp.ne.s32.totalorder %s343, %s344
      %p355 = scmp.eq.s32.totalorder %s47, 0
      %p356 = por %p354, %p355
      %p357 = scmp.ne.s32.totalorder %s343, %s344
      %p358 = scmp.eq.s32.totalorder %s48, 3
      %p359 = por %p357, %p358
      %p361 = scmp.ne.s32.totalorder %s344, %s360
      %p362 = scmp.eq.s32.totalorder %s48, 0
      %p363 = por %p361, %p362
      %s364 = ssub.s32 %s50, %s57
      %p365 = scmp.eq.s32.totalorder %s364, 0
      %s367 = sadd.s32 %s366, 1
      %s368 = scalar_select %p365, %s366, %s367
      %p371 = pneg %p365
      %p372 = scmp.eq.s32.totalorder %s42, 3
      %p373 = por %p371, %p372
      %p374 = scmp.ne.s32.totalorder %s366, %s369
      %p375 = scmp.eq.s32.totalorder %s42, 0
      %p376 = por %p374, %p375
      %p377 = scmp.ne.s32.totalorder %s366, %s369
      %p378 = scmp.eq.s32.totalorder %s47, 3
      %p379 = por %p377, %p378
      %p380 = scmp.ne.s32.totalorder %s369, %s370
      %p381 = scmp.eq.s32.totalorder %s47, 0
      %p382 = por %p380, %p381
      %p383 = scmp.ne.s32.totalorder %s369, %s370
      %p384 = scmp.eq.s32.totalorder %s48, 3
      %p385 = por %p383, %p384
      %p387 = scmp.ne.s32.totalorder %s370, %s386
      %p388 = scmp.eq.s32.totalorder %s48, 0
      %p389 = por %p387, %p388
      %s390 = ssub.s32 %s50, %s57
      %p391 = scmp.eq.s32.totalorder %s390, 0
      %s393 = sadd.s32 %s392, 1
      %s394 = scalar_select %p391, %s392, %s393
      %p397 = pneg %p391
      %p398 = scmp.eq.s32.totalorder %s42, 3
      %p399 = por %p397, %p398
      %p400 = scmp.ne.s32.totalorder %s392, %s395
      %p401 = scmp.eq.s32.totalorder %s42, 0
      %p402 = por %p400, %p401
      %p403 = scmp.ne.s32.totalorder %s392, %s395
      %p404 = scmp.eq.s32.totalorder %s47, 3
      %p405 = por %p403, %p404
      %p406 = scmp.ne.s32.totalorder %s395, %s396
      %p407 = scmp.eq.s32.totalorder %s47, 0
      %p408 = por %p406, %p407
      %p409 = scmp.ne.s32.totalorder %s395, %s396
      %p410 = scmp.eq.s32.totalorder %s48, 3
      %p411 = por %p409, %p410
      %p413 = scmp.ne.s32.totalorder %s396, %s412
      %p414 = scmp.eq.s32.totalorder %s48, 0
      %p415 = por %p413, %p414
      %s416 = ssub.s32 %s50, %s57
      %p417 = scmp.eq.s32.totalorder %s416, 0
      %s419 = sadd.s32 %s418, 1
      %s420 = scalar_select %p417, %s418, %s419
      %p423 = pneg %p417
      %p424 = scmp.eq.s32.totalorder %s42, 3
      %p425 = por %p423, %p424
      %p426 = scmp.ne.s32.totalorder %s418, %s421
      %p427 = scmp.eq.s32.totalorder %s42, 0
      %p428 = por %p426, %p427
      %p429 = scmp.ne.s32.totalorder %s418, %s421
      %p430 = scmp.eq.s32.totalorder %s47, 3
      %p431 = por %p429, %p430
      %p432 = scmp.ne.s32.totalorder %s421, %s422
      %p433 = scmp.eq.s32.totalorder %s47, 0
      %p434 = por %p432, %p433
      %p435 = scmp.ne.s32.totalorder %s421, %s422
      %p436 = scmp.eq.s32.totalorder %s48, 3
      %p437 = por %p435, %p436
      %p439 = scmp.ne.s32.totalorder %s422, %s438
      %p440 = scmp.eq.s32.totalorder %s48, 0
      %p441 = por %p439, %p440
      %s442 = ssub.s32 %s50, %s57
      %p443 = scmp.eq.s32.totalorder %s442, 0
      %s445 = sadd.s32 %s444, 1
      %s446 = scalar_select %p443, %s444, %s445
      %p449 = pneg %p443
      %p450 = scmp.eq.s32.totalorder %s42, 3
      %p451 = por %p449, %p450
      %p452 = scmp.ne.s32.totalorder %s444, %s447
      %p453 = scmp.eq.s32.totalorder %s42, 0
      %p454 = por %p452, %p453
      %p455 = scmp.ne.s32.totalorder %s444, %s447
      %p456 = scmp.eq.s32.totalorder %s47, 3
      %p457 = por %p455, %p456
      %p458 = scmp.ne.s32.totalorder %s447, %s448
      %p459 = scmp.eq.s32.totalorder %s47, 0
      %p460 = por %p458, %p459
      %p461 = scmp.ne.s32.totalorder %s447, %s448
      %p462 = scmp.eq.s32.totalorder %s48, 3
      %p463 = por %p461, %p462
      %p465 = scmp.ne.s32.totalorder %s448, %s464
      %p466 = scmp.eq.s32.totalorder %s48, 0
      %p467 = por %p465, %p466
      %s468 = ssub.s32 %s50, %s57
      %p469 = scmp.eq.s32.totalorder %s468, 0
      %s471 = sadd.s32 %s470, 1
      %s472 = scalar_select %p469, %s470, %s471
      %p475 = pneg %p469
      %p476 = scmp.eq.s32.totalorder %s42, 3
      %p477 = por %p475, %p476
      %p478 = scmp.ne.s32.totalorder %s470, %s473
      %p479 = scmp.eq.s32.totalorder %s42, 0
      %p480 = por %p478, %p479
      %p481 = scmp.ne.s32.totalorder %s470, %s473
      %p482 = scmp.eq.s32.totalorder %s47, 3
      %p483 = por %p481, %p482
      %p484 = scmp.ne.s32.totalorder %s473, %s474
      %p485 = scmp.eq.s32.totalorder %s47, 0
      %p486 = por %p484, %p485
      %p487 = scmp.ne.s32.totalorder %s473, %s474
      %p488 = scmp.eq.s32.totalorder %s48, 3
      %p489 = por %p487, %p488
      %p491 = scmp.ne.s32.totalorder %s474, %s490
      %p492 = scmp.eq.s32.totalorder %s48, 0
      %p493 = por %p491, %p492
      %s494 = ssub.s32 %s50, %s57
      %p495 = scmp.eq.s32.totalorder %s494, 0
      %s497 = sadd.s32 %s496, 1
      %s498 = scalar_select %p495, %s496, %s497
      %p501 = pneg %p495
      %p502 = scmp.eq.s32.totalorder %s42, 3
      %p503 = por %p501, %p502
      %p504 = scmp.ne.s32.totalorder %s496, %s499
      %p505 = scmp.eq.s32.totalorder %s42, 0
      %p506 = por %p504, %p505
      %p507 = scmp.ne.s32.totalorder %s496, %s499
      %p508 = scmp.eq.s32.totalorder %s47, 3
      %p509 = por %p507, %p508
      %p510 = scmp.ne.s32.totalorder %s499, %s500
      %p511 = scmp.eq.s32.totalorder %s47, 0
      %p512 = por %p510, %p511
      %p513 = scmp.ne.s32.totalorder %s499, %s500
      %p514 = scmp.eq.s32.totalorder %s48, 3
      %p515 = por %p513, %p514
      %p517 = scmp.ne.s32.totalorder %s500, %s516
      %p518 = scmp.eq.s32.totalorder %s48, 0
      %p519 = por %p517, %p518
      %s520 = ssub.s32 %s50, %s57
      %p521 = scmp.eq.s32.totalorder %s520, 0
      %s523 = sadd.s32 %s522, 1
      %s524 = scalar_select %p521, %s522, %s523
      %p527 = pneg %p521
      %p528 = scmp.eq.s32.totalorder %s42, 3
      %p529 = por %p527, %p528
      %p530 = scmp.ne.s32.totalorder %s522, %s525
      %p531 = scmp.eq.s32.totalorder %s42, 0
      %p532 = por %p530, %p531
      %p533 = scmp.ne.s32.totalorder %s522, %s525
      %p534 = scmp.eq.s32.totalorder %s47, 3
      %p535 = por %p533, %p534
      %p536 = scmp.ne.s32.totalorder %s525, %s526
      %p537 = scmp.eq.s32.totalorder %s47, 0
      %p538 = por %p536, %p537
      %p539 = scmp.ne.s32.totalorder %s525, %s526
      %p540 = scmp.eq.s32.totalorder %s48, 3
      %p541 = por %p539, %p540
      %p543 = scmp.ne.s32.totalorder %s526, %s542
      %p544 = scmp.eq.s32.totalorder %s48, 0
      %p545 = por %p543, %p544
      %s546 = ssub.s32 %s50, %s57
      %p547 = scmp.eq.s32.totalorder %s546, 0
      %s549 = sadd.s32 %s548, 1
      %s550 = scalar_select %p547, %s548, %s549
      %p553 = pneg %p547
      %p554 = scmp.eq.s32.totalorder %s42, 3
      %p555 = por %p553, %p554
      %p556 = scmp.ne.s32.totalorder %s548, %s551
      %p557 = scmp.eq.s32.totalorder %s42, 0
      %p558 = por %p556, %p557
      %p559 = scmp.ne.s32.totalorder %s548, %s551
      %p560 = scmp.eq.s32.totalorder %s47, 3
      %p561 = por %p559, %p560
      %p562 = scmp.ne.s32.totalorder %s551, %s552
      %p563 = scmp.eq.s32.totalorder %s47, 0
      %p564 = por %p562, %p563
      %p565 = scmp.ne.s32.totalorder %s551, %s552
      %p566 = scmp.eq.s32.totalorder %s48, 3
      %p567 = por %p565, %p566
      %p569 = scmp.ne.s32.totalorder %s552, %s568
      %p570 = scmp.eq.s32.totalorder %s48, 0
      %p571 = por %p569, %p570
      %s572 = ssub.s32 %s50, %s57
      %p573 = scmp.eq.s32.totalorder %s572, 0
      %s575 = sadd.s32 %s574, 1
      %s576 = scalar_select %p573, %s574, %s575
      %p579 = pneg %p573
      %p580 = scmp.eq.s32.totalorder %s42, 3
      %p581 = por %p579, %p580
      %p582 = scmp.ne.s32.totalorder %s574, %s577
      %p583 = scmp.eq.s32.totalorder %s42, 0
      %p584 = por %p582, %p583
      %p585 = scmp.ne.s32.totalorder %s574, %s577
      %p586 = scmp.eq.s32.totalorder %s47, 3
      %p587 = por %p585, %p586
      %p588 = scmp.ne.s32.totalorder %s577, %s578
      %p589 = scmp.eq.s32.totalorder %s47, 0
      %p590 = por %p588, %p589
      %p591 = scmp.ne.s32.totalorder %s577, %s578
      %p592 = scmp.eq.s32.totalorder %s48, 3
      %p593 = por %p591, %p592
      %p595 = scmp.ne.s32.totalorder %s578, %s594
      %p596 = scmp.eq.s32.totalorder %s48, 0
      %p597 = por %p595, %p596
      %s598 = ssub.s32 %s50, %s57
      %p599 = scmp.eq.s32.totalorder %s598, 0
      %s601 = sadd.s32 %s600, 1
      %s602 = scalar_select %p599, %s600, %s601
      %p605 = pneg %p599
      %p606 = scmp.eq.s32.totalorder %s42, 3
      %p607 = por %p605, %p606
      %p608 = scmp.ne.s32.totalorder %s600, %s603
      %p609 = scmp.eq.s32.totalorder %s42, 0
      %p610 = por %p608, %p609
      %p611 = scmp.ne.s32.totalorder %s600, %s603
      %p612 = scmp.eq.s32.totalorder %s47, 3
      %p613 = por %p611, %p612
      %p614 = scmp.ne.s32.totalorder %s603, %s604
      %p615 = scmp.eq.s32.totalorder %s47, 0
      %p616 = por %p614, %p615
      %p617 = scmp.ne.s32.totalorder %s603, %s604
      %p618 = scmp.eq.s32.totalorder %s48, 3
      %p619 = por %p617, %p618
      %p621 = scmp.ne.s32.totalorder %s604, %s620
      %p622 = scmp.eq.s32.totalorder %s48, 0
      %p623 = por %p621, %p622
      %s624 = ssub.s32 %s50, %s57
      %p625 = scmp.eq.s32.totalorder %s624, 0
      %s627 = sadd.s32 %s626, 1
      %s628 = scalar_select %p625, %s626, %s627
      %p631 = pneg %p625
      %p632 = scmp.eq.s32.totalorder %s42, 3
      %p633 = por %p631, %p632
      %p634 = scmp.ne.s32.totalorder %s626, %s629
      %p635 = scmp.eq.s32.totalorder %s42, 0
      %p636 = por %p634, %p635
      %p637 = scmp.ne.s32.totalorder %s626, %s629
      %p638 = scmp.eq.s32.totalorder %s47, 3
      %p639 = por %p637, %p638
      %p640 = scmp.ne.s32.totalorder %s629, %s630
      %p641 = scmp.eq.s32.totalorder %s47, 0
      %p642 = por %p640, %p641
      %p643 = scmp.ne.s32.totalorder %s629, %s630
      %p644 = scmp.eq.s32.totalorder %s48, 3
      %p645 = por %p643, %p644
      %p647 = scmp.ne.s32.totalorder %s630, %s646
      %p648 = scmp.eq.s32.totalorder %s48, 0
      %p649 = por %p647, %p648
      %s650 = ssub.s32 %s50, %s57
      %p651 = scmp.eq.s32.totalorder %s650, 0
      %s653 = sadd.s32 %s652, 1
      %s654 = scalar_select %p651, %s652, %s653
      %p657 = pneg %p651
      %p658 = scmp.eq.s32.totalorder %s42, 3
      %p659 = por %p657, %p658
      %p660 = scmp.ne.s32.totalorder %s652, %s655
      %p661 = scmp.eq.s32.totalorder %s42, 0
      %p662 = por %p660, %p661
      %p663 = scmp.ne.s32.totalorder %s652, %s655
      %p664 = scmp.eq.s32.totalorder %s47, 3
      %p665 = por %p663, %p664
      %p666 = scmp.ne.s32.totalorder %s655, %s656
      %p667 = scmp.eq.s32.totalorder %s47, 0
      %p668 = por %p666, %p667
      %p669 = scmp.ne.s32.totalorder %s655, %s656
      %p670 = scmp.eq.s32.totalorder %s48, 3
      %p671 = por %p669, %p670
      %p673 = scmp.ne.s32.totalorder %s656, %s672
      %p674 = scmp.eq.s32.totalorder %s48, 0
      %p675 = por %p673, %p674
      %s676 = ssub.s32 %s50, %s57
      %p677 = scmp.eq.s32.totalorder %s676, 0
      %s679 = sadd.s32 %s678, 1
      %s680 = scalar_select %p677, %s678, %s679
      %p683 = pneg %p677
      %p684 = scmp.eq.s32.totalorder %s42, 3
      %p685 = por %p683, %p684
      %p686 = scmp.ne.s32.totalorder %s678, %s681
      %p687 = scmp.eq.s32.totalorder %s42, 0
      %p688 = por %p686, %p687
      %p689 = scmp.ne.s32.totalorder %s678, %s681
      %p690 = scmp.eq.s32.totalorder %s47, 3
      %p691 = por %p689, %p690
      %p692 = scmp.ne.s32.totalorder %s681, %s682
      %p693 = scmp.eq.s32.totalorder %s47, 0
      %p694 = por %p692, %p693
      %p695 = scmp.ne.s32.totalorder %s681, %s682
      %p696 = scmp.eq.s32.totalorder %s48, 3
      %p697 = por %p695, %p696
      %p699 = scmp.ne.s32.totalorder %s682, %s698
      %p700 = scmp.eq.s32.totalorder %s48, 0
      %p701 = por %p699, %p700
      %s702 = ssub.s32 %s50, %s57
      %p703 = scmp.eq.s32.totalorder %s702, 0
      %s705 = sadd.s32 %s704, 1
      %s706 = scalar_select %p703, %s704, %s705
      %p709 = pneg %p703
      %p710 = scmp.eq.s32.totalorder %s42, 3
      %p711 = por %p709, %p710
      %p712 = scmp.ne.s32.totalorder %s704, %s707
      %p713 = scmp.eq.s32.totalorder %s42, 0
      %p714 = por %p712, %p713
      %p715 = scmp.ne.s32.totalorder %s704, %s707
      %p716 = scmp.eq.s32.totalorder %s47, 3
      %p717 = por %p715, %p716
      %p718 = scmp.ne.s32.totalorder %s707, %s708
      %p719 = scmp.eq.s32.totalorder %s47, 0
      %p720 = por %p718, %p719
      %p721 = scmp.ne.s32.totalorder %s707, %s708
      %p722 = scmp.eq.s32.totalorder %s48, 3
      %p723 = por %p721, %p722
      %p725 = scmp.ne.s32.totalorder %s708, %s724
      %p726 = scmp.eq.s32.totalorder %s48, 0
      %p727 = por %p725, %p726
      %s728 = ssub.s32 %s49, %s61
      %p729 = scmp.eq.s32.totalorder %s728, 0
      %s731 = sadd.s32 %s730, 1
      %s732 = scalar_select %p729, %s730, %s731
      %p735 = pneg %p729
      %p736 = scmp.eq.s32.totalorder %s42, 3
      %p737 = por %p735, %p736
      %p738 = scmp.ne.s32.totalorder %s730, %s733
      %p739 = scmp.eq.s32.totalorder %s42, 0
      %p740 = por %p738, %p739
      %p741 = scmp.ne.s32.totalorder %s730, %s733
      %p742 = scmp.eq.s32.totalorder %s47, 3
      %p743 = por %p741, %p742
      %p744 = scmp.ne.s32.totalorder %s733, %s734
      %p745 = scmp.eq.s32.totalorder %s47, 0
      %p746 = por %p744, %p745
      %p747 = scmp.ne.s32.totalorder %s733, %s734
      %p748 = scmp.eq.s32.totalorder %s48, 3
      %p749 = por %p747, %p748
      %p751 = scmp.ne.s32.totalorder %s734, %s750
      %p752 = scmp.eq.s32.totalorder %s48, 0
      %p753 = por %p751, %p752
      %p754 = scmp.le.s32.totalorder 1, %s42
      %p755 = scmp.lt.s32.totalorder %s42, 5
      %p756 = pnand %p754, %p755
      %p757 = pneg %p756
      // Predicated region
      $region9: #{tpu_custom_call.1} parent=5 // pred_check
        _
      $region10: #{tpu_custom_call.1} parent=5 // pred_check_branch
        %759 = sbr.rel (%p756) target = $region12
      $region11: #{tpu_custom_call.1} parent=5 // pred_region
        %s760 = ssub.s32 %s42, 1
        // Predicated region
        $region13: #{tpu_custom_call.1} parent=11 // pred_check
          %p761 = pneg %p127
        $region14: #{tpu_custom_call.1} parent=11 // pred_check_branch
          %763 = sbr.rel (%p761) target = $region16
        $region15: #{tpu_custom_call.1} parent=11 // pred_region
          %s765 = ssub.s32 128, 128
          %766 = vsyncadd [#allocation7], %s765
          %s768 = sshll.u32 [#allocation8], 4
          %s769 = int_to_ptr.vmem [resolvable:$true] %s768
          %771 = dma.hbm_to_vmem [thread:$0]  %s2, 128, %s769, [#allocation7]
        $region16: #{tpu_custom_call.1} parent=11 // pred_fallthru
          _
        // Predicated region
        $region17: #{tpu_custom_call.1} parent=11 // pred_check
          %p772 = pneg %p148
        $region18: #{tpu_custom_call.1} parent=11 // pred_check_branch
          %774 = sbr.rel (%p772) target = $region20
        $region19: #{tpu_custom_call.1} parent=11 // pred_region
          %s776 = ssub.s32 128, 128
          %777 = vsyncadd [#allocation10], %s776
          %s779 = sshll.u32 [#allocation9], 4
          %s780 = int_to_ptr.vmem [resolvable:$true] %s779
          %782 = dma.hbm_to_vmem [thread:$0]  %s3, 128, %s780, [#allocation10]
        $region20: #{tpu_custom_call.1} parent=11 // pred_fallthru
          _
      $region12: #{tpu_custom_call.1} parent=5 // pred_fallthru
        _
      %p783 = scmp.lt.s32.totalorder %s42, 4
      // Predicated region
      $region21: #{tpu_custom_call.1} parent=5 // pred_check
        %p784 = pneg %p783
      $region22: #{tpu_custom_call.1} parent=5 // pred_check_branch
        %786 = sbr.rel (%p784) target = $region24
      $region23: #{tpu_custom_call.1} parent=5 // pred_region
        // Predicated region
        $region25: #{tpu_custom_call.1} parent=23 // pred_check
          %p787 = pneg %p74
        $region26: #{tpu_custom_call.1} parent=23 // pred_check_branch
          %789 = sbr.rel (%p787) target = $region28
        $region27: #{tpu_custom_call.1} parent=23 // pred_region
          %s790 = sand.u32 %s42, 1
          %s791 = scalar_lea.sflag [#allocation4], %s790
          %s792 = sand.u32 %s64, 1
          %s793 = smul.addr %s792, 8
          %s794 = scalar_lea.vmem [#allocation3], %s793
          %s796 = ssub.s32 128, 128
          %797 = vsyncadd %s791, %s796
          %s798 = smul.addr %s49, 128
          %s799 = scalar_lea.hbm %s0, %s798
          %s801 = sshll.u32 %s794, 4
          %s802 = int_to_ptr.vmem [resolvable:$true] %s801
          %804 = dma.hbm_to_vmem [thread:$0]  %s799, 128, %s802, %s791
        $region28: #{tpu_custom_call.1} parent=23 // pred_fallthru
          _
        // Predicated region
        $region29: #{tpu_custom_call.1} parent=23 // pred_check
          %p805 = pneg %p100
        $region30: #{tpu_custom_call.1} parent=23 // pred_check_branch
          %807 = sbr.rel (%p805) target = $region32
        $region31: #{tpu_custom_call.1} parent=23 // pred_region
          %s808 = sand.u32 %s42, 1
          %s809 = scalar_lea.sflag [#allocation7], %s808
          %s810 = sand.u32 %s90, 1
          %s811 = smul.addr %s810, 8
          %s812 = scalar_lea.vmem [#allocation6], %s811
          %s814 = ssub.s32 128, 128
          %815 = vsyncadd %s809, %s814
          %s816 = smul.addr %s49, 128
          %s817 = scalar_lea.hbm %s1, %s816
          %s819 = sshll.u32 %s812, 4
          %s820 = int_to_ptr.vmem [resolvable:$true] %s819
          %822 = dma.hbm_to_vmem [thread:$0]  %s817, 128, %s820, %s809
        $region32: #{tpu_custom_call.1} parent=23 // pred_fallthru
          _
        // Predicated region
        $region33: #{tpu_custom_call.1} parent=23 // pred_check
          %p823 = pneg %p168
        $region34: #{tpu_custom_call.1} parent=23 // pred_check_branch
          %825 = sbr.rel (%p823) target = $region36
        $region35: #{tpu_custom_call.1} parent=23 // pred_region
          %p826 = scmp.lt.s32.totalorder %s50, 1
          %s827 = scalar_select %p826, %s50, 1
          %s828 = smul.addr %s827, 4
          %s829 = smul.addr %s828, 4
          %s830 = scalar_lea.vmem %s4, %s829
        $region36: #{tpu_custom_call.1} parent=23 // pred_fallthru
          _
        // Predicated region
        $region37: #{tpu_custom_call.1} parent=23 // pred_check
          %p831 = pneg %p194
        $region38: #{tpu_custom_call.1} parent=23 // pred_check_branch
          %833 = sbr.rel (%p831) target = $region40
        $region39: #{tpu_custom_call.1} parent=23 // pred_region
          %s834 = sand.u32 %s42, 1
          %s835 = scalar_lea.sflag [#allocation4], %s834
          %s836 = sand.u32 %s184, 1
          %s837 = scalar_lea.vmem [#allocation11], %s836
          %s839 = ssub.s32 16, 16
          %840 = vsyncadd %s835, %s839
          %s841 = smul.addr %s50, 16
          %s842 = scalar_lea.hbm %s5, %s841
          %s844 = sshll.u32 %s837, 4
          %s845 = int_to_ptr.vmem [resolvable:$true] %s844
          %847 = dma.hbm_to_vmem [thread:$0]  %s842, 16, %s845, %s835
        $region40: #{tpu_custom_call.1} parent=23 // pred_fallthru
          _
        // Predicated region
        $region41: #{tpu_custom_call.1} parent=23 // pred_check
          %p848 = pneg %p220
        $region42: #{tpu_custom_call.1} parent=23 // pred_check_branch
          %850 = sbr.rel (%p848) target = $region44
        $region43: #{tpu_custom_call.1} parent=23 // pred_region
          %p851 = scmp.lt.s32.totalorder %s50, 1
          %s852 = scalar_select %p851, %s50, 1
          %s853 = smul.addr %s852, 4
          %s854 = smul.addr %s853, 4
          %s855 = scalar_lea.vmem %s6, %s854
        $region44: #{tpu_custom_call.1} parent=23 // pred_fallthru
          _
        // Predicated region
        $region45: #{tpu_custom_call.1} parent=23 // pred_check
          %p856 = pneg %p246
        $region46: #{tpu_custom_call.1} parent=23 // pred_check_branch
          %858 = sbr.rel (%p856) target = $region48
        $region47: #{tpu_custom_call.1} parent=23 // pred_region
          %s859 = sand.u32 %s42, 1
          %s860 = scalar_lea.sflag [#allocation7], %s859
          %s861 = sand.u32 %s236, 1
          %s862 = scalar_lea.vmem [#allocation12], %s861
          %s864 = ssub.s32 16, 16
          %865 = vsyncadd %s860, %s864
          %s866 = smul.addr %s50, 16
          %s867 = scalar_lea.hbm %s7, %s866
          %s869 = sshll.u32 %s862, 4
          %s870 = int_to_ptr.vmem [resolvable:$true] %s869
          %872 = dma.hbm_to_vmem [thread:$0]  %s867, 16, %s870, %s860
        $region48: #{tpu_custom_call.1} parent=23 // pred_fallthru
          _
        // Predicated region
        $region49: #{tpu_custom_call.1} parent=23 // pred_check
          %p873 = pneg %p272
        $region50: #{tpu_custom_call.1} parent=23 // pred_check_branch
          %875 = sbr.rel (%p873) target = $region52
        $region51: #{tpu_custom_call.1} parent=23 // pred_region
          %p876 = scmp.lt.s32.totalorder %s50, 1
          %s877 = scalar_select %p876, %s50, 1
          %s878 = smul.addr %s877, 4
          %s879 = smul.addr %s878, 4
          %s880 = scalar_lea.vmem %s8, %s879
        $region52: #{tpu_custom_call.1} parent=23 // pred_fallthru
          _
        // Predicated region
        $region53: #{tpu_custom_call.1} parent=23 // pred_check
          %p881 = pneg %p298
        $region54: #{tpu_custom_call.1} parent=23 // pred_check_branch
          %883 = sbr.rel (%p881) target = $region56
        $region55: #{tpu_custom_call.1} parent=23 // pred_region
          %s884 = sand.u32 %s42, 1
          %s885 = scalar_lea.sflag [#allocation4], %s884
          %s886 = sand.u32 %s288, 1
          %s887 = scalar_lea.vmem [#allocation13], %s886
          %s889 = ssub.s32 16, 16
          %890 = vsyncadd %s885, %s889
          %s891 = smul.addr %s50, 16
          %s892 = scalar_lea.hbm %s9, %s891
          %s894 = sshll.u32 %s887, 4
          %s895 = int_to_ptr.vmem [resolvable:$true] %s894
          %897 = dma.hbm_to_vmem [thread:$0]  %s892, 16, %s895, %s885
        $region56: #{tpu_custom_call.1} parent=23 // pred_fallthru
          _
        // Predicated region
        $region57: #{tpu_custom_call.1} parent=23 // pred_check
          %p898 = pneg %p324
        $region58: #{tpu_custom_call.1} parent=23 // pred_check_branch
          %900 = sbr.rel (%p898) target = $region60
        $region59: #{tpu_custom_call.1} parent=23 // pred_region
          %p901 = scmp.lt.s32.totalorder %s50, 1
          %s902 = scalar_select %p901, %s50, 1
          %s903 = smul.addr %s902, 4
          %s904 = smul.addr %s903, 4
          %s905 = scalar_lea.vmem %s10, %s904
        $region60: #{tpu_custom_call.1} parent=23 // pred_fallthru
          _
        // Predicated region
        $region61: #{tpu_custom_call.1} parent=23 // pred_check
          %p906 = pneg %p350
        $region62: #{tpu_custom_call.1} parent=23 // pred_check_branch
          %908 = sbr.rel (%p906) target = $region64
        $region63: #{tpu_custom_call.1} parent=23 // pred_region
          %s909 = sand.u32 %s42, 1
          %s910 = scalar_lea.sflag [#allocation7], %s909
          %s911 = sand.u32 %s340, 1
          %s912 = scalar_lea.vmem [#allocation14], %s911
          %s914 = ssub.s32 16, 16
          %915 = vsyncadd %s910, %s914
          %s916 = smul.addr %s50, 16
          %s917 = scalar_lea.hbm %s11, %s916
          %s919 = sshll.u32 %s912, 4
          %s920 = int_to_ptr.vmem [resolvable:$true] %s919
          %922 = dma.hbm_to_vmem [thread:$0]  %s917, 16, %s920, %s910
        $region64: #{tpu_custom_call.1} parent=23 // pred_fallthru
          _
        // Predicated region
        $region65: #{tpu_custom_call.1} parent=23 // pred_check
          %p923 = pneg %p376
        $region66: #{tpu_custom_call.1} parent=23 // pred_check_branch
          %925 = sbr.rel (%p923) target = $region68
        $region67: #{tpu_custom_call.1} parent=23 // pred_region
          %s926 = sand.u32 %s42, 1
          %s927 = scalar_lea.sflag [#allocation4], %s926
          %s928 = sand.u32 %s366, 1
          %s929 = smul.addr %s928, 16
          %s930 = scalar_lea.vmem [#allocation15], %s929
          %s932 = ssub.s32 256, 256
          %933 = vsyncadd %s927, %s932
          %s934 = smul.addr %s50, 4
          %s935 = smul.addr %s934, 64
          %s936 = scalar_lea.hbm %s12, %s935
          %s937 = sshll.u32 %s930, 4
          %s938 = int_to_ptr.vmem [resolvable:$true] %s937
          %943 = dma.hbm_to_vmem [thread:$0]  %s936, 256, %s938, %s927, 64, 64, 4
        $region68: #{tpu_custom_call.1} parent=23 // pred_fallthru
          _
        // Predicated region
        $region69: #{tpu_custom_call.1} parent=23 // pred_check
          %p944 = pneg %p402
        $region70: #{tpu_custom_call.1} parent=23 // pred_check_branch
          %946 = sbr.rel (%p944) target = $region72
        $region71: #{tpu_custom_call.1} parent=23 // pred_region
          %s947 = sand.u32 %s42, 1
          %s948 = scalar_lea.sflag [#allocation7], %s947
          %s949 = sand.u32 %s392, 1
          %s950 = scalar_lea.vmem [#allocation16], %s949
          %s952 = ssub.s32 16, 16
          %953 = vsyncadd %s948, %s952
          %s954 = smul.addr %s50, 16
          %s955 = scalar_lea.hbm %s13, %s954
          %s957 = sshll.u32 %s950, 4
          %s958 = int_to_ptr.vmem [resolvable:$true] %s957
          %960 = dma.hbm_to_vmem [thread:$0]  %s955, 16, %s958, %s948
        $region72: #{tpu_custom_call.1} parent=23 // pred_fallthru
          _
        // Predicated region
        $region73: #{tpu_custom_call.1} parent=23 // pred_check
          %p961 = pneg %p428
        $region74: #{tpu_custom_call.1} parent=23 // pred_check_branch
          %963 = sbr.rel (%p961) target = $region76
        $region75: #{tpu_custom_call.1} parent=23 // pred_region
          %s964 = sand.u32 %s42, 1
          %s965 = scalar_lea.sflag [#allocation4], %s964
          %s966 = sand.u32 %s418, 1
          %s967 = smul.addr %s966, 16
          %s968 = scalar_lea.vmem [#allocation17], %s967
          %s970 = ssub.s32 256, 256
          %971 = vsyncadd %s965, %s970
          %s972 = smul.addr %s50, 4
          %s973 = smul.addr %s972, 64
          %s974 = scalar_lea.hbm %s14, %s973
          %s975 = sshll.u32 %s968, 4
          %s976 = int_to_ptr.vmem [resolvable:$true] %s975
          %981 = dma.hbm_to_vmem [thread:$0]  %s974, 256, %s976, %s965, 64, 64, 4
        $region76: #{tpu_custom_call.1} parent=23 // pred_fallthru
          _
        // Predicated region
        $region77: #{tpu_custom_call.1} parent=23 // pred_check
          %p982 = pneg %p454
        $region78: #{tpu_custom_call.1} parent=23 // pred_check_branch
          %984 = sbr.rel (%p982) target = $region80
        $region79: #{tpu_custom_call.1} parent=23 // pred_region
          %s985 = sand.u32 %s42, 1
          %s986 = scalar_lea.sflag [#allocation7], %s985
          %s987 = sand.u32 %s444, 1
          %s988 = scalar_lea.vmem [#allocation18], %s987
          %s990 = ssub.s32 16, 16
          %991 = vsyncadd %s986, %s990
          %s992 = smul.addr %s50, 16
          %s993 = scalar_lea.hbm %s15, %s992
          %s995 = sshll.u32 %s988, 4
          %s996 = int_to_ptr.vmem [resolvable:$true] %s995
          %998 = dma.hbm_to_vmem [thread:$0]  %s993, 16, %s996, %s986
        $region80: #{tpu_custom_call.1} parent=23 // pred_fallthru
          _
        // Predicated region
        $region81: #{tpu_custom_call.1} parent=23 // pred_check
          %p999 = pneg %p480
        $region82: #{tpu_custom_call.1} parent=23 // pred_check_branch
          %1001 = sbr.rel (%p999) target = $region84
        $region83: #{tpu_custom_call.1} parent=23 // pred_region
          %s1002 = sand.u32 %s42, 1
          %s1003 = scalar_lea.sflag [#allocation4], %s1002
          %s1004 = sand.u32 %s470, 1
          %s1005 = smul.addr %s1004, 16
          %s1006 = scalar_lea.vmem [#allocation19], %s1005
          %s1008 = ssub.s32 256, 256
          %1009 = vsyncadd %s1003, %s1008
          %s1010 = smul.addr %s50, 4
          %s1011 = smul.addr %s1010, 64
          %s1012 = scalar_lea.hbm %s16, %s1011
          %s1013 = sshll.u32 %s1006, 4
          %s1014 = int_to_ptr.vmem [resolvable:$true] %s1013
          %1019 = dma.hbm_to_vmem [thread:$0]  %s1012, 256, %s1014, %s1003, 64, 64, 4
        $region84: #{tpu_custom_call.1} parent=23 // pred_fallthru
          _
        // Predicated region
        $region85: #{tpu_custom_call.1} parent=23 // pred_check
          %p1020 = pneg %p506
        $region86: #{tpu_custom_call.1} parent=23 // pred_check_branch
          %1022 = sbr.rel (%p1020) target = $region88
        $region87: #{tpu_custom_call.1} parent=23 // pred_region
          %s1023 = sand.u32 %s42, 1
          %s1024 = scalar_lea.sflag [#allocation7], %s1023
          %s1025 = sand.u32 %s496, 1
          %s1026 = scalar_lea.vmem [#allocation20], %s1025
          %s1028 = ssub.s32 16, 16
          %1029 = vsyncadd %s1024, %s1028
          %s1030 = smul.addr %s50, 16
          %s1031 = scalar_lea.hbm %s17, %s1030
          %s1033 = sshll.u32 %s1026, 4
          %s1034 = int_to_ptr.vmem [resolvable:$true] %s1033
          %1036 = dma.hbm_to_vmem [thread:$0]  %s1031, 16, %s1034, %s1024
        $region88: #{tpu_custom_call.1} parent=23 // pred_fallthru
          _
        // Predicated region
        $region89: #{tpu_custom_call.1} parent=23 // pred_check
          %p1037 = pneg %p532
        $region90: #{tpu_custom_call.1} parent=23 // pred_check_branch
          %1039 = sbr.rel (%p1037) target = $region92
        $region91: #{tpu_custom_call.1} parent=23 // pred_region
          %p1040 = scmp.lt.s32.totalorder %s50, 1
          %s1041 = scalar_select %p1040, %s50, 1
          %s1042 = smul.addr %s1041, 8
          %s1043 = smul.addr %s1042, 4
          %s1044 = scalar_lea.vmem %s18, %s1043
        $region92: #{tpu_custom_call.1} parent=23 // pred_fallthru
          _
        // Predicated region
        $region93: #{tpu_custom_call.1} parent=23 // pred_check
          %p1045 = pneg %p558
        $region94: #{tpu_custom_call.1} parent=23 // pred_check_branch
          %1047 = sbr.rel (%p1045) target = $region96
        $region95: #{tpu_custom_call.1} parent=23 // pred_region
          %p1048 = scmp.lt.s32.totalorder %s50, 1
          %s1049 = scalar_select %p1048, %s50, 1
          %s1050 = scalar_lea.vmem %s19, %s1049
        $region96: #{tpu_custom_call.1} parent=23 // pred_fallthru
          _
        // Predicated region
        $region97: #{tpu_custom_call.1} parent=23 // pred_check
          %p1051 = pneg %p584
        $region98: #{tpu_custom_call.1} parent=23 // pred_check_branch
          %1053 = sbr.rel (%p1051) target = $region100
        $region99: #{tpu_custom_call.1} parent=23 // pred_region
          %p1054 = scmp.lt.s32.totalorder %s50, 1
          %s1055 = scalar_select %p1054, %s50, 1
          %s1056 = scalar_lea.vmem %s20, %s1055
        $region100: #{tpu_custom_call.1} parent=23 // pred_fallthru
          _
        // Predicated region
        $region101: #{tpu_custom_call.1} parent=23 // pred_check
          %p1057 = pneg %p610
        $region102: #{tpu_custom_call.1} parent=23 // pred_check_branch
          %1059 = sbr.rel (%p1057) target = $region104
        $region103: #{tpu_custom_call.1} parent=23 // pred_region
          %p1060 = scmp.lt.s32.totalorder %s50, 1
          %s1061 = scalar_select %p1060, %s50, 1
          %s1062 = scalar_lea.vmem %s21, %s1061
        $region104: #{tpu_custom_call.1} parent=23 // pred_fallthru
          _
        // Predicated region
        $region105: #{tpu_custom_call.1} parent=23 // pred_check
          %p1063 = pneg %p636
        $region106: #{tpu_custom_call.1} parent=23 // pred_check_branch
          %1065 = sbr.rel (%p1063) target = $region108
        $region107: #{tpu_custom_call.1} parent=23 // pred_region
          %p1066 = scmp.lt.s32.totalorder %s50, 1
          %s1067 = scalar_select %p1066, %s50, 1
          %s1068 = scalar_lea.vmem %s22, %s1067
        $region108: #{tpu_custom_call.1} parent=23 // pred_fallthru
          _
        // Predicated region
        $region109: #{tpu_custom_call.1} parent=23 // pred_check
          %p1069 = pneg %p662
        $region110: #{tpu_custom_call.1} parent=23 // pred_check_branch
          %1071 = sbr.rel (%p1069) target = $region112
        $region111: #{tpu_custom_call.1} parent=23 // pred_region
          %p1072 = scmp.lt.s32.totalorder %s50, 1
          %s1073 = scalar_select %p1072, %s50, 1
          %s1074 = scalar_lea.vmem %s23, %s1073
        $region112: #{tpu_custom_call.1} parent=23 // pred_fallthru
          _
        // Predicated region
        $region113: #{tpu_custom_call.1} parent=23 // pred_check
          %p1075 = pneg %p688
        $region114: #{tpu_custom_call.1} parent=23 // pred_check_branch
          %1077 = sbr.rel (%p1075) target = $region116
        $region115: #{tpu_custom_call.1} parent=23 // pred_region
          %p1078 = scmp.lt.s32.totalorder %s50, 1
          %s1079 = scalar_select %p1078, %s50, 1
          %s1080 = scalar_lea.vmem %s24, %s1079
        $region116: #{tpu_custom_call.1} parent=23 // pred_fallthru
          _
        // Predicated region
        $region117: #{tpu_custom_call.1} parent=23 // pred_check
          %p1081 = pneg %p714
        $region118: #{tpu_custom_call.1} parent=23 // pred_check_branch
          %1083 = sbr.rel (%p1081) target = $region120
        $region119: #{tpu_custom_call.1} parent=23 // pred_region
          %p1084 = scmp.lt.s32.totalorder %s50, 1
          %s1085 = scalar_select %p1084, %s50, 1
          %s1086 = scalar_lea.vmem %s25, %s1085
        $region120: #{tpu_custom_call.1} parent=23 // pred_fallthru
          _
      $region24: #{tpu_custom_call.1} parent=5 // pred_fallthru
        _
      %p1087 = scmp.le.s32.totalorder 1, %s42
      %p1088 = scmp.lt.s32.totalorder %s42, 5
      %p1089 = pnand %p1087, %p1088
      %p1090 = pneg %p1089
      // Predicated region
      $region121: #{tpu_custom_call.1} parent=5 // pred_check
        _
      $region122: #{tpu_custom_call.1} parent=5 // pred_check_branch
        %1092 = sbr.rel (%p1089) target = $region124
      $region123: #{tpu_custom_call.1} parent=5 // pred_region
        %s1093 = ssub.s32 %s42, 1
        %s1094 = sand.u32 %s47, 1
        %s1095 = scalar_lea.sflag [#allocation4], %s1094
        %s1096 = sand.u32 %s67, 1
        %s1097 = smul.addr %s1096, 8
        %s1098 = scalar_lea.vmem [#allocation3], %s1097
        // Predicated region
        $region125: #{tpu_custom_call.1} parent=123 // pred_check
          %p1099 = pneg %p80
        $region126: #{tpu_custom_call.1} parent=123 // pred_check_branch
          %1101 = sbr.rel (%p1099) target = $region128
        $region127: #{tpu_custom_call.1} parent=123 // pred_region
          %1102 = dma.done %s1095, 128
        $region128: #{tpu_custom_call.1} parent=123 // pred_fallthru
          _
        %s1103 = sand.u32 %s47, 1
        %s1104 = scalar_lea.sflag [#allocation7], %s1103
        %s1105 = sand.u32 %s93, 1
        %s1106 = smul.addr %s1105, 8
        %s1107 = scalar_lea.vmem [#allocation6], %s1106
        // Predicated region
        $region129: #{tpu_custom_call.1} parent=123 // pred_check
          %p1108 = pneg %p106
        $region130: #{tpu_custom_call.1} parent=123 // pred_check_branch
          %1110 = sbr.rel (%p1108) target = $region132
        $region131: #{tpu_custom_call.1} parent=123 // pred_region
          %1111 = dma.done %s1104, 128
        $region132: #{tpu_custom_call.1} parent=123 // pred_fallthru
          _
        // Predicated region
        $region133: #{tpu_custom_call.1} parent=123 // pred_check
          %p1112 = pneg %p127
        $region134: #{tpu_custom_call.1} parent=123 // pred_check_branch
          %1114 = sbr.rel (%p1112) target = $region136
        $region135: #{tpu_custom_call.1} parent=123 // pred_region
          %1115 = dma.done [#allocation7], 128
        $region136: #{tpu_custom_call.1} parent=123 // pred_fallthru
          _
        // Predicated region
        $region137: #{tpu_custom_call.1} parent=123 // pred_check
          %p1116 = pneg %p148
        $region138: #{tpu_custom_call.1} parent=123 // pred_check_branch
          %1118 = sbr.rel (%p1116) target = $region140
        $region139: #{tpu_custom_call.1} parent=123 // pred_region
          %1119 = dma.done [#allocation10], 128
        $region140: #{tpu_custom_call.1} parent=123 // pred_fallthru
          _
        %s1120 = sand.u32 %s47, 1
        %s1121 = scalar_lea.sflag [#allocation4], %s1120
        %s1122 = sand.u32 %s187, 1
        %s1123 = scalar_lea.vmem [#allocation11], %s1122
        // Predicated region
        $region141: #{tpu_custom_call.1} parent=123 // pred_check
          %p1124 = pneg %p200
        $region142: #{tpu_custom_call.1} parent=123 // pred_check_branch
          %1126 = sbr.rel (%p1124) target = $region144
        $region143: #{tpu_custom_call.1} parent=123 // pred_region
          %1127 = dma.done %s1121, 16
        $region144: #{tpu_custom_call.1} parent=123 // pred_fallthru
          _
        %s1128 = sand.u32 %s47, 1
        %s1129 = scalar_lea.sflag [#allocation7], %s1128
        %s1130 = sand.u32 %s239, 1
        %s1131 = scalar_lea.vmem [#allocation12], %s1130
        // Predicated region
        $region145: #{tpu_custom_call.1} parent=123 // pred_check
          %p1132 = pneg %p252
        $region146: #{tpu_custom_call.1} parent=123 // pred_check_branch
          %1134 = sbr.rel (%p1132) target = $region148
        $region147: #{tpu_custom_call.1} parent=123 // pred_region
          %1135 = dma.done %s1129, 16
        $region148: #{tpu_custom_call.1} parent=123 // pred_fallthru
          _
        %s1136 = sand.u32 %s47, 1
        %s1137 = scalar_lea.sflag [#allocation4], %s1136
        %s1138 = sand.u32 %s291, 1
        %s1139 = scalar_lea.vmem [#allocation13], %s1138
        // Predicated region
        $region149: #{tpu_custom_call.1} parent=123 // pred_check
          %p1140 = pneg %p304
        $region150: #{tpu_custom_call.1} parent=123 // pred_check_branch
          %1142 = sbr.rel (%p1140) target = $region152
        $region151: #{tpu_custom_call.1} parent=123 // pred_region
          %1143 = dma.done %s1137, 16
        $region152: #{tpu_custom_call.1} parent=123 // pred_fallthru
          _
        %s1144 = sand.u32 %s47, 1
        %s1145 = scalar_lea.sflag [#allocation7], %s1144
        %s1146 = sand.u32 %s343, 1
        %s1147 = scalar_lea.vmem [#allocation14], %s1146
        // Predicated region
        $region153: #{tpu_custom_call.1} parent=123 // pred_check
          %p1148 = pneg %p356
        $region154: #{tpu_custom_call.1} parent=123 // pred_check_branch
          %1150 = sbr.rel (%p1148) target = $region156
        $region155: #{tpu_custom_call.1} parent=123 // pred_region
          %1151 = dma.done %s1145, 16
        $region156: #{tpu_custom_call.1} parent=123 // pred_fallthru
          _
        %s1152 = sand.u32 %s47, 1
        %s1153 = scalar_lea.sflag [#allocation4], %s1152
        %s1154 = sand.u32 %s369, 1
        %s1155 = smul.addr %s1154, 16
        %s1156 = scalar_lea.vmem [#allocation15], %s1155
        // Predicated region
        $region157: #{tpu_custom_call.1} parent=123 // pred_check
          %p1157 = pneg %p382
        $region158: #{tpu_custom_call.1} parent=123 // pred_check_branch
          %1159 = sbr.rel (%p1157) target = $region160
        $region159: #{tpu_custom_call.1} parent=123 // pred_region
          %1160 = dma.done %s1153, 256
        $region160: #{tpu_custom_call.1} parent=123 // pred_fallthru
          _
        %s1161 = sand.u32 %s47, 1
        %s1162 = scalar_lea.sflag [#allocation7], %s1161
        %s1163 = sand.u32 %s395, 1
        %s1164 = scalar_lea.vmem [#allocation16], %s1163
        // Predicated region
        $region161: #{tpu_custom_call.1} parent=123 // pred_check
          %p1165 = pneg %p408
        $region162: #{tpu_custom_call.1} parent=123 // pred_check_branch
          %1167 = sbr.rel (%p1165) target = $region164
        $region163: #{tpu_custom_call.1} parent=123 // pred_region
          %1168 = dma.done %s1162, 16
        $region164: #{tpu_custom_call.1} parent=123 // pred_fallthru
          _
        %s1169 = sand.u32 %s47, 1
        %s1170 = scalar_lea.sflag [#allocation4], %s1169
        %s1171 = sand.u32 %s421, 1
        %s1172 = smul.addr %s1171, 16
        %s1173 = scalar_lea.vmem [#allocation17], %s1172
        // Predicated region
        $region165: #{tpu_custom_call.1} parent=123 // pred_check
          %p1174 = pneg %p434
        $region166: #{tpu_custom_call.1} parent=123 // pred_check_branch
          %1176 = sbr.rel (%p1174) target = $region168
        $region167: #{tpu_custom_call.1} parent=123 // pred_region
          %1177 = dma.done %s1170, 256
        $region168: #{tpu_custom_call.1} parent=123 // pred_fallthru
          _
        %s1178 = sand.u32 %s47, 1
        %s1179 = scalar_lea.sflag [#allocation7], %s1178
        %s1180 = sand.u32 %s447, 1
        %s1181 = scalar_lea.vmem [#allocation18], %s1180
        // Predicated region
        $region169: #{tpu_custom_call.1} parent=123 // pred_check
          %p1182 = pneg %p460
        $region170: #{tpu_custom_call.1} parent=123 // pred_check_branch
          %1184 = sbr.rel (%p1182) target = $region172
        $region171: #{tpu_custom_call.1} parent=123 // pred_region
          %1185 = dma.done %s1179, 16
        $region172: #{tpu_custom_call.1} parent=123 // pred_fallthru
          _
        %s1186 = sand.u32 %s47, 1
        %s1187 = scalar_lea.sflag [#allocation4], %s1186
        %s1188 = sand.u32 %s473, 1
        %s1189 = smul.addr %s1188, 16
        %s1190 = scalar_lea.vmem [#allocation19], %s1189
        // Predicated region
        $region173: #{tpu_custom_call.1} parent=123 // pred_check
          %p1191 = pneg %p486
        $region174: #{tpu_custom_call.1} parent=123 // pred_check_branch
          %1193 = sbr.rel (%p1191) target = $region176
        $region175: #{tpu_custom_call.1} parent=123 // pred_region
          %1194 = dma.done %s1187, 256
        $region176: #{tpu_custom_call.1} parent=123 // pred_fallthru
          _
        %s1195 = sand.u32 %s47, 1
        %s1196 = scalar_lea.sflag [#allocation7], %s1195
        %s1197 = sand.u32 %s499, 1
        %s1198 = scalar_lea.vmem [#allocation20], %s1197
        // Predicated region
        $region177: #{tpu_custom_call.1} parent=123 // pred_check
          %p1199 = pneg %p512
        $region178: #{tpu_custom_call.1} parent=123 // pred_check_branch
          %1201 = sbr.rel (%p1199) target = $region180
        $region179: #{tpu_custom_call.1} parent=123 // pred_region
          %1202 = dma.done %s1196, 16
        $region180: #{tpu_custom_call.1} parent=123 // pred_fallthru
          _
        %s1203 = sand.u32 %s47, 1
        %s1204 = scalar_lea.sflag [#allocation4], %s1203
        %s1205 = sand.u32 %s67, 1
        %s1206 = smul.addr %s1205, 8
        %s1207 = scalar_lea.vmem [#allocation3], %s1206
        %p1208 = pneg %p80
        %p1209 = pneg %p77
        %s1210 = sand.u32 %s47, 1
        %s1211 = scalar_lea.sflag [#allocation7], %s1210
        %s1212 = sand.u32 %s93, 1
        %s1213 = smul.addr %s1212, 8
        %s1214 = scalar_lea.vmem [#allocation6], %s1213
        %p1215 = pneg %p106
        %p1216 = pneg %p103
        %p1217 = pneg %p127
        %p1218 = pneg %p124
        %p1219 = pneg %p148
        %p1220 = pneg %p145
        %p1221 = scmp.lt.s32.totalorder %s52, 1
        %s1222 = scalar_select %p1221, %s52, 1
        %s1223 = smul.addr %s1222, 4
        %s1224 = smul.addr %s1223, 4
        %s1225 = scalar_lea.vmem %s4, %s1224
        %p1226 = pneg %p174
        %p1227 = pneg %p171
        %s1228 = sand.u32 %s47, 1
        %s1229 = scalar_lea.sflag [#allocation4], %s1228
        %s1230 = sand.u32 %s187, 1
        %s1231 = scalar_lea.vmem [#allocation11], %s1230
        %p1232 = pneg %p200
        %p1233 = pneg %p197
        %p1234 = scmp.lt.s32.totalorder %s52, 1
        %s1235 = scalar_select %p1234, %s52, 1
        %s1236 = smul.addr %s1235, 4
        %s1237 = smul.addr %s1236, 4
        %s1238 = scalar_lea.vmem %s6, %s1237
        %p1239 = pneg %p226
        %p1240 = pneg %p223
        %s1241 = sand.u32 %s47, 1
        %s1242 = scalar_lea.sflag [#allocation7], %s1241
        %s1243 = sand.u32 %s239, 1
        %s1244 = scalar_lea.vmem [#allocation12], %s1243
        %p1245 = pneg %p252
        %p1246 = pneg %p249
        %p1247 = scmp.lt.s32.totalorder %s52, 1
        %s1248 = scalar_select %p1247, %s52, 1
        %s1249 = smul.addr %s1248, 4
        %s1250 = smul.addr %s1249, 4
        %s1251 = scalar_lea.vmem %s8, %s1250
        %p1252 = pneg %p278
        %p1253 = pneg %p275
        %s1254 = sand.u32 %s47, 1
        %s1255 = scalar_lea.sflag [#allocation4], %s1254
        %s1256 = sand.u32 %s291, 1
        %s1257 = scalar_lea.vmem [#allocation13], %s1256
        %p1258 = pneg %p304
        %p1259 = pneg %p301
        %p1260 = scmp.lt.s32.totalorder %s52, 1
        %s1261 = scalar_select %p1260, %s52, 1
        %s1262 = smul.addr %s1261, 4
        %s1263 = smul.addr %s1262, 4
        %s1264 = scalar_lea.vmem %s10, %s1263
        %p1265 = pneg %p330
        %p1266 = pneg %p327
        %s1267 = sand.u32 %s47, 1
        %s1268 = scalar_lea.sflag [#allocation7], %s1267
        %s1269 = sand.u32 %s343, 1
        %s1270 = scalar_lea.vmem [#allocation14], %s1269
        %p1271 = pneg %p356
        %p1272 = pneg %p353
        %s1273 = sand.u32 %s47, 1
        %s1274 = scalar_lea.sflag [#allocation4], %s1273
        %s1275 = sand.u32 %s369, 1
        %s1276 = smul.addr %s1275, 16
        %s1277 = scalar_lea.vmem [#allocation15], %s1276
        %p1278 = pneg %p382
        %p1279 = pneg %p379
        %s1280 = sand.u32 %s47, 1
        %s1281 = scalar_lea.sflag [#allocation7], %s1280
        %s1282 = sand.u32 %s395, 1
        %s1283 = scalar_lea.vmem [#allocation16], %s1282
        %p1284 = pneg %p408
        %p1285 = pneg %p405
        %s1286 = sand.u32 %s47, 1
        %s1287 = scalar_lea.sflag [#allocation4], %s1286
        %s1288 = sand.u32 %s421, 1
        %s1289 = smul.addr %s1288, 16
        %s1290 = scalar_lea.vmem [#allocation17], %s1289
        %p1291 = pneg %p434
        %p1292 = pneg %p431
        %s1293 = sand.u32 %s47, 1
        %s1294 = scalar_lea.sflag [#allocation7], %s1293
        %s1295 = sand.u32 %s447, 1
        %s1296 = scalar_lea.vmem [#allocation18], %s1295
        %p1297 = pneg %p460
        %p1298 = pneg %p457
        %s1299 = sand.u32 %s47, 1
        %s1300 = scalar_lea.sflag [#allocation4], %s1299
        %s1301 = sand.u32 %s473, 1
        %s1302 = smul.addr %s1301, 16
        %s1303 = scalar_lea.vmem [#allocation19], %s1302
        %p1304 = pneg %p486
        %p1305 = pneg %p483
        %s1306 = sand.u32 %s47, 1
        %s1307 = scalar_lea.sflag [#allocation7], %s1306
        %s1308 = sand.u32 %s499, 1
        %s1309 = scalar_lea.vmem [#allocation20], %s1308
        %p1310 = pneg %p512
        %p1311 = pneg %p509
        %p1312 = scmp.lt.s32.totalorder %s52, 1
        %s1313 = scalar_select %p1312, %s52, 1
        %s1314 = smul.addr %s1313, 8
        %s1315 = smul.addr %s1314, 4
        %s1316 = scalar_lea.vmem %s18, %s1315
        %p1317 = pneg %p538
        %p1318 = pneg %p535
        %p1319 = scmp.lt.s32.totalorder %s52, 1
        %s1320 = scalar_select %p1319, %s52, 1
        %s1321 = scalar_lea.vmem %s19, %s1320
        %p1322 = pneg %p564
        %p1323 = pneg %p561
        %p1324 = scmp.lt.s32.totalorder %s52, 1
        %s1325 = scalar_select %p1324, %s52, 1
        %s1326 = scalar_lea.vmem %s20, %s1325
        %p1327 = pneg %p590
        %p1328 = pneg %p587
        %p1329 = scmp.lt.s32.totalorder %s52, 1
        %s1330 = scalar_select %p1329, %s52, 1
        %s1331 = scalar_lea.vmem %s21, %s1330
        %p1332 = pneg %p616
        %p1333 = pneg %p613
        %p1334 = scmp.lt.s32.totalorder %s52, 1
        %s1335 = scalar_select %p1334, %s52, 1
        %s1336 = scalar_lea.vmem %s22, %s1335
        %p1337 = pneg %p642
        %p1338 = pneg %p639
        %p1339 = scmp.lt.s32.totalorder %s52, 1
        %s1340 = scalar_select %p1339, %s52, 1
        %s1341 = scalar_lea.vmem %s23, %s1340
        %p1342 = pneg %p668
        %p1343 = pneg %p665
        %p1344 = scmp.lt.s32.totalorder %s52, 1
        %s1345 = scalar_select %p1344, %s52, 1
        %s1346 = scalar_lea.vmem %s24, %s1345
        %p1347 = pneg %p694
        %p1348 = pneg %p691
        %p1349 = scmp.lt.s32.totalorder %s52, 1
        %s1350 = scalar_select %p1349, %s52, 1
        %s1351 = scalar_lea.vmem %s25, %s1350
        %p1352 = pneg %p720
        %p1353 = pneg %p717
        %p1354 = pneg %p746
        %p1355 = pneg %p743
        %s1356 = sand.u32 %s733, 1
        %s1357 = scalar_lea.sflag [#allocation5], %s1356
        %s1358 = sand.u32 %s733, 1
        %s1359 = smul.addr %s1358, 8
        %s1360 = scalar_lea.vmem [#allocation21], %s1359
        %p1361 = scmp.lt.s32.totalorder %s52, 1
        %s1362 = scalar_select %p1361, %s52, 1
        %s1363 = smul.addr %s1362, 4
        %s1364 = smul.addr %s1363, 4
        %s1365 = scalar_lea.vmem %s4, %s1364
        %p1366 = scmp.lt.s32.totalorder %s52, 1
        %s1367 = scalar_select %p1366, %s52, 1
        %s1368 = smul.addr %s1367, 4
        %s1369 = smul.addr %s1368, 4
        %s1370 = scalar_lea.vmem %s6, %s1369
        %p1371 = scmp.lt.s32.totalorder %s52, 1
        %s1372 = scalar_select %p1371, %s52, 1
        %s1373 = smul.addr %s1372, 4
        %s1374 = smul.addr %s1373, 4
        %s1375 = scalar_lea.vmem %s8, %s1374
        %p1376 = scmp.lt.s32.totalorder %s52, 1
        %s1377 = scalar_select %p1376, %s52, 1
        %s1378 = smul.addr %s1377, 4
        %s1379 = smul.addr %s1378, 4
        %s1380 = scalar_lea.vmem %s10, %s1379
        %p1381 = scmp.lt.s32.totalorder %s52, 1
        %s1382 = scalar_select %p1381, %s52, 1
        %s1383 = smul.addr %s1382, 8
        %s1384 = smul.addr %s1383, 4
        %s1385 = scalar_lea.vmem %s18, %s1384
        %p1386 = scmp.lt.s32.totalorder %s52, 1
        %s1387 = scalar_select %p1386, %s52, 1
        %s1388 = scalar_lea.vmem %s19, %s1387
        %p1389 = scmp.lt.s32.totalorder %s52, 1
        %s1390 = scalar_select %p1389, %s52, 1
        %s1391 = scalar_lea.vmem %s20, %s1390
        %p1392 = scmp.lt.s32.totalorder %s52, 1
        %s1393 = scalar_select %p1392, %s52, 1
        %s1394 = scalar_lea.vmem %s21, %s1393
        %p1395 = scmp.lt.s32.totalorder %s52, 1
        %s1396 = scalar_select %p1395, %s52, 1
        %s1397 = scalar_lea.vmem %s22, %s1396
        %p1398 = scmp.lt.s32.totalorder %s52, 1
        %s1399 = scalar_select %p1398, %s52, 1
        %s1400 = scalar_lea.vmem %s23, %s1399
        %p1401 = scmp.lt.s32.totalorder %s52, 1
        %s1402 = scalar_select %p1401, %s52, 1
        %s1403 = scalar_lea.vmem %s24, %s1402
        %p1404 = scmp.lt.s32.totalorder %s52, 1
        %s1405 = scalar_select %p1404, %s52, 1
        %s1406 = scalar_lea.vmem %s25, %s1405
        %p1408 = scmp.eq.s32.totalorder %s52, 0
        // Predicated region
        $region181: #{tpu_custom_call.1} parent=123 // pred_check
          %p1409 = pneg %p1408
        $region182: #{tpu_custom_call.1} parent=123 // pred_check_branch
          %1411 = sbr.rel (%p1409) target = $region184
        $region183: #{tpu_custom_call.1} parent=123 // pred_region
          %v1412 = vld [vmem:[%s1098] sm:$0xff]
          %vm1413 = vcmask 261120
          %1414 = vst.msk [vmem:[#allocation2] sm:$0xff] %vm1413, %v1412
        $region184: #{tpu_custom_call.1} parent=123 // pred_fallthru
          _
        %v1415 = vld [vmem:[#allocation2] sm:$0xff]
        %v1416 = vld [vmem:[%s1107] sm:$0xff]
        %v1417 = vld [vmem:[#allocation8] sm:$0xff]
        %v1418 = vld [vmem:[%s1365] sm:$0xf]
        %v1419 = vld [vmem:[%s1365 + $0x4] sm:$0xf]
        %v1420 = vld [vmem:[%s1365 + $0x8] sm:$0xf]
        %v1421 = vld [vmem:[%s1365 + $0xc] sm:$0xf]
        %v1422 = vld [vmem:[%s1123] sm:$0x1]
        %v1423 = vld [vmem:[%s1370] sm:$0xf]
        %v1424 = vld [vmem:[%s1370 + $0x4] sm:$0xf]
        %v1425 = vld [vmem:[%s1370 + $0x8] sm:$0xf]
        %v1426 = vld [vmem:[%s1370 + $0xc] sm:$0xf]
        %v1427 = vld [vmem:[%s1131] sm:$0x1]
        %v1428 = vld [vmem:[%s1375] sm:$0xf]
        %v1429 = vld [vmem:[%s1375 + $0x4] sm:$0xf]
        %v1430 = vld [vmem:[%s1375 + $0x8] sm:$0xf]
        %v1431 = vld [vmem:[%s1375 + $0xc] sm:$0xf]
        %v1432 = vld [vmem:[%s1139] sm:$0x1]
        %v1433 = vpack.c.bf16 %v1415, %v1415
        %v1435 = vlaneseq
        %v1436 = vshrl.u32 %v1435, 7
        %v1437 = vsub.s32 0, %v1436
        %v1438 = vrot.slane %v1422, %v1437
        %v1444 = vunpack.c.l.b16 %v1418
        %v1445 = vunpack.c.l.b16 %v1419
        %v1446 = vunpack.c.l.b16 %v1420
        %v1447 = vunpack.c.l.b16 %v1421
        %v1448 = vpack.c.b16 %v1445, %v1444
        %v1449 = vpack.c.b16 %v1447, %v1446
        %vm1452 = vcmask 261120
        %v1454 = vsel %vm1452, %v1433, 0
        %1456 = vmatprep.subr.bf16.mxu0 0
        %1457 = vmatpush1.bf16.msra.mxu0 %v1448
        %1458 = vmatprep.subr.bf16.mxu0 0
        %1459 = vmatpush1.bf16.msra.mxu0 %v1449
        %1460 = vmatprep.subr.bf16.mxu0 0
        %1461 = vmatpush1.bf16.msra.mxu0 0
        %1462 = vmatprep.subr.bf16.mxu0 0
        %1463 = vmatpush1.bf16.msra.mxu0 0
        %1464 = vmatprep.subr.bf16.mxu0 0
        %1465 = vmatpush1.bf16.msra.mxu0 0
        %1466 = vmatprep.subr.bf16.mxu0 0
        %1467 = vmatpush1.bf16.msra.mxu0 0
        %1468 = vmatprep.subr.bf16.mxu0 0
        %1469 = vmatpush1.bf16.msra.mxu0 0
        %1470 = vmatprep.subr.bf16.mxu0 0
        %1471 = vmatpush1.bf16.msra.mxu0 0
        %1472 = vmatprep.subr.bf16.mxu0 0
        %1473 = vmatpush1.bf16.msra.mxu0 0
        %1474 = vmatprep.subr.bf16.mxu0 0
        %1475 = vmatpush1.bf16.msra.mxu0 0
        %1476 = vmatprep.subr.bf16.mxu0 0
        %1477 = vmatpush1.bf16.msra.mxu0 0
        %1478 = vmatprep.subr.bf16.mxu0 0
        %1479 = vmatpush1.bf16.msra.mxu0 0
        %1480 = vmatprep.subr.bf16.mxu0 0
        %1481 = vmatpush1.bf16.msra.mxu0 0
        %1482 = vmatprep.subr.bf16.mxu0 0
        %1483 = vmatpush1.bf16.msra.mxu0 0
        %1484 = vmatprep.subr.bf16.mxu0 0
        %1485 = vmatpush1.bf16.msra.mxu0 0
        %1486 = vmatprep.subr.bf16.mxu0 0
        %1487 = vmatpush1.bf16.msra.mxu0 0
        %1488 = vmatprep.mubr.bf16.mxu0 0
        %1489 = vmatmul.mubr.bf16.gmra.mrb[0].mxu0 %v1454
        %v1490 = vpop.f32.mrb[0].mxu0
        %v1491 = vadd.f32 %v1438, %v1490
        %v1492 = vpop.f32.mrb[0].mxu0
        %v1493 = vpop.f32.mrb[0].mxu0
        %v1494 = vpop.f32.mrb[0].mxu0
        %1495 = vdwg.mxu0
        %v1497 = vlaneseq
        %v1498 = vshrl.u32 %v1497, 7
        %v1499 = vsub.s32 0, %v1498
        %v1500 = vrot.slane %v1427, %v1499
        %v1506 = vunpack.c.l.b16 %v1423
        %v1507 = vunpack.c.l.b16 %v1424
        %v1508 = vunpack.c.l.b16 %v1425
        %v1509 = vunpack.c.l.b16 %v1426
        %v1510 = vpack.c.b16 %v1507, %v1506
        %v1511 = vpack.c.b16 %v1509, %v1508
        %1514 = vmatprep.subr.bf16.mxu0 0
        %1515 = vmatpush1.bf16.msra.mxu0 %v1510
        %1516 = vmatprep.subr.bf16.mxu0 0
        %1517 = vmatpush1.bf16.msra.mxu0 %v1511
        %1518 = vmatprep.subr.bf16.mxu0 0
        %1519 = vmatpush1.bf16.msra.mxu0 0
        %1520 = vmatprep.subr.bf16.mxu0 0
        %1521 = vmatpush1.bf16.msra.mxu0 0
        %1522 = vmatprep.subr.bf16.mxu0 0
        %1523 = vmatpush1.bf16.msra.mxu0 0
        %1524 = vmatprep.subr.bf16.mxu0 0
        %1525 = vmatpush1.bf16.msra.mxu0 0
        %1526 = vmatprep.subr.bf16.mxu0 0
        %1527 = vmatpush1.bf16.msra.mxu0 0
        %1528 = vmatprep.subr.bf16.mxu0 0
        %1529 = vmatpush1.bf16.msra.mxu0 0
        %1530 = vmatprep.subr.bf16.mxu0 0
        %1531 = vmatpush1.bf16.msra.mxu0 0
        %1532 = vmatprep.subr.bf16.mxu0 0
        %1533 = vmatpush1.bf16.msra.mxu0 0
        %1534 = vmatprep.subr.bf16.mxu0 0
        %1535 = vmatpush1.bf16.msra.mxu0 0
        %1536 = vmatprep.subr.bf16.mxu0 0
        %1537 = vmatpush1.bf16.msra.mxu0 0
        %1538 = vmatprep.subr.bf16.mxu0 0
        %1539 = vmatpush1.bf16.msra.mxu0 0
        %1540 = vmatprep.subr.bf16.mxu0 0
        %1541 = vmatpush1.bf16.msra.mxu0 0
        %1542 = vmatprep.subr.bf16.mxu0 0
        %1543 = vmatpush1.bf16.msra.mxu0 0
        %1544 = vmatprep.subr.bf16.mxu0 0
        %1545 = vmatpush1.bf16.msra.mxu0 0
        %1546 = vmatprep.mubr.bf16.mxu0 0
        %1547 = vmatmul.mubr.bf16.gmra.mrb[0].mxu0 %v1454
        %v1548 = vpop.f32.mrb[0].mxu0
        %v1549 = vadd.f32 %v1500, %v1548
        %v1550 = vpop.f32.mrb[0].mxu0
        %v1551 = vpop.f32.mrb[0].mxu0
        %v1552 = vpop.f32.mrb[0].mxu0
        %1553 = vdwg.mxu0
        %v1554 = vpack.c.bf16 %v1491, %v1491
        %v1555 = vpack.c.bf16 %v1549, %v1549
        %vm1556 = vcmask 64512
        %v1558 = vsel %vm1556, %v1554, 0
        %v1561 = vsel %vm1556, %v1555, 0
        %1563 = vmatprep.subr.bf16.mxu0 0
        %1564 = vmatpush1.bf16.xpose.msra.mxu0 %v1561
        %1565 = vmatprep.subr.bf16.mxu0 0
        %1566 = vmatpush1.bf16.xpose.msra.mxu0 0
        %1567 = vmatprep.subr.bf16.mxu0 0
        %1568 = vmatpush1.bf16.xpose.msra.mxu0 0
        %1569 = vmatprep.subr.bf16.mxu0 0
        %1570 = vmatpush1.bf16.xpose.msra.mxu0 0
        %1571 = vmatprep.subr.bf16.mxu0 0
        %1572 = vmatpush1.bf16.xpose.msra.mxu0 0
        %1573 = vmatprep.subr.bf16.mxu0 0
        %1574 = vmatpush1.bf16.xpose.msra.mxu0 0
        %1575 = vmatprep.subr.bf16.mxu0 0
        %1576 = vmatpush1.bf16.xpose.msra.mxu0 0
        %1577 = vmatprep.subr.bf16.mxu0 0
        %1578 = vmatpush1.bf16.xpose.msra.mxu0 0
        %1579 = vmatprep.subr.bf16.mxu0 0
        %1580 = vmatpush1.bf16.xpose.msra.mxu0 0
        %1581 = vmatprep.subr.bf16.mxu0 0
        %1582 = vmatpush1.bf16.xpose.msra.mxu0 0
        %1583 = vmatprep.subr.bf16.mxu0 0
        %1584 = vmatpush1.bf16.xpose.msra.mxu0 0
        %1585 = vmatprep.subr.bf16.mxu0 0
        %1586 = vmatpush1.bf16.xpose.msra.mxu0 0
        %1587 = vmatprep.subr.bf16.mxu0 0
        %1588 = vmatpush1.bf16.xpose.msra.mxu0 0
        %1589 = vmatprep.subr.bf16.mxu0 0
        %1590 = vmatpush1.bf16.xpose.msra.mxu0 0
        %1591 = vmatprep.subr.bf16.mxu0 0
        %1592 = vmatpush1.bf16.xpose.msra.mxu0 0
        %1593 = vmatprep.subr.bf16.mxu0 0
        %1594 = vmatpush1.bf16.xpose.msra.mxu0 0
        %1595 = vmatprep.mubr.bf16.mxu0 0
        %1596 = vmatmul.mubr.bf16.gmra.mrb[0].mxu0 %v1558
        %v1597 = vpop.f32.mrb[0].mxu0
        %v1598 = vadd.f32 %v1417, %v1597
        %v1599 = vpop.f32.mrb[0].mxu0
        %v1600 = vpop.f32.mrb[0].mxu0
        %v1601 = vpop.f32.mrb[0].mxu0
        %1602 = vdwg.mxu0
        %v1603 = vsel %vm1556, %v1598, -inf
        %1604 = vmax.xlane.f32.xlu0 %v1603
        %v1605 = vpop.xlane.xlu0 %1604
        %v1606 = vsub.f32 %v1598, %v1605
        %v1607 = vmul.f32 %v1606, 1.442695
        %v1608 = vpow.pop %v1607
        %v1609 = vsel %vm1556, %v1608, 0.0
        %1610 = vadd.xlane.f32.xlu0 %v1609
        %v1611 = vpop.xlane.xlu0 %1610
        %v1612 = vrcp.pop %v1611
        %v1613 = vmul.f32 %v1608, %v1612
        %v1614 = vpack.c.bf16 %v1613, %v1613
        %1616 = vrot.lane.b32.xlu0 %v1555, 96
        %v1617 = vpop.permute.xlu0 %1616
        %v1619 = vsel %vm1556, %v1614, 0
        %vm1621 = vcmask 1043456
        %v1623 = vsel %vm1621, %v1617, 0
        %1625 = vmatprep.subr.bf16.mxu0 0
        %1626 = vmatpush1.bf16.msra.mxu0 %v1623
        %1627 = vmatprep.subr.bf16.mxu0 0
        %1628 = vmatpush1.bf16.msra.mxu0 0
        %1629 = vmatprep.subr.bf16.mxu0 0
        %1630 = vmatpush1.bf16.msra.mxu0 0
        %1631 = vmatprep.subr.bf16.mxu0 0
        %1632 = vmatpush1.bf16.msra.mxu0 0
        %1633 = vmatprep.subr.bf16.mxu0 0
        %1634 = vmatpush1.bf16.msra.mxu0 0
        %1635 = vmatprep.subr.bf16.mxu0 0
        %1636 = vmatpush1.bf16.msra.mxu0 0
        %1637 = vmatprep.subr.bf16.mxu0 0
        %1638 = vmatpush1.bf16.msra.mxu0 0
        %1639 = vmatprep.subr.bf16.mxu0 0
        %1640 = vmatpush1.bf16.msra.mxu0 0
        %1641 = vmatprep.subr.bf16.mxu0 0
        %1642 = vmatpush1.bf16.msra.mxu0 0
        %1643 = vmatprep.subr.bf16.mxu0 0
        %1644 = vmatpush1.bf16.msra.mxu0 0
        %1645 = vmatprep.subr.bf16.mxu0 0
        %1646 = vmatpush1.bf16.msra.mxu0 0
        %1647 = vmatprep.subr.bf16.mxu0 0
        %1648 = vmatpush1.bf16.msra.mxu0 0
        %1649 = vmatprep.subr.bf16.mxu0 0
        %1650 = vmatpush1.bf16.msra.mxu0 0
        %1651 = vmatprep.subr.bf16.mxu0 0
        %1652 = vmatpush1.bf16.msra.mxu0 0
        %1653 = vmatprep.subr.bf16.mxu0 0
        %1654 = vmatpush1.bf16.msra.mxu0 0
        %1655 = vmatprep.subr.bf16.mxu0 0
        %1656 = vmatpush1.bf16.msra.mxu0 0
        %1657 = vmatprep.mubr.bf16.mxu0 0
        %1658 = vmatmul.mubr.bf16.gmra.mrb[0].mxu0 %v1619
        %v1659 = vpop.f32.mrb[0].mxu0
        %v1660 = vadd.f32 0.0, %v1659
        %v1661 = vpop.f32.mrb[0].mxu0
        %v1662 = vpop.f32.mrb[0].mxu0
        %v1663 = vpop.f32.mrb[0].mxu0
        %1664 = vdwg.mxu0
        %1666 = vrot.lane.b32.xlu0 %v1554, 120
        %v1667 = vpop.permute.xlu0 %1666
        %1668 = vrot.lane.b32.xlu0 %v1555, 120
        %v1669 = vpop.permute.xlu0 %1668
        %v1671 = vsel %vm1556, %v1667, 0
        %v1674 = vsel %vm1556, %v1669, 0
        %1676 = vmatprep.subr.bf16.mxu0 0
        %1677 = vmatpush1.bf16.xpose.msra.mxu0 %v1674
        %1678 = vmatprep.subr.bf16.mxu0 0
        %1679 = vmatpush1.bf16.xpose.msra.mxu0 0
        %1680 = vmatprep.subr.bf16.mxu0 0
        %1681 = vmatpush1.bf16.xpose.msra.mxu0 0
        %1682 = vmatprep.subr.bf16.mxu0 0
        %1683 = vmatpush1.bf16.xpose.msra.mxu0 0
        %1684 = vmatprep.subr.bf16.mxu0 0
        %1685 = vmatpush1.bf16.xpose.msra.mxu0 0
        %1686 = vmatprep.subr.bf16.mxu0 0
        %1687 = vmatpush1.bf16.xpose.msra.mxu0 0
        %1688 = vmatprep.subr.bf16.mxu0 0
        %1689 = vmatpush1.bf16.xpose.msra.mxu0 0
        %1690 = vmatprep.subr.bf16.mxu0 0
        %1691 = vmatpush1.bf16.xpose.msra.mxu0 0
        %1692 = vmatprep.subr.bf16.mxu0 0
        %1693 = vmatpush1.bf16.xpose.msra.mxu0 0
        %1694 = vmatprep.subr.bf16.mxu0 0
        %1695 = vmatpush1.bf16.xpose.msra.mxu0 0
        %1696 = vmatprep.subr.bf16.mxu0 0
        %1697 = vmatpush1.bf16.xpose.msra.mxu0 0
        %1698 = vmatprep.subr.bf16.mxu0 0
        %1699 = vmatpush1.bf16.xpose.msra.mxu0 0
        %1700 = vmatprep.subr.bf16.mxu0 0
        %1701 = vmatpush1.bf16.xpose.msra.mxu0 0
        %1702 = vmatprep.subr.bf16.mxu0 0
        %1703 = vmatpush1.bf16.xpose.msra.mxu0 0
        %1704 = vmatprep.subr.bf16.mxu0 0
        %1705 = vmatpush1.bf16.xpose.msra.mxu0 0
        %1706 = vmatprep.subr.bf16.mxu0 0
        %1707 = vmatpush1.bf16.xpose.msra.mxu0 0
        %1708 = vmatprep.mubr.bf16.mxu0 0
        %1709 = vmatmul.mubr.bf16.gmra.mrb[0].mxu0 %v1671
        %v1710 = vpop.f32.mrb[0].mxu0
        %v1711 = vadd.f32 %v1417, %v1710
        %v1712 = vpop.f32.mrb[0].mxu0
        %v1713 = vpop.f32.mrb[0].mxu0
        %v1714 = vpop.f32.mrb[0].mxu0
        %1715 = vdwg.mxu0
        %v1716 = vsel %vm1556, %v1711, -inf
        %1717 = vmax.xlane.f32.xlu0 %v1716
        %v1718 = vpop.xlane.xlu0 %1717
        %v1719 = vsub.f32 %v1711, %v1718
        %v1720 = vmul.f32 %v1719, 1.442695
        %v1721 = vpow.pop %v1720
        %v1722 = vsel %vm1556, %v1721, 0.0
        %1723 = vadd.xlane.f32.xlu0 %v1722
        %v1724 = vpop.xlane.xlu0 %1723
        %v1725 = vrcp.pop %v1724
        %v1726 = vmul.f32 %v1721, %v1725
        %v1727 = vpack.c.bf16 %v1726, %v1726
        %1728 = vrot.lane.b32.xlu0 %v1555, 88
        %v1729 = vpop.permute.xlu0 %1728
        %v1731 = vsel %vm1556, %v1727, 0
        %v1734 = vsel %vm1621, %v1729, 0
        %1736 = vmatprep.subr.bf16.mxu0 0
        %1737 = vmatpush1.bf16.msra.mxu0 %v1734
        %1738 = vmatprep.subr.bf16.mxu0 0
        %1739 = vmatpush1.bf16.msra.mxu0 0
        %1740 = vmatprep.subr.bf16.mxu0 0
        %1741 = vmatpush1.bf16.msra.mxu0 0
        %1742 = vmatprep.subr.bf16.mxu0 0
        %1743 = vmatpush1.bf16.msra.mxu0 0
        %1744 = vmatprep.subr.bf16.mxu0 0
        %1745 = vmatpush1.bf16.msra.mxu0 0
        %1746 = vmatprep.subr.bf16.mxu0 0
        %1747 = vmatpush1.bf16.msra.mxu0 0
        %1748 = vmatprep.subr.bf16.mxu0 0
        %1749 = vmatpush1.bf16.msra.mxu0 0
        %1750 = vmatprep.subr.bf16.mxu0 0
        %1751 = vmatpush1.bf16.msra.mxu0 0
        %1752 = vmatprep.subr.bf16.mxu0 0
        %1753 = vmatpush1.bf16.msra.mxu0 0
        %1754 = vmatprep.subr.bf16.mxu0 0
        %1755 = vmatpush1.bf16.msra.mxu0 0
        %1756 = vmatprep.subr.bf16.mxu0 0
        %1757 = vmatpush1.bf16.msra.mxu0 0
        %1758 = vmatprep.subr.bf16.mxu0 0
        %1759 = vmatpush1.bf16.msra.mxu0 0
        %1760 = vmatprep.subr.bf16.mxu0 0
        %1761 = vmatpush1.bf16.msra.mxu0 0
        %1762 = vmatprep.subr.bf16.mxu0 0
        %1763 = vmatpush1.bf16.msra.mxu0 0
        %1764 = vmatprep.subr.bf16.mxu0 0
        %1765 = vmatpush1.bf16.msra.mxu0 0
        %1766 = vmatprep.subr.bf16.mxu0 0
        %1767 = vmatpush1.bf16.msra.mxu0 0
        %1768 = vmatprep.mubr.bf16.mxu0 0
        %1769 = vmatmul.mubr.bf16.gmra.mrb[0].mxu0 %v1731
        %v1770 = vpop.f32.mrb[0].mxu0
        %v1771 = vadd.f32 0.0, %v1770
        %v1772 = vpop.f32.mrb[0].mxu0
        %v1773 = vpop.f32.mrb[0].mxu0
        %v1774 = vpop.f32.mrb[0].mxu0
        %1775 = vdwg.mxu0
        %1776 = vrot.lane.b32.xlu0 %v1554, 112
        %v1777 = vpop.permute.xlu0 %1776
        %1778 = vrot.lane.b32.xlu0 %v1555, 112
        %v1779 = vpop.permute.xlu0 %1778
        %v1781 = vsel %vm1556, %v1777, 0
        %v1784 = vsel %vm1556, %v1779, 0
        %1786 = vmatprep.subr.bf16.mxu0 0
        %1787 = vmatpush1.bf16.xpose.msra.mxu0 %v1784
        %1788 = vmatprep.subr.bf16.mxu0 0
        %1789 = vmatpush1.bf16.xpose.msra.mxu0 0
        %1790 = vmatprep.subr.bf16.mxu0 0
        %1791 = vmatpush1.bf16.xpose.msra.mxu0 0
        %1792 = vmatprep.subr.bf16.mxu0 0
        %1793 = vmatpush1.bf16.xpose.msra.mxu0 0
        %1794 = vmatprep.subr.bf16.mxu0 0
        %1795 = vmatpush1.bf16.xpose.msra.mxu0 0
        %1796 = vmatprep.subr.bf16.mxu0 0
        %1797 = vmatpush1.bf16.xpose.msra.mxu0 0
        %1798 = vmatprep.subr.bf16.mxu0 0
        %1799 = vmatpush1.bf16.xpose.msra.mxu0 0
        %1800 = vmatprep.subr.bf16.mxu0 0
        %1801 = vmatpush1.bf16.xpose.msra.mxu0 0
        %1802 = vmatprep.subr.bf16.mxu0 0
        %1803 = vmatpush1.bf16.xpose.msra.mxu0 0
        %1804 = vmatprep.subr.bf16.mxu0 0
        %1805 = vmatpush1.bf16.xpose.msra.mxu0 0
        %1806 = vmatprep.subr.bf16.mxu0 0
        %1807 = vmatpush1.bf16.xpose.msra.mxu0 0
        %1808 = vmatprep.subr.bf16.mxu0 0
        %1809 = vmatpush1.bf16.xpose.msra.mxu0 0
        %1810 = vmatprep.subr.bf16.mxu0 0
        %1811 = vmatpush1.bf16.xpose.msra.mxu0 0
        %1812 = vmatprep.subr.bf16.mxu0 0
        %1813 = vmatpush1.bf16.xpose.msra.mxu0 0
        %1814 = vmatprep.subr.bf16.mxu0 0
        %1815 = vmatpush1.bf16.xpose.msra.mxu0 0
        %1816 = vmatprep.subr.bf16.mxu0 0
        %1817 = vmatpush1.bf16.xpose.msra.mxu0 0
        %1818 = vmatprep.mubr.bf16.mxu0 0
        %1819 = vmatmul.mubr.bf16.gmra.mrb[0].mxu0 %v1781
        %v1820 = vpop.f32.mrb[0].mxu0
        %v1821 = vadd.f32 %v1417, %v1820
        %v1822 = vpop.f32.mrb[0].mxu0
        %v1823 = vpop.f32.mrb[0].mxu0
        %v1824 = vpop.f32.mrb[0].mxu0
        %1825 = vdwg.mxu0
        %v1826 = vsel %vm1556, %v1821, -inf
        %1827 = vmax.xlane.f32.xlu0 %v1826
        %v1828 = vpop.xlane.xlu0 %1827
        %v1829 = vsub.f32 %v1821, %v1828
        %v1830 = vmul.f32 %v1829, 1.442695
        %v1831 = vpow.pop %v1830
        %v1832 = vsel %vm1556, %v1831, 0.0
        %1833 = vadd.xlane.f32.xlu0 %v1832
        %v1834 = vpop.xlane.xlu0 %1833
        %v1835 = vrcp.pop %v1834
        %v1836 = vmul.f32 %v1831, %v1835
        %v1837 = vpack.c.bf16 %v1836, %v1836
        %1838 = vrot.lane.b32.xlu0 %v1555, 80
        %v1839 = vpop.permute.xlu0 %1838
        %v1841 = vsel %vm1556, %v1837, 0
        %v1844 = vsel %vm1621, %v1839, 0
        %1846 = vmatprep.subr.bf16.mxu0 0
        %1847 = vmatpush1.bf16.msra.mxu0 %v1844
        %1848 = vmatprep.subr.bf16.mxu0 0
        %1849 = vmatpush1.bf16.msra.mxu0 0
        %1850 = vmatprep.subr.bf16.mxu0 0
        %1851 = vmatpush1.bf16.msra.mxu0 0
        %1852 = vmatprep.subr.bf16.mxu0 0
        %1853 = vmatpush1.bf16.msra.mxu0 0
        %1854 = vmatprep.subr.bf16.mxu0 0
        %1855 = vmatpush1.bf16.msra.mxu0 0
        %1856 = vmatprep.subr.bf16.mxu0 0
        %1857 = vmatpush1.bf16.msra.mxu0 0
        %1858 = vmatprep.subr.bf16.mxu0 0
        %1859 = vmatpush1.bf16.msra.mxu0 0
        %1860 = vmatprep.subr.bf16.mxu0 0
        %1861 = vmatpush1.bf16.msra.mxu0 0
        %1862 = vmatprep.subr.bf16.mxu0 0
        %1863 = vmatpush1.bf16.msra.mxu0 0
        %1864 = vmatprep.subr.bf16.mxu0 0
        %1865 = vmatpush1.bf16.msra.mxu0 0
        %1866 = vmatprep.subr.bf16.mxu0 0
        %1867 = vmatpush1.bf16.msra.mxu0 0
        %1868 = vmatprep.subr.bf16.mxu0 0
        %1869 = vmatpush1.bf16.msra.mxu0 0
        %1870 = vmatprep.subr.bf16.mxu0 0
        %1871 = vmatpush1.bf16.msra.mxu0 0
        %1872 = vmatprep.subr.bf16.mxu0 0
        %1873 = vmatpush1.bf16.msra.mxu0 0
        %1874 = vmatprep.subr.bf16.mxu0 0
        %1875 = vmatpush1.bf16.msra.mxu0 0
        %1876 = vmatprep.subr.bf16.mxu0 0
        %1877 = vmatpush1.bf16.msra.mxu0 0
        %1878 = vmatprep.mubr.bf16.mxu0 0
        %1879 = vmatmul.mubr.bf16.gmra.mrb[0].mxu0 %v1841
        %v1880 = vpop.f32.mrb[0].mxu0
        %v1881 = vadd.f32 0.0, %v1880
        %v1882 = vpop.f32.mrb[0].mxu0
        %v1883 = vpop.f32.mrb[0].mxu0
        %v1884 = vpop.f32.mrb[0].mxu0
        %1885 = vdwg.mxu0
        %1886 = vrot.lane.b32.xlu0 %v1554, 104
        %v1887 = vpop.permute.xlu0 %1886
        %1888 = vrot.lane.b32.xlu0 %v1555, 104
        %v1889 = vpop.permute.xlu0 %1888
        %v1891 = vsel %vm1556, %v1887, 0
        %v1894 = vsel %vm1556, %v1889, 0
        %1896 = vmatprep.subr.bf16.mxu0 0
        %1897 = vmatpush1.bf16.xpose.msra.mxu0 %v1894
        %1898 = vmatprep.subr.bf16.mxu0 0
        %1899 = vmatpush1.bf16.xpose.msra.mxu0 0
        %1900 = vmatprep.subr.bf16.mxu0 0
        %1901 = vmatpush1.bf16.xpose.msra.mxu0 0
        %1902 = vmatprep.subr.bf16.mxu0 0
        %1903 = vmatpush1.bf16.xpose.msra.mxu0 0
        %1904 = vmatprep.subr.bf16.mxu0 0
        %1905 = vmatpush1.bf16.xpose.msra.mxu0 0
        %1906 = vmatprep.subr.bf16.mxu0 0
        %1907 = vmatpush1.bf16.xpose.msra.mxu0 0
        %1908 = vmatprep.subr.bf16.mxu0 0
        %1909 = vmatpush1.bf16.xpose.msra.mxu0 0
        %1910 = vmatprep.subr.bf16.mxu0 0
        %1911 = vmatpush1.bf16.xpose.msra.mxu0 0
        %1912 = vmatprep.subr.bf16.mxu0 0
        %1913 = vmatpush1.bf16.xpose.msra.mxu0 0
        %1914 = vmatprep.subr.bf16.mxu0 0
        %1915 = vmatpush1.bf16.xpose.msra.mxu0 0
        %1916 = vmatprep.subr.bf16.mxu0 0
        %1917 = vmatpush1.bf16.xpose.msra.mxu0 0
        %1918 = vmatprep.subr.bf16.mxu0 0
        %1919 = vmatpush1.bf16.xpose.msra.mxu0 0
        %1920 = vmatprep.subr.bf16.mxu0 0
        %1921 = vmatpush1.bf16.xpose.msra.mxu0 0
        %1922 = vmatprep.subr.bf16.mxu0 0
        %1923 = vmatpush1.bf16.xpose.msra.mxu0 0
        %1924 = vmatprep.subr.bf16.mxu0 0
        %1925 = vmatpush1.bf16.xpose.msra.mxu0 0
        %1926 = vmatprep.subr.bf16.mxu0 0
        %1927 = vmatpush1.bf16.xpose.msra.mxu0 0
        %1928 = vmatprep.mubr.bf16.mxu0 0
        %1929 = vmatmul.mubr.bf16.gmra.mrb[0].mxu0 %v1891
        %v1930 = vpop.f32.mrb[0].mxu0
        %v1931 = vadd.f32 %v1417, %v1930
        %v1932 = vpop.f32.mrb[0].mxu0
        %v1933 = vpop.f32.mrb[0].mxu0
        %v1934 = vpop.f32.mrb[0].mxu0
        %1935 = vdwg.mxu0
        %v1936 = vsel %vm1556, %v1931, -inf
        %1937 = vmax.xlane.f32.xlu0 %v1936
        %v1938 = vpop.xlane.xlu0 %1937
        %v1939 = vsub.f32 %v1931, %v1938
        %v1940 = vmul.f32 %v1939, 1.442695
        %v1941 = vpow.pop %v1940
        %v1942 = vsel %vm1556, %v1941, 0.0
        %1943 = vadd.xlane.f32.xlu0 %v1942
        %v1944 = vpop.xlane.xlu0 %1943
        %v1945 = vrcp.pop %v1944
        %v1946 = vmul.f32 %v1941, %v1945
        %v1947 = vpack.c.bf16 %v1946, %v1946
        %1948 = vrot.lane.b32.xlu0 %v1555, 72
        %v1949 = vpop.permute.xlu0 %1948
        %v1951 = vsel %vm1556, %v1947, 0
        %v1954 = vsel %vm1621, %v1949, 0
        %1956 = vmatprep.subr.bf16.mxu0 0
        %1957 = vmatpush1.bf16.msra.mxu0 %v1954
        %1958 = vmatprep.subr.bf16.mxu0 0
        %1959 = vmatpush1.bf16.msra.mxu0 0
        %1960 = vmatprep.subr.bf16.mxu0 0
        %1961 = vmatpush1.bf16.msra.mxu0 0
        %1962 = vmatprep.subr.bf16.mxu0 0
        %1963 = vmatpush1.bf16.msra.mxu0 0
        %1964 = vmatprep.subr.bf16.mxu0 0
        %1965 = vmatpush1.bf16.msra.mxu0 0
        %1966 = vmatprep.subr.bf16.mxu0 0
        %1967 = vmatpush1.bf16.msra.mxu0 0
        %1968 = vmatprep.subr.bf16.mxu0 0
        %1969 = vmatpush1.bf16.msra.mxu0 0
        %1970 = vmatprep.subr.bf16.mxu0 0
        %1971 = vmatpush1.bf16.msra.mxu0 0
        %1972 = vmatprep.subr.bf16.mxu0 0
        %1973 = vmatpush1.bf16.msra.mxu0 0
        %1974 = vmatprep.subr.bf16.mxu0 0
        %1975 = vmatpush1.bf16.msra.mxu0 0
        %1976 = vmatprep.subr.bf16.mxu0 0
        %1977 = vmatpush1.bf16.msra.mxu0 0
        %1978 = vmatprep.subr.bf16.mxu0 0
        %1979 = vmatpush1.bf16.msra.mxu0 0
        %1980 = vmatprep.subr.bf16.mxu0 0
        %1981 = vmatpush1.bf16.msra.mxu0 0
        %1982 = vmatprep.subr.bf16.mxu0 0
        %1983 = vmatpush1.bf16.msra.mxu0 0
        %1984 = vmatprep.subr.bf16.mxu0 0
        %1985 = vmatpush1.bf16.msra.mxu0 0
        %1986 = vmatprep.subr.bf16.mxu0 0
        %1987 = vmatpush1.bf16.msra.mxu0 0
        %1988 = vmatprep.mubr.bf16.mxu0 0
        %1989 = vmatmul.mubr.bf16.gmra.mrb[0].mxu0 %v1951
        %v1990 = vpop.f32.mrb[0].mxu0
        %v1991 = vadd.f32 0.0, %v1990
        %v1992 = vpop.f32.mrb[0].mxu0
        %v1993 = vpop.f32.mrb[0].mxu0
        %v1994 = vpop.f32.mrb[0].mxu0
        %1995 = vdwg.mxu0
        %1997 = vrot.lane.b32.xlu0 %v1771, 8
        %v1998 = vpop.permute.xlu0 %1997
        %2001 = vrot.lane.b32.xlu0 %v1881, 16
        %v2002 = vpop.permute.xlu0 %2001
        %2005 = vrot.lane.b32.xlu0 %v1991, 24
        %v2006 = vpop.permute.xlu0 %2005
        %v2008 = vsel %vm1556, %v1660, %v1998
        %vm2009 = vcmask 130048
        %v2010 = vsel %vm2009, %v2008, %v2002
        %vm2011 = vcmask 195584
        %v2012 = vsel %vm2011, %v2010, %v2006
        %v2013 = vpack.c.bf16 %v2012, %v2012
        %v2015 = vlaneseq
        %v2016 = vshrl.u32 %v2015, 7
        %v2017 = vsub.s32 0, %v2016
        %v2018 = vrot.slane %v1432, %v2017
        %v2024 = vunpack.c.l.b16 %v1428
        %v2025 = vunpack.c.l.b16 %v1429
        %v2026 = vunpack.c.l.b16 %v1430
        %v2027 = vunpack.c.l.b16 %v1431
        %v2028 = vpack.c.b16 %v2025, %v2024
        %v2029 = vpack.c.b16 %v2027, %v2026
        %v2033 = vsel %vm1452, %v2013, 0
        %2035 = vmatprep.subr.bf16.mxu0 0
        %2036 = vmatpush1.bf16.msra.mxu0 %v2028
        %2037 = vmatprep.subr.bf16.mxu0 0
        %2038 = vmatpush1.bf16.msra.mxu0 %v2029
        %2039 = vmatprep.subr.bf16.mxu0 0
        %2040 = vmatpush1.bf16.msra.mxu0 0
        %2041 = vmatprep.subr.bf16.mxu0 0
        %2042 = vmatpush1.bf16.msra.mxu0 0
        %2043 = vmatprep.subr.bf16.mxu0 0
        %2044 = vmatpush1.bf16.msra.mxu0 0
        %2045 = vmatprep.subr.bf16.mxu0 0
        %2046 = vmatpush1.bf16.msra.mxu0 0
        %2047 = vmatprep.subr.bf16.mxu0 0
        %2048 = vmatpush1.bf16.msra.mxu0 0
        %2049 = vmatprep.subr.bf16.mxu0 0
        %2050 = vmatpush1.bf16.msra.mxu0 0
        %2051 = vmatprep.subr.bf16.mxu0 0
        %2052 = vmatpush1.bf16.msra.mxu0 0
        %2053 = vmatprep.subr.bf16.mxu0 0
        %2054 = vmatpush1.bf16.msra.mxu0 0
        %2055 = vmatprep.subr.bf16.mxu0 0
        %2056 = vmatpush1.bf16.msra.mxu0 0
        %2057 = vmatprep.subr.bf16.mxu0 0
        %2058 = vmatpush1.bf16.msra.mxu0 0
        %2059 = vmatprep.subr.bf16.mxu0 0
        %2060 = vmatpush1.bf16.msra.mxu0 0
        %2061 = vmatprep.subr.bf16.mxu0 0
        %2062 = vmatpush1.bf16.msra.mxu0 0
        %2063 = vmatprep.subr.bf16.mxu0 0
        %2064 = vmatpush1.bf16.msra.mxu0 0
        %2065 = vmatprep.subr.bf16.mxu0 0
        %2066 = vmatpush1.bf16.msra.mxu0 0
        %2067 = vmatprep.mubr.bf16.mxu0 0
        %2068 = vmatmul.mubr.bf16.gmra.mrb[0].mxu0 %v2033
        %v2069 = vpop.f32.mrb[0].mxu0
        %v2070 = vadd.f32 %v2018, %v2069
        %v2071 = vpop.f32.mrb[0].mxu0
        %v2072 = vpop.f32.mrb[0].mxu0
        %v2073 = vpop.f32.mrb[0].mxu0
        %2074 = vdwg.mxu0
        %v2075 = vadd.f32 %v1415, %v2070
        %v2076 = vld [vmem:[%s1391] sm:$0x1]
        %v2077 = vld [vmem:[%s1394] sm:$0x1]
        %v2078 = vsel %vm1452, %v2075, 0.0
        %2079 = vadd.xlane.f32.xlu0 %v2078
        %v2080 = vpop.xlane.xlu0 %2079
        %v2081 = vrcp.pop 32.0
        %v2082 = vmul.f32 %v2080, %v2081
        %v2083 = vsub.f32 %v2075, %v2082
        %v2084 = vmul.f32 %v2083, %v2083
        %v2085 = vsel %vm1452, %v2084, 0.0
        %2086 = vadd.xlane.f32.xlu0 %v2085
        %v2087 = vpop.xlane.xlu0 %2086
        %v2088 = vmul.f32 %v2087, %v2081
        %v2089 = vadd.f32 %v2088, 1e-05
        %v2090 = vrsqrt.pop %v2089
        %v2091 = vmul.f32 %v2083, %v2090
        %v2093 = vlaneseq
        %v2094 = vshrl.u32 %v2093, 7
        %v2095 = vsub.s32 0, %v2094
        %v2096 = vrot.slane %v2076, %v2095
        %v2098 = vmul.f32 %v2091, %v2096
        %v2100 = vlaneseq
        %v2101 = vshrl.u32 %v2100, 7
        %v2102 = vsub.s32 0, %v2101
        %v2103 = vrot.slane %v2077, %v2102
        %v2105 = vadd.f32 %v2098, %v2103
        %v2106 = vmax.f32 %v2105, 0.0
        %v2107 = vld [vmem:[#allocation9] sm:$0xff]
        %v2108 = vld [vmem:[%s1380] sm:$0xf]
        %v2109 = vld [vmem:[%s1380 + $0x4] sm:$0xf]
        %v2110 = vld [vmem:[%s1380 + $0x8] sm:$0xf]
        %v2111 = vld [vmem:[%s1380 + $0xc] sm:$0xf]
        %v2112 = vld [vmem:[%s1147] sm:$0x1]
        %v2113 = vld [vmem:[%s1156] sm:$0xf]
        %v2114 = vld [vmem:[%s1156 + $0x4] sm:$0xf]
        %v2115 = vld [vmem:[%s1156 + $0x8] sm:$0xf]
        %v2116 = vld [vmem:[%s1156 + $0xc] sm:$0xf]
        %v2117 = vld [vmem:[%s1164] sm:$0x1]
        %v2118 = vld [vmem:[%s1173] sm:$0xf]
        %v2119 = vld [vmem:[%s1173 + $0x4] sm:$0xf]
        %v2120 = vld [vmem:[%s1173 + $0x8] sm:$0xf]
        %v2121 = vld [vmem:[%s1173 + $0xc] sm:$0xf]
        %v2122 = vld [vmem:[%s1181] sm:$0x1]
        %v2123 = vpack.c.bf16 %v2106, %v2106
        %v2124 = vpack.c.bf16 %v1416, %v1416
        %v2126 = vlaneseq
        %v2127 = vshrl.u32 %v2126, 7
        %v2128 = vsub.s32 0, %v2127
        %v2129 = vrot.slane %v2112, %v2128
        %v2135 = vunpack.c.l.b16 %v2108
        %v2136 = vunpack.c.l.b16 %v2109
        %v2137 = vunpack.c.l.b16 %v2110
        %v2138 = vunpack.c.l.b16 %v2111
        %v2139 = vpack.c.b16 %v2136, %v2135
        %v2140 = vpack.c.b16 %v2138, %v2137
        %v2144 = vsel %vm1452, %v2123, 0
        %2146 = vmatprep.subr.bf16.mxu0 0
        %2147 = vmatpush1.bf16.msra.mxu0 %v2139
        %2148 = vmatprep.subr.bf16.mxu0 0
        %2149 = vmatpush1.bf16.msra.mxu0 %v2140
        %2150 = vmatprep.subr.bf16.mxu0 0
        %2151 = vmatpush1.bf16.msra.mxu0 0
        %2152 = vmatprep.subr.bf16.mxu0 0
        %2153 = vmatpush1.bf16.msra.mxu0 0
        %2154 = vmatprep.subr.bf16.mxu0 0
        %2155 = vmatpush1.bf16.msra.mxu0 0
        %2156 = vmatprep.subr.bf16.mxu0 0
        %2157 = vmatpush1.bf16.msra.mxu0 0
        %2158 = vmatprep.subr.bf16.mxu0 0
        %2159 = vmatpush1.bf16.msra.mxu0 0
        %2160 = vmatprep.subr.bf16.mxu0 0
        %2161 = vmatpush1.bf16.msra.mxu0 0
        %2162 = vmatprep.subr.bf16.mxu0 0
        %2163 = vmatpush1.bf16.msra.mxu0 0
        %2164 = vmatprep.subr.bf16.mxu0 0
        %2165 = vmatpush1.bf16.msra.mxu0 0
        %2166 = vmatprep.subr.bf16.mxu0 0
        %2167 = vmatpush1.bf16.msra.mxu0 0
        %2168 = vmatprep.subr.bf16.mxu0 0
        %2169 = vmatpush1.bf16.msra.mxu0 0
        %2170 = vmatprep.subr.bf16.mxu0 0
        %2171 = vmatpush1.bf16.msra.mxu0 0
        %2172 = vmatprep.subr.bf16.mxu0 0
        %2173 = vmatpush1.bf16.msra.mxu0 0
        %2174 = vmatprep.subr.bf16.mxu0 0
        %2175 = vmatpush1.bf16.msra.mxu0 0
        %2176 = vmatprep.subr.bf16.mxu0 0
        %2177 = vmatpush1.bf16.msra.mxu0 0
        %2178 = vmatprep.mubr.bf16.mxu0 0
        %2179 = vmatmul.mubr.bf16.gmra.mrb[0].mxu0 %v2144
        %v2180 = vpop.f32.mrb[0].mxu0
        %v2181 = vadd.f32 %v2129, %v2180
        %v2182 = vpop.f32.mrb[0].mxu0
        %v2183 = vpop.f32.mrb[0].mxu0
        %v2184 = vpop.f32.mrb[0].mxu0
        %2185 = vdwg.mxu0
        %v2187 = vlaneseq
        %v2188 = vshrl.u32 %v2187, 7
        %v2189 = vsub.s32 0, %v2188
        %v2190 = vrot.slane %v2117, %v2189
        %v2196 = vunpack.c.l.b16 %v2113
        %v2197 = vunpack.c.l.b16 %v2114
        %v2198 = vunpack.c.l.b16 %v2115
        %v2199 = vunpack.c.l.b16 %v2116
        %v2200 = vpack.c.b16 %v2197, %v2196
        %v2201 = vpack.c.b16 %v2199, %v2198
        %v2205 = vsel %vm1452, %v2124, 0
        %2207 = vmatprep.subr.bf16.mxu0 0
        %2208 = vmatpush1.bf16.msra.mxu0 %v2200
        %2209 = vmatprep.subr.bf16.mxu0 0
        %2210 = vmatpush1.bf16.msra.mxu0 %v2201
        %2211 = vmatprep.subr.bf16.mxu0 0
        %2212 = vmatpush1.bf16.msra.mxu0 0
        %2213 = vmatprep.subr.bf16.mxu0 0
        %2214 = vmatpush1.bf16.msra.mxu0 0
        %2215 = vmatprep.subr.bf16.mxu0 0
        %2216 = vmatpush1.bf16.msra.mxu0 0
        %2217 = vmatprep.subr.bf16.mxu0 0
        %2218 = vmatpush1.bf16.msra.mxu0 0
        %2219 = vmatprep.subr.bf16.mxu0 0
        %2220 = vmatpush1.bf16.msra.mxu0 0
        %2221 = vmatprep.subr.bf16.mxu0 0
        %2222 = vmatpush1.bf16.msra.mxu0 0
        %2223 = vmatprep.subr.bf16.mxu0 0
        %2224 = vmatpush1.bf16.msra.mxu0 0
        %2225 = vmatprep.subr.bf16.mxu0 0
        %2226 = vmatpush1.bf16.msra.mxu0 0
        %2227 = vmatprep.subr.bf16.mxu0 0
        %2228 = vmatpush1.bf16.msra.mxu0 0
        %2229 = vmatprep.subr.bf16.mxu0 0
        %2230 = vmatpush1.bf16.msra.mxu0 0
        %2231 = vmatprep.subr.bf16.mxu0 0
        %2232 = vmatpush1.bf16.msra.mxu0 0
        %2233 = vmatprep.subr.bf16.mxu0 0
        %2234 = vmatpush1.bf16.msra.mxu0 0
        %2235 = vmatprep.subr.bf16.mxu0 0
        %2236 = vmatpush1.bf16.msra.mxu0 0
        %2237 = vmatprep.subr.bf16.mxu0 0
        %2238 = vmatpush1.bf16.msra.mxu0 0
        %2239 = vmatprep.mubr.bf16.mxu0 0
        %2240 = vmatmul.mubr.bf16.gmra.mrb[0].mxu0 %v2205
        %v2241 = vpop.f32.mrb[0].mxu0
        %v2242 = vadd.f32 %v2190, %v2241
        %v2243 = vpop.f32.mrb[0].mxu0
        %v2244 = vpop.f32.mrb[0].mxu0
        %v2245 = vpop.f32.mrb[0].mxu0
        %2246 = vdwg.mxu0
        %v2247 = vpack.c.bf16 %v2181, %v2181
        %v2248 = vpack.c.bf16 %v2242, %v2242
        %v2250 = vsel %vm1556, %v2247, 0
        %v2253 = vsel %vm1556, %v2248, 0
        %2255 = vmatprep.subr.bf16.mxu0 0
        %2256 = vmatpush1.bf16.xpose.msra.mxu0 %v2253
        %2257 = vmatprep.subr.bf16.mxu0 0
        %2258 = vmatpush1.bf16.xpose.msra.mxu0 0
        %2259 = vmatprep.subr.bf16.mxu0 0
        %2260 = vmatpush1.bf16.xpose.msra.mxu0 0
        %2261 = vmatprep.subr.bf16.mxu0 0
        %2262 = vmatpush1.bf16.xpose.msra.mxu0 0
        %2263 = vmatprep.subr.bf16.mxu0 0
        %2264 = vmatpush1.bf16.xpose.msra.mxu0 0
        %2265 = vmatprep.subr.bf16.mxu0 0
        %2266 = vmatpush1.bf16.xpose.msra.mxu0 0
        %2267 = vmatprep.subr.bf16.mxu0 0
        %2268 = vmatpush1.bf16.xpose.msra.mxu0 0
        %2269 = vmatprep.subr.bf16.mxu0 0
        %2270 = vmatpush1.bf16.xpose.msra.mxu0 0
        %2271 = vmatprep.subr.bf16.mxu0 0
        %2272 = vmatpush1.bf16.xpose.msra.mxu0 0
        %2273 = vmatprep.subr.bf16.mxu0 0
        %2274 = vmatpush1.bf16.xpose.msra.mxu0 0
        %2275 = vmatprep.subr.bf16.mxu0 0
        %2276 = vmatpush1.bf16.xpose.msra.mxu0 0
        %2277 = vmatprep.subr.bf16.mxu0 0
        %2278 = vmatpush1.bf16.xpose.msra.mxu0 0
        %2279 = vmatprep.subr.bf16.mxu0 0
        %2280 = vmatpush1.bf16.xpose.msra.mxu0 0
        %2281 = vmatprep.subr.bf16.mxu0 0
        %2282 = vmatpush1.bf16.xpose.msra.mxu0 0
        %2283 = vmatprep.subr.bf16.mxu0 0
        %2284 = vmatpush1.bf16.xpose.msra.mxu0 0
        %2285 = vmatprep.subr.bf16.mxu0 0
        %2286 = vmatpush1.bf16.xpose.msra.mxu0 0
        %2287 = vmatprep.mubr.bf16.mxu0 0
        %2288 = vmatmul.mubr.bf16.gmra.mrb[0].mxu0 %v2250
        %v2289 = vpop.f32.mrb[0].mxu0
        %v2290 = vadd.f32 %v2107, %v2289
        %v2291 = vpop.f32.mrb[0].mxu0
        %v2292 = vpop.f32.mrb[0].mxu0
        %v2293 = vpop.f32.mrb[0].mxu0
        %2294 = vdwg.mxu0
        %v2295 = vsel %vm1556, %v2290, -inf
        %2296 = vmax.xlane.f32.xlu0 %v2295
        %v2297 = vpop.xlane.xlu0 %2296
        %v2298 = vsub.f32 %v2290, %v2297
        %v2299 = vmul.f32 %v2298, 1.442695
        %v2300 = vpow.pop %v2299
        %v2301 = vsel %vm1556, %v2300, 0.0
        %2302 = vadd.xlane.f32.xlu0 %v2301
        %v2303 = vpop.xlane.xlu0 %2302
        %v2304 = vrcp.pop %v2303
        %v2305 = vmul.f32 %v2300, %v2304
        %v2306 = vpack.c.bf16 %v2305, %v2305
        %2308 = vrot.lane.b32.xlu0 %v2248, 96
        %v2309 = vpop.permute.xlu0 %2308
        %v2311 = vsel %vm1556, %v2306, 0
        %v2314 = vsel %vm1621, %v2309, 0
        %2316 = vmatprep.subr.bf16.mxu0 0
        %2317 = vmatpush1.bf16.msra.mxu0 %v2314
        %2318 = vmatprep.subr.bf16.mxu0 0
        %2319 = vmatpush1.bf16.msra.mxu0 0
        %2320 = vmatprep.subr.bf16.mxu0 0
        %2321 = vmatpush1.bf16.msra.mxu0 0
        %2322 = vmatprep.subr.bf16.mxu0 0
        %2323 = vmatpush1.bf16.msra.mxu0 0
        %2324 = vmatprep.subr.bf16.mxu0 0
        %2325 = vmatpush1.bf16.msra.mxu0 0
        %2326 = vmatprep.subr.bf16.mxu0 0
        %2327 = vmatpush1.bf16.msra.mxu0 0
        %2328 = vmatprep.subr.bf16.mxu0 0
        %2329 = vmatpush1.bf16.msra.mxu0 0
        %2330 = vmatprep.subr.bf16.mxu0 0
        %2331 = vmatpush1.bf16.msra.mxu0 0
        %2332 = vmatprep.subr.bf16.mxu0 0
        %2333 = vmatpush1.bf16.msra.mxu0 0
        %2334 = vmatprep.subr.bf16.mxu0 0
        %2335 = vmatpush1.bf16.msra.mxu0 0
        %2336 = vmatprep.subr.bf16.mxu0 0
        %2337 = vmatpush1.bf16.msra.mxu0 0
        %2338 = vmatprep.subr.bf16.mxu0 0
        %2339 = vmatpush1.bf16.msra.mxu0 0
        %2340 = vmatprep.subr.bf16.mxu0 0
        %2341 = vmatpush1.bf16.msra.mxu0 0
        %2342 = vmatprep.subr.bf16.mxu0 0
        %2343 = vmatpush1.bf16.msra.mxu0 0
        %2344 = vmatprep.subr.bf16.mxu0 0
        %2345 = vmatpush1.bf16.msra.mxu0 0
        %2346 = vmatprep.subr.bf16.mxu0 0
        %2347 = vmatpush1.bf16.msra.mxu0 0
        %2348 = vmatprep.mubr.bf16.mxu0 0
        %2349 = vmatmul.mubr.bf16.gmra.mrb[0].mxu0 %v2311
        %v2350 = vpop.f32.mrb[0].mxu0
        %v2351 = vadd.f32 0.0, %v2350
        %v2352 = vpop.f32.mrb[0].mxu0
        %v2353 = vpop.f32.mrb[0].mxu0
        %v2354 = vpop.f32.mrb[0].mxu0
        %2355 = vdwg.mxu0
        %2357 = vrot.lane.b32.xlu0 %v2247, 120
        %v2358 = vpop.permute.xlu0 %2357
        %2359 = vrot.lane.b32.xlu0 %v2248, 120
        %v2360 = vpop.permute.xlu0 %2359
        %v2362 = vsel %vm1556, %v2358, 0
        %v2365 = vsel %vm1556, %v2360, 0
        %2367 = vmatprep.subr.bf16.mxu0 0
        %2368 = vmatpush1.bf16.xpose.msra.mxu0 %v2365
        %2369 = vmatprep.subr.bf16.mxu0 0
        %2370 = vmatpush1.bf16.xpose.msra.mxu0 0
        %2371 = vmatprep.subr.bf16.mxu0 0
        %2372 = vmatpush1.bf16.xpose.msra.mxu0 0
        %2373 = vmatprep.subr.bf16.mxu0 0
        %2374 = vmatpush1.bf16.xpose.msra.mxu0 0
        %2375 = vmatprep.subr.bf16.mxu0 0
        %2376 = vmatpush1.bf16.xpose.msra.mxu0 0
        %2377 = vmatprep.subr.bf16.mxu0 0
        %2378 = vmatpush1.bf16.xpose.msra.mxu0 0
        %2379 = vmatprep.subr.bf16.mxu0 0
        %2380 = vmatpush1.bf16.xpose.msra.mxu0 0
        %2381 = vmatprep.subr.bf16.mxu0 0
        %2382 = vmatpush1.bf16.xpose.msra.mxu0 0
        %2383 = vmatprep.subr.bf16.mxu0 0
        %2384 = vmatpush1.bf16.xpose.msra.mxu0 0
        %2385 = vmatprep.subr.bf16.mxu0 0
        %2386 = vmatpush1.bf16.xpose.msra.mxu0 0
        %2387 = vmatprep.subr.bf16.mxu0 0
        %2388 = vmatpush1.bf16.xpose.msra.mxu0 0
        %2389 = vmatprep.subr.bf16.mxu0 0
        %2390 = vmatpush1.bf16.xpose.msra.mxu0 0
        %2391 = vmatprep.subr.bf16.mxu0 0
        %2392 = vmatpush1.bf16.xpose.msra.mxu0 0
        %2393 = vmatprep.subr.bf16.mxu0 0
        %2394 = vmatpush1.bf16.xpose.msra.mxu0 0
        %2395 = vmatprep.subr.bf16.mxu0 0
        %2396 = vmatpush1.bf16.xpose.msra.mxu0 0
        %2397 = vmatprep.subr.bf16.mxu0 0
        %2398 = vmatpush1.bf16.xpose.msra.mxu0 0
        %2399 = vmatprep.mubr.bf16.mxu0 0
        %2400 = vmatmul.mubr.bf16.gmra.mrb[0].mxu0 %v2362
        %v2401 = vpop.f32.mrb[0].mxu0
        %v2402 = vadd.f32 %v2107, %v2401
        %v2403 = vpop.f32.mrb[0].mxu0
        %v2404 = vpop.f32.mrb[0].mxu0
        %v2405 = vpop.f32.mrb[0].mxu0
        %2406 = vdwg.mxu0
        %v2407 = vsel %vm1556, %v2402, -inf
        %2408 = vmax.xlane.f32.xlu0 %v2407
        %v2409 = vpop.xlane.xlu0 %2408
        %v2410 = vsub.f32 %v2402, %v2409
        %v2411 = vmul.f32 %v2410, 1.442695
        %v2412 = vpow.pop %v2411
        %v2413 = vsel %vm1556, %v2412, 0.0
        %2414 = vadd.xlane.f32.xlu0 %v2413
        %v2415 = vpop.xlane.xlu0 %2414
        %v2416 = vrcp.pop %v2415
        %v2417 = vmul.f32 %v2412, %v2416
        %v2418 = vpack.c.bf16 %v2417, %v2417
        %2419 = vrot.lane.b32.xlu0 %v2248, 88
        %v2420 = vpop.permute.xlu0 %2419
        %v2422 = vsel %vm1556, %v2418, 0
        %v2425 = vsel %vm1621, %v2420, 0
        %2427 = vmatprep.subr.bf16.mxu0 0
        %2428 = vmatpush1.bf16.msra.mxu0 %v2425
        %2429 = vmatprep.subr.bf16.mxu0 0
        %2430 = vmatpush1.bf16.msra.mxu0 0
        %2431 = vmatprep.subr.bf16.mxu0 0
        %2432 = vmatpush1.bf16.msra.mxu0 0
        %2433 = vmatprep.subr.bf16.mxu0 0
        %2434 = vmatpush1.bf16.msra.mxu0 0
        %2435 = vmatprep.subr.bf16.mxu0 0
        %2436 = vmatpush1.bf16.msra.mxu0 0
        %2437 = vmatprep.subr.bf16.mxu0 0
        %2438 = vmatpush1.bf16.msra.mxu0 0
        %2439 = vmatprep.subr.bf16.mxu0 0
        %2440 = vmatpush1.bf16.msra.mxu0 0
        %2441 = vmatprep.subr.bf16.mxu0 0
        %2442 = vmatpush1.bf16.msra.mxu0 0
        %2443 = vmatprep.subr.bf16.mxu0 0
        %2444 = vmatpush1.bf16.msra.mxu0 0
        %2445 = vmatprep.subr.bf16.mxu0 0
        %2446 = vmatpush1.bf16.msra.mxu0 0
        %2447 = vmatprep.subr.bf16.mxu0 0
        %2448 = vmatpush1.bf16.msra.mxu0 0
        %2449 = vmatprep.subr.bf16.mxu0 0
        %2450 = vmatpush1.bf16.msra.mxu0 0
        %2451 = vmatprep.subr.bf16.mxu0 0
        %2452 = vmatpush1.bf16.msra.mxu0 0
        %2453 = vmatprep.subr.bf16.mxu0 0
        %2454 = vmatpush1.bf16.msra.mxu0 0
        %2455 = vmatprep.subr.bf16.mxu0 0
        %2456 = vmatpush1.bf16.msra.mxu0 0
        %2457 = vmatprep.subr.bf16.mxu0 0
        %2458 = vmatpush1.bf16.msra.mxu0 0
        %2459 = vmatprep.mubr.bf16.mxu0 0
        %2460 = vmatmul.mubr.bf16.gmra.mrb[0].mxu0 %v2422
        %v2461 = vpop.f32.mrb[0].mxu0
        %v2462 = vadd.f32 0.0, %v2461
        %v2463 = vpop.f32.mrb[0].mxu0
        %v2464 = vpop.f32.mrb[0].mxu0
        %v2465 = vpop.f32.mrb[0].mxu0
        %2466 = vdwg.mxu0
        %2467 = vrot.lane.b32.xlu0 %v2247, 112
        %v2468 = vpop.permute.xlu0 %2467
        %2469 = vrot.lane.b32.xlu0 %v2248, 112
        %v2470 = vpop.permute.xlu0 %2469
        %v2472 = vsel %vm1556, %v2468, 0
        %v2475 = vsel %vm1556, %v2470, 0
        %2477 = vmatprep.subr.bf16.mxu0 0
        %2478 = vmatpush1.bf16.xpose.msra.mxu0 %v2475
        %2479 = vmatprep.subr.bf16.mxu0 0
        %2480 = vmatpush1.bf16.xpose.msra.mxu0 0
        %2481 = vmatprep.subr.bf16.mxu0 0
        %2482 = vmatpush1.bf16.xpose.msra.mxu0 0
        %2483 = vmatprep.subr.bf16.mxu0 0
        %2484 = vmatpush1.bf16.xpose.msra.mxu0 0
        %2485 = vmatprep.subr.bf16.mxu0 0
        %2486 = vmatpush1.bf16.xpose.msra.mxu0 0
        %2487 = vmatprep.subr.bf16.mxu0 0
        %2488 = vmatpush1.bf16.xpose.msra.mxu0 0
        %2489 = vmatprep.subr.bf16.mxu0 0
        %2490 = vmatpush1.bf16.xpose.msra.mxu0 0
        %2491 = vmatprep.subr.bf16.mxu0 0
        %2492 = vmatpush1.bf16.xpose.msra.mxu0 0
        %2493 = vmatprep.subr.bf16.mxu0 0
        %2494 = vmatpush1.bf16.xpose.msra.mxu0 0
        %2495 = vmatprep.subr.bf16.mxu0 0
        %2496 = vmatpush1.bf16.xpose.msra.mxu0 0
        %2497 = vmatprep.subr.bf16.mxu0 0
        %2498 = vmatpush1.bf16.xpose.msra.mxu0 0
        %2499 = vmatprep.subr.bf16.mxu0 0
        %2500 = vmatpush1.bf16.xpose.msra.mxu0 0
        %2501 = vmatprep.subr.bf16.mxu0 0
        %2502 = vmatpush1.bf16.xpose.msra.mxu0 0
        %2503 = vmatprep.subr.bf16.mxu0 0
        %2504 = vmatpush1.bf16.xpose.msra.mxu0 0
        %2505 = vmatprep.subr.bf16.mxu0 0
        %2506 = vmatpush1.bf16.xpose.msra.mxu0 0
        %2507 = vmatprep.subr.bf16.mxu0 0
        %2508 = vmatpush1.bf16.xpose.msra.mxu0 0
        %2509 = vmatprep.mubr.bf16.mxu0 0
        %2510 = vmatmul.mubr.bf16.gmra.mrb[0].mxu0 %v2472
        %v2511 = vpop.f32.mrb[0].mxu0
        %v2512 = vadd.f32 %v2107, %v2511
        %v2513 = vpop.f32.mrb[0].mxu0
        %v2514 = vpop.f32.mrb[0].mxu0
        %v2515 = vpop.f32.mrb[0].mxu0
        %2516 = vdwg.mxu0
        %v2517 = vsel %vm1556, %v2512, -inf
        %2518 = vmax.xlane.f32.xlu0 %v2517
        %v2519 = vpop.xlane.xlu0 %2518
        %v2520 = vsub.f32 %v2512, %v2519
        %v2521 = vmul.f32 %v2520, 1.442695
        %v2522 = vpow.pop %v2521
        %v2523 = vsel %vm1556, %v2522, 0.0
        %2524 = vadd.xlane.f32.xlu0 %v2523
        %v2525 = vpop.xlane.xlu0 %2524
        %v2526 = vrcp.pop %v2525
        %v2527 = vmul.f32 %v2522, %v2526
        %v2528 = vpack.c.bf16 %v2527, %v2527
        %2529 = vrot.lane.b32.xlu0 %v2248, 80
        %v2530 = vpop.permute.xlu0 %2529
        %v2532 = vsel %vm1556, %v2528, 0
        %v2535 = vsel %vm1621, %v2530, 0
        %2537 = vmatprep.subr.bf16.mxu0 0
        %2538 = vmatpush1.bf16.msra.mxu0 %v2535
        %2539 = vmatprep.subr.bf16.mxu0 0
        %2540 = vmatpush1.bf16.msra.mxu0 0
        %2541 = vmatprep.subr.bf16.mxu0 0
        %2542 = vmatpush1.bf16.msra.mxu0 0
        %2543 = vmatprep.subr.bf16.mxu0 0
        %2544 = vmatpush1.bf16.msra.mxu0 0
        %2545 = vmatprep.subr.bf16.mxu0 0
        %2546 = vmatpush1.bf16.msra.mxu0 0
        %2547 = vmatprep.subr.bf16.mxu0 0
        %2548 = vmatpush1.bf16.msra.mxu0 0
        %2549 = vmatprep.subr.bf16.mxu0 0
        %2550 = vmatpush1.bf16.msra.mxu0 0
        %2551 = vmatprep.subr.bf16.mxu0 0
        %2552 = vmatpush1.bf16.msra.mxu0 0
        %2553 = vmatprep.subr.bf16.mxu0 0
        %2554 = vmatpush1.bf16.msra.mxu0 0
        %2555 = vmatprep.subr.bf16.mxu0 0
        %2556 = vmatpush1.bf16.msra.mxu0 0
        %2557 = vmatprep.subr.bf16.mxu0 0
        %2558 = vmatpush1.bf16.msra.mxu0 0
        %2559 = vmatprep.subr.bf16.mxu0 0
        %2560 = vmatpush1.bf16.msra.mxu0 0
        %2561 = vmatprep.subr.bf16.mxu0 0
        %2562 = vmatpush1.bf16.msra.mxu0 0
        %2563 = vmatprep.subr.bf16.mxu0 0
        %2564 = vmatpush1.bf16.msra.mxu0 0
        %2565 = vmatprep.subr.bf16.mxu0 0
        %2566 = vmatpush1.bf16.msra.mxu0 0
        %2567 = vmatprep.subr.bf16.mxu0 0
        %2568 = vmatpush1.bf16.msra.mxu0 0
        %2569 = vmatprep.mubr.bf16.mxu0 0
        %2570 = vmatmul.mubr.bf16.gmra.mrb[0].mxu0 %v2532
        %v2571 = vpop.f32.mrb[0].mxu0
        %v2572 = vadd.f32 0.0, %v2571
        %v2573 = vpop.f32.mrb[0].mxu0
        %v2574 = vpop.f32.mrb[0].mxu0
        %v2575 = vpop.f32.mrb[0].mxu0
        %2576 = vdwg.mxu0
        %2577 = vrot.lane.b32.xlu0 %v2247, 104
        %v2578 = vpop.permute.xlu0 %2577
        %2579 = vrot.lane.b32.xlu0 %v2248, 104
        %v2580 = vpop.permute.xlu0 %2579
        %v2582 = vsel %vm1556, %v2578, 0
        %v2585 = vsel %vm1556, %v2580, 0
        %2587 = vmatprep.subr.bf16.mxu0 0
        %2588 = vmatpush1.bf16.xpose.msra.mxu0 %v2585
        %2589 = vmatprep.subr.bf16.mxu0 0
        %2590 = vmatpush1.bf16.xpose.msra.mxu0 0
        %2591 = vmatprep.subr.bf16.mxu0 0
        %2592 = vmatpush1.bf16.xpose.msra.mxu0 0
        %2593 = vmatprep.subr.bf16.mxu0 0
        %2594 = vmatpush1.bf16.xpose.msra.mxu0 0
        %2595 = vmatprep.subr.bf16.mxu0 0
        %2596 = vmatpush1.bf16.xpose.msra.mxu0 0
        %2597 = vmatprep.subr.bf16.mxu0 0
        %2598 = vmatpush1.bf16.xpose.msra.mxu0 0
        %2599 = vmatprep.subr.bf16.mxu0 0
        %2600 = vmatpush1.bf16.xpose.msra.mxu0 0
        %2601 = vmatprep.subr.bf16.mxu0 0
        %2602 = vmatpush1.bf16.xpose.msra.mxu0 0
        %2603 = vmatprep.subr.bf16.mxu0 0
        %2604 = vmatpush1.bf16.xpose.msra.mxu0 0
        %2605 = vmatprep.subr.bf16.mxu0 0
        %2606 = vmatpush1.bf16.xpose.msra.mxu0 0
        %2607 = vmatprep.subr.bf16.mxu0 0
        %2608 = vmatpush1.bf16.xpose.msra.mxu0 0
        %2609 = vmatprep.subr.bf16.mxu0 0
        %2610 = vmatpush1.bf16.xpose.msra.mxu0 0
        %2611 = vmatprep.subr.bf16.mxu0 0
        %2612 = vmatpush1.bf16.xpose.msra.mxu0 0
        %2613 = vmatprep.subr.bf16.mxu0 0
        %2614 = vmatpush1.bf16.xpose.msra.mxu0 0
        %2615 = vmatprep.subr.bf16.mxu0 0
        %2616 = vmatpush1.bf16.xpose.msra.mxu0 0
        %2617 = vmatprep.subr.bf16.mxu0 0
        %2618 = vmatpush1.bf16.xpose.msra.mxu0 0
        %2619 = vmatprep.mubr.bf16.mxu0 0
        %2620 = vmatmul.mubr.bf16.gmra.mrb[0].mxu0 %v2582
        %v2621 = vpop.f32.mrb[0].mxu0
        %v2622 = vadd.f32 %v2107, %v2621
        %v2623 = vpop.f32.mrb[0].mxu0
        %v2624 = vpop.f32.mrb[0].mxu0
        %v2625 = vpop.f32.mrb[0].mxu0
        %2626 = vdwg.mxu0
        %v2627 = vsel %vm1556, %v2622, -inf
        %2628 = vmax.xlane.f32.xlu0 %v2627
        %v2629 = vpop.xlane.xlu0 %2628
        %v2630 = vsub.f32 %v2622, %v2629
        %v2631 = vmul.f32 %v2630, 1.442695
        %v2632 = vpow.pop %v2631
        %v2633 = vsel %vm1556, %v2632, 0.0
        %2634 = vadd.xlane.f32.xlu0 %v2633
        %v2635 = vpop.xlane.xlu0 %2634
        %v2636 = vrcp.pop %v2635
        %v2637 = vmul.f32 %v2632, %v2636
        %v2638 = vpack.c.bf16 %v2637, %v2637
        %2639 = vrot.lane.b32.xlu0 %v2248, 72
        %v2640 = vpop.permute.xlu0 %2639
        %v2642 = vsel %vm1556, %v2638, 0
        %v2645 = vsel %vm1621, %v2640, 0
        %2647 = vmatprep.subr.bf16.mxu0 0
        %2648 = vmatpush1.bf16.msra.mxu0 %v2645
        %2649 = vmatprep.subr.bf16.mxu0 0
        %2650 = vmatpush1.bf16.msra.mxu0 0
        %2651 = vmatprep.subr.bf16.mxu0 0
        %2652 = vmatpush1.bf16.msra.mxu0 0
        %2653 = vmatprep.subr.bf16.mxu0 0
        %2654 = vmatpush1.bf16.msra.mxu0 0
        %2655 = vmatprep.subr.bf16.mxu0 0
        %2656 = vmatpush1.bf16.msra.mxu0 0
        %2657 = vmatprep.subr.bf16.mxu0 0
        %2658 = vmatpush1.bf16.msra.mxu0 0
        %2659 = vmatprep.subr.bf16.mxu0 0
        %2660 = vmatpush1.bf16.msra.mxu0 0
        %2661 = vmatprep.subr.bf16.mxu0 0
        %2662 = vmatpush1.bf16.msra.mxu0 0
        %2663 = vmatprep.subr.bf16.mxu0 0
        %2664 = vmatpush1.bf16.msra.mxu0 0
        %2665 = vmatprep.subr.bf16.mxu0 0
        %2666 = vmatpush1.bf16.msra.mxu0 0
        %2667 = vmatprep.subr.bf16.mxu0 0
        %2668 = vmatpush1.bf16.msra.mxu0 0
        %2669 = vmatprep.subr.bf16.mxu0 0
        %2670 = vmatpush1.bf16.msra.mxu0 0
        %2671 = vmatprep.subr.bf16.mxu0 0
        %2672 = vmatpush1.bf16.msra.mxu0 0
        %2673 = vmatprep.subr.bf16.mxu0 0
        %2674 = vmatpush1.bf16.msra.mxu0 0
        %2675 = vmatprep.subr.bf16.mxu0 0
        %2676 = vmatpush1.bf16.msra.mxu0 0
        %2677 = vmatprep.subr.bf16.mxu0 0
        %2678 = vmatpush1.bf16.msra.mxu0 0
        %2679 = vmatprep.mubr.bf16.mxu0 0
        %2680 = vmatmul.mubr.bf16.gmra.mrb[0].mxu0 %v2642
        %v2681 = vpop.f32.mrb[0].mxu0
        %v2682 = vadd.f32 0.0, %v2681
        %v2683 = vpop.f32.mrb[0].mxu0
        %v2684 = vpop.f32.mrb[0].mxu0
        %v2685 = vpop.f32.mrb[0].mxu0
        %2686 = vdwg.mxu0
        %2688 = vrot.lane.b32.xlu0 %v2462, 8
        %v2689 = vpop.permute.xlu0 %2688
        %2692 = vrot.lane.b32.xlu0 %v2572, 16
        %v2693 = vpop.permute.xlu0 %2692
        %2696 = vrot.lane.b32.xlu0 %v2682, 24
        %v2697 = vpop.permute.xlu0 %2696
        %v2699 = vsel %vm1556, %v2351, %v2689
        %v2700 = vsel %vm2009, %v2699, %v2693
        %v2701 = vsel %vm2011, %v2700, %v2697
        %v2702 = vpack.c.bf16 %v2701, %v2701
        %v2704 = vlaneseq
        %v2705 = vshrl.u32 %v2704, 7
        %v2706 = vsub.s32 0, %v2705
        %v2707 = vrot.slane %v2122, %v2706
        %v2713 = vunpack.c.l.b16 %v2118
        %v2714 = vunpack.c.l.b16 %v2119
        %v2715 = vunpack.c.l.b16 %v2120
        %v2716 = vunpack.c.l.b16 %v2121
        %v2717 = vpack.c.b16 %v2714, %v2713
        %v2718 = vpack.c.b16 %v2716, %v2715
        %v2722 = vsel %vm1452, %v2702, 0
        %2724 = vmatprep.subr.bf16.mxu0 0
        %2725 = vmatpush1.bf16.msra.mxu0 %v2717
        %2726 = vmatprep.subr.bf16.mxu0 0
        %2727 = vmatpush1.bf16.msra.mxu0 %v2718
        %2728 = vmatprep.subr.bf16.mxu0 0
        %2729 = vmatpush1.bf16.msra.mxu0 0
        %2730 = vmatprep.subr.bf16.mxu0 0
        %2731 = vmatpush1.bf16.msra.mxu0 0
        %2732 = vmatprep.subr.bf16.mxu0 0
        %2733 = vmatpush1.bf16.msra.mxu0 0
        %2734 = vmatprep.subr.bf16.mxu0 0
        %2735 = vmatpush1.bf16.msra.mxu0 0
        %2736 = vmatprep.subr.bf16.mxu0 0
        %2737 = vmatpush1.bf16.msra.mxu0 0
        %2738 = vmatprep.subr.bf16.mxu0 0
        %2739 = vmatpush1.bf16.msra.mxu0 0
        %2740 = vmatprep.subr.bf16.mxu0 0
        %2741 = vmatpush1.bf16.msra.mxu0 0
        %2742 = vmatprep.subr.bf16.mxu0 0
        %2743 = vmatpush1.bf16.msra.mxu0 0
        %2744 = vmatprep.subr.bf16.mxu0 0
        %2745 = vmatpush1.bf16.msra.mxu0 0
        %2746 = vmatprep.subr.bf16.mxu0 0
        %2747 = vmatpush1.bf16.msra.mxu0 0
        %2748 = vmatprep.subr.bf16.mxu0 0
        %2749 = vmatpush1.bf16.msra.mxu0 0
        %2750 = vmatprep.subr.bf16.mxu0 0
        %2751 = vmatpush1.bf16.msra.mxu0 0
        %2752 = vmatprep.subr.bf16.mxu0 0
        %2753 = vmatpush1.bf16.msra.mxu0 0
        %2754 = vmatprep.subr.bf16.mxu0 0
        %2755 = vmatpush1.bf16.msra.mxu0 0
        %2756 = vmatprep.mubr.bf16.mxu0 0
        %2757 = vmatmul.mubr.bf16.gmra.mrb[0].mxu0 %v2722
        %v2758 = vpop.f32.mrb[0].mxu0
        %v2759 = vadd.f32 %v2707, %v2758
        %v2760 = vpop.f32.mrb[0].mxu0
        %v2761 = vpop.f32.mrb[0].mxu0
        %v2762 = vpop.f32.mrb[0].mxu0
        %2763 = vdwg.mxu0
        %v2764 = vadd.f32 %v2106, %v2759
        %v2765 = vld [vmem:[%s1397] sm:$0x1]
        %v2766 = vld [vmem:[%s1400] sm:$0x1]
        %v2767 = vsel %vm1452, %v2764, 0.0
        %2768 = vadd.xlane.f32.xlu0 %v2767
        %v2769 = vpop.xlane.xlu0 %2768
        %v2770 = vmul.f32 %v2769, %v2081
        %v2771 = vsub.f32 %v2764, %v2770
        %v2772 = vmul.f32 %v2771, %v2771
        %v2773 = vsel %vm1452, %v2772, 0.0
        %2774 = vadd.xlane.f32.xlu0 %v2773
        %v2775 = vpop.xlane.xlu0 %2774
        %v2776 = vmul.f32 %v2775, %v2081
        %v2777 = vadd.f32 %v2776, 1e-05
        %v2778 = vrsqrt.pop %v2777
        %v2779 = vmul.f32 %v2771, %v2778
        %v2781 = vlaneseq
        %v2782 = vshrl.u32 %v2781, 7
        %v2783 = vsub.s32 0, %v2782
        %v2784 = vrot.slane %v2765, %v2783
        %v2786 = vmul.f32 %v2779, %v2784
        %v2788 = vlaneseq
        %v2789 = vshrl.u32 %v2788, 7
        %v2790 = vsub.s32 0, %v2789
        %v2791 = vrot.slane %v2766, %v2790
        %v2793 = vadd.f32 %v2786, %v2791
        %v2794 = vmax.f32 %v2793, 0.0
        %v2795 = vpack.c.bf16 %v2794, %v2794
        %v2796 = vld [vmem:[%s1190] sm:$0xf]
        %v2797 = vld [vmem:[%s1190 + $0x4] sm:$0xf]
        %v2798 = vld [vmem:[%s1190 + $0x8] sm:$0xf]
        %v2799 = vld [vmem:[%s1190 + $0xc] sm:$0xf]
        %v2800 = vld [vmem:[%s1198] sm:$0x1]
        %v2802 = vlaneseq
        %v2803 = vshrl.u32 %v2802, 7
        %v2804 = vsub.s32 0, %v2803
        %v2805 = vrot.slane %v2800, %v2804
        %v2811 = vunpack.c.l.b16 %v2796
        %v2812 = vunpack.c.l.b16 %v2797
        %v2813 = vunpack.c.l.b16 %v2798
        %v2814 = vunpack.c.l.b16 %v2799
        %v2815 = vpack.c.b16 %v2812, %v2811
        %v2816 = vpack.c.b16 %v2814, %v2813
        %v2820 = vsel %vm1452, %v2795, 0
        %2822 = vmatprep.subr.bf16.mxu0 0
        %2823 = vmatpush1.bf16.msra.mxu0 %v2815
        %2824 = vmatprep.subr.bf16.mxu0 0
        %2825 = vmatpush1.bf16.msra.mxu0 %v2816
        %2826 = vmatprep.subr.bf16.mxu0 0
        %2827 = vmatpush1.bf16.msra.mxu0 0
        %2828 = vmatprep.subr.bf16.mxu0 0
        %2829 = vmatpush1.bf16.msra.mxu0 0
        %2830 = vmatprep.subr.bf16.mxu0 0
        %2831 = vmatpush1.bf16.msra.mxu0 0
        %2832 = vmatprep.subr.bf16.mxu0 0
        %2833 = vmatpush1.bf16.msra.mxu0 0
        %2834 = vmatprep.subr.bf16.mxu0 0
        %2835 = vmatpush1.bf16.msra.mxu0 0
        %2836 = vmatprep.subr.bf16.mxu0 0
        %2837 = vmatpush1.bf16.msra.mxu0 0
        %2838 = vmatprep.subr.bf16.mxu0 0
        %2839 = vmatpush1.bf16.msra.mxu0 0
        %2840 = vmatprep.subr.bf16.mxu0 0
        %2841 = vmatpush1.bf16.msra.mxu0 0
        %2842 = vmatprep.subr.bf16.mxu0 0
        %2843 = vmatpush1.bf16.msra.mxu0 0
        %2844 = vmatprep.subr.bf16.mxu0 0
        %2845 = vmatpush1.bf16.msra.mxu0 0
        %2846 = vmatprep.subr.bf16.mxu0 0
        %2847 = vmatpush1.bf16.msra.mxu0 0
        %2848 = vmatprep.subr.bf16.mxu0 0
        %2849 = vmatpush1.bf16.msra.mxu0 0
        %2850 = vmatprep.subr.bf16.mxu0 0
        %2851 = vmatpush1.bf16.msra.mxu0 0
        %2852 = vmatprep.subr.bf16.mxu0 0
        %2853 = vmatpush1.bf16.msra.mxu0 0
        %2854 = vmatprep.mubr.bf16.mxu0 0
        %2855 = vmatmul.mubr.bf16.gmra.mrb[0].mxu0 %v2820
        %v2856 = vpop.f32.mrb[0].mxu0
        %v2857 = vadd.f32 %v2805, %v2856
        %v2858 = vpop.f32.mrb[0].mxu0
        %v2859 = vpop.f32.mrb[0].mxu0
        %v2860 = vpop.f32.mrb[0].mxu0
        %2861 = vdwg.mxu0
        %v2862 = vmax.f32 %v2857, 0.0
        %v2863 = vpack.c.bf16 %v2862, %v2862
        %v2864 = vld [vmem:[%s1385] sm:$0xf]
        %v2865 = vld [vmem:[%s1385 + $0x4] sm:$0xf]
        %v2866 = vld [vmem:[%s1385 + $0x8] sm:$0xf]
        %v2867 = vld [vmem:[%s1385 + $0xc] sm:$0xf]
        %v2868 = vld [vmem:[%s1385 + $0x10] sm:$0xf]
        %v2869 = vld [vmem:[%s1385 + $0x14] sm:$0xf]
        %v2870 = vld [vmem:[%s1385 + $0x18] sm:$0xf]
        %v2871 = vld [vmem:[%s1385 + $0x1c] sm:$0xf]
        %v2872 = vld [vmem:[%s1388] sm:$0x1]
        %v2874 = vlaneseq
        %v2875 = vshrl.u32 %v2874, 7
        %v2876 = vsub.s32 0, %v2875
        %v2877 = vrot.slane %v2872, %v2876
        %v2887 = vunpack.c.l.b16 %v2864
        %v2888 = vunpack.c.l.b16 %v2865
        %v2889 = vunpack.c.l.b16 %v2866
        %v2890 = vunpack.c.l.b16 %v2867
        %v2891 = vunpack.c.l.b16 %v2868
        %v2892 = vunpack.c.l.b16 %v2869
        %v2893 = vunpack.c.l.b16 %v2870
        %v2894 = vunpack.c.l.b16 %v2871
        %v2895 = vpack.c.b16 %v2888, %v2887
        %v2896 = vpack.c.b16 %v2890, %v2889
        %v2897 = vpack.c.b16 %v2892, %v2891
        %v2898 = vpack.c.b16 %v2894, %v2893
        %vm2903 = vcmask 523264
        %v2905 = vsel %vm2903, %v2863, 0
        %2907 = vmatprep.subr.bf16.mxu0 0
        %2908 = vmatpush1.bf16.msra.mxu0 %v2895
        %2909 = vmatprep.subr.bf16.mxu0 0
        %2910 = vmatpush1.bf16.msra.mxu0 %v2896
        %2911 = vmatprep.subr.bf16.mxu0 0
        %2912 = vmatpush1.bf16.msra.mxu0 %v2897
        %2913 = vmatprep.subr.bf16.mxu0 0
        %2914 = vmatpush1.bf16.msra.mxu0 %v2898
        %2915 = vmatprep.subr.bf16.mxu0 0
        %2916 = vmatpush1.bf16.msra.mxu0 0
        %2917 = vmatprep.subr.bf16.mxu0 0
        %2918 = vmatpush1.bf16.msra.mxu0 0
        %2919 = vmatprep.subr.bf16.mxu0 0
        %2920 = vmatpush1.bf16.msra.mxu0 0
        %2921 = vmatprep.subr.bf16.mxu0 0
        %2922 = vmatpush1.bf16.msra.mxu0 0
        %2923 = vmatprep.subr.bf16.mxu0 0
        %2924 = vmatpush1.bf16.msra.mxu0 0
        %2925 = vmatprep.subr.bf16.mxu0 0
        %2926 = vmatpush1.bf16.msra.mxu0 0
        %2927 = vmatprep.subr.bf16.mxu0 0
        %2928 = vmatpush1.bf16.msra.mxu0 0
        %2929 = vmatprep.subr.bf16.mxu0 0
        %2930 = vmatpush1.bf16.msra.mxu0 0
        %2931 = vmatprep.subr.bf16.mxu0 0
        %2932 = vmatpush1.bf16.msra.mxu0 0
        %2933 = vmatprep.subr.bf16.mxu0 0
        %2934 = vmatpush1.bf16.msra.mxu0 0
        %2935 = vmatprep.subr.bf16.mxu0 0
        %2936 = vmatpush1.bf16.msra.mxu0 0
        %2937 = vmatprep.subr.bf16.mxu0 0
        %2938 = vmatpush1.bf16.msra.mxu0 0
        %2939 = vmatprep.mubr.bf16.mxu0 0
        %2940 = vmatmul.mubr.bf16.gmra.mrb[0].mxu0 %v2905
        %v2941 = vpop.f32.mrb[0].mxu0
        %v2942 = vadd.f32 %v2877, %v2941
        %v2943 = vpop.f32.mrb[0].mxu0
        %v2944 = vpop.f32.mrb[0].mxu0
        %v2945 = vpop.f32.mrb[0].mxu0
        %2946 = vdwg.mxu0
        %v2947 = vadd.f32 %v2794, %v2942
        %v2948 = vld [vmem:[%s1403] sm:$0x1]
        %v2949 = vld [vmem:[%s1406] sm:$0x1]
        %v2950 = vsel %vm1452, %v2947, 0.0
        %2951 = vadd.xlane.f32.xlu0 %v2950
        %v2952 = vpop.xlane.xlu0 %2951
        %v2953 = vmul.f32 %v2952, %v2081
        %v2954 = vsub.f32 %v2947, %v2953
        %v2955 = vmul.f32 %v2954, %v2954
        %v2956 = vsel %vm1452, %v2955, 0.0
        %2957 = vadd.xlane.f32.xlu0 %v2956
        %v2958 = vpop.xlane.xlu0 %2957
        %v2959 = vmul.f32 %v2958, %v2081
        %v2960 = vadd.f32 %v2959, 1e-05
        %v2961 = vrsqrt.pop %v2960
        %v2962 = vmul.f32 %v2954, %v2961
        %v2964 = vlaneseq
        %v2965 = vshrl.u32 %v2964, 7
        %v2966 = vsub.s32 0, %v2965
        %v2967 = vrot.slane %v2948, %v2966
        %v2969 = vmul.f32 %v2962, %v2967
        %v2971 = vlaneseq
        %v2972 = vshrl.u32 %v2971, 7
        %v2973 = vsub.s32 0, %v2972
        %v2974 = vrot.slane %v2949, %v2973
        %v2976 = vadd.f32 %v2969, %v2974
        %v2977 = vmax.f32 %v2976, 0.0
        %2978 = vst.msk [vmem:[#allocation2] sm:$0xff] %vm1452, %v2977
        %p2979 = scmp.eq.s32.totalorder %s52, 1
        // Predicated region
        $region185: #{tpu_custom_call.1} parent=123 // pred_check
          %p2980 = pneg %p2979
        $region186: #{tpu_custom_call.1} parent=123 // pred_check_branch
          %2982 = sbr.rel (%p2980) target = $region188
        $region187: #{tpu_custom_call.1} parent=123 // pred_region
          %2983 = vst.msk [vmem:[%s1360] sm:$0xff] %vm1452, %v2977
        $region188: #{tpu_custom_call.1} parent=123 // pred_fallthru
          _
        %s2984 = sand.u32 %s733, 1
        %s2985 = scalar_lea.sflag [#allocation5], %s2984
        %s2986 = sand.u32 %s733, 1
        %s2987 = smul.addr %s2986, 8
        %s2988 = scalar_lea.vmem [#allocation21], %s2987
        // Predicated region
        $region189: #{tpu_custom_call.1} parent=123 // pred_check
          %p2989 = pneg %p743
        $region190: #{tpu_custom_call.1} parent=123 // pred_check_branch
          %2991 = sbr.rel (%p2989) target = $region192
        $region191: #{tpu_custom_call.1} parent=123 // pred_region
          %s2993 = ssub.s32 128, 128
          %2994 = vsyncadd %s2985, %s2993
          %s2995 = smul.addr %s51, 128
          %s2996 = scalar_lea.hbm %s26, %s2995
          %s2998 = sshll.u32 %s2988, 4
          %s2999 = int_to_ptr.vmem [resolvable:$true] %s2998
          %3001 = dma.vmem_to_hbm [thread:$0]  %s2999, 128, %s2996, %s2985
        $region192: #{tpu_custom_call.1} parent=123 // pred_fallthru
          _
      $region124: #{tpu_custom_call.1} parent=5 // pred_fallthru
        _
      %p3002 = scmp.le.s32.totalorder 2, %s42
      // Predicated region
      $region193: #{tpu_custom_call.1} parent=5 // pred_check
        %p3003 = pneg %p3002
      $region194: #{tpu_custom_call.1} parent=5 // pred_check_branch
        %3005 = sbr.rel (%p3003) target = $region196
      $region195: #{tpu_custom_call.1} parent=5 // pred_region
        %s3006 = ssub.s32 %s42, 2
        // Predicated region
        $region197: #{tpu_custom_call.1} parent=195 // pred_check
          %p3007 = pneg %p749
        $region198: #{tpu_custom_call.1} parent=195 // pred_check_branch
          %3009 = sbr.rel (%p3007) target = $region200
        $region199: #{tpu_custom_call.1} parent=195 // pred_region
          %s3010 = sand.u32 %s734, 1
          %s3011 = scalar_lea.sflag [#allocation5], %s3010
          %s3012 = sand.u32 %s734, 1
          %s3013 = smul.addr %s3012, 8
          %s3014 = scalar_lea.vmem [#allocation21], %s3013
          %3015 = dma.done %s3011, 128
        $region200: #{tpu_custom_call.1} parent=195 // pred_fallthru
          _
      $region196: #{tpu_custom_call.1} parent=5 // pred_fallthru
        _
    $region6: #{tpu_custom_call.1} parent=1 // loop_footer
      %s46 = sadd.s32 1, %s42
    $region7: #{tpu_custom_call.1} parent=1 // loop_footer_branch
      %41 = sbr.rel target = $region3
    $region8: #{tpu_custom_call.1} parent=1 // loop_exit
      _
    %3016 = vsyncpa [#allocation4], 1
    %s3017 = scalar_lea.sflag [#allocation4], 1
    %3018 = vsyncpa %s3017, 1
    %3019 = vsyncpa [#allocation7], 1
    %s3020 = scalar_lea.sflag [#allocation7], 1
    %3021 = vsyncpa %s3020, 1
    %3022 = vsyncpa [#allocation10], 1
    %3023 = vsyncpa [#allocation5], 1
    %s3024 = scalar_lea.sflag [#allocation5], 1
    %3025 = vsyncpa %s3024, 1

</llo_original>
